<compile_context>
chip_gen: v7x
topology: tpu7x:2x2x1
jax: 0.10.0
libtpu: 0.0.40
codegen_flags: <defaults>
</compile_context>

<pallas_src>
import jax
import jax.numpy as jnp
import numpy as np
from jax import lax
from jax.experimental import pallas as pl
from jax.experimental.pallas import tpu as pltpu

K_DB = 50.0
EPS = 1e-5
_HI = lax.Precision.HIGHEST


def _sig(v):
    return 1.0 / (1.0 + jnp.exp(-v))


# --------------------------------- kernel ---------------------------------
def dbhead_kernel(p_ref, w1_ref, b1_ref, g1_ref, be1_ref,
                  w2_ref, b2_ref, g2_ref, be2_ref,
                  w3_ref, b3_ref, avg_ref, out_ref):
    """Fused both-heads DBHead forward on lane-dense (channels, N*H*W) tiles.

    p_ref   : (C*9, NHW)   im2col 3x3 patches, shared by both heads
    w1_ref  : (C2P, C*9)   conv1 weights, both heads stacked (zero-padded rows)
    w2_ref  : (R2, C2P)    convT2 block-diag weights, rows = (head, co, a, b)
    w3_ref  : (32, R2)     convT3 block-diag weights, rows = (head, e, f)
    avg_ref : (R2, R2)     constant phase-group averaging matrix for bn2 stats
    b*/g*/be* refs         per-row column vectors, broadcast over lanes
    out_ref : (3, 16, NHW) [shrink, thresh, binary] phase maps
    """
    patches = p_ref[...]

    # ---- conv1 (3x3, pad 1): one MXU matmul for both heads ----
    y1 = jnp.dot(w1_ref[...], patches, precision=_HI,
                 preferred_element_type=jnp.float32) + b1_ref[...]

    # ---- bn1: training-mode batch stats (one row per (head, channel)) ----
    mu1 = jnp.mean(y1, axis=1, keepdims=True)
    xc1 = y1 - mu1
    var1 = jnp.mean(xc1 * xc1, axis=1, keepdims=True)
    y1n = xc1 * (g1_ref[...] * lax.rsqrt(var1 + EPS)) + be1_ref[...]

    # ---- convT2 (2x2, stride 2): per-phase channel mix, one matmul ----
    q = jnp.dot(w2_ref[...], y1n, precision=_HI,
                preferred_element_type=jnp.float32) + b2_ref[...]

    # ---- bn2: stats over the full (N, 2H, 2W) map == its 4 phase rows ----
    # avg_ref replicates the per-group (4-phase) average onto every row of the
    # group, so lane means then give the correct whole-map statistics without
    # any in-kernel sublane reshuffling.
    mu2 = jnp.mean(jnp.dot(avg_ref[...], q, precision=_HI,
                           preferred_element_type=jnp.float32),
                   axis=1, keepdims=True)
    xc2 = q - mu2
    var2 = jnp.mean(jnp.dot(avg_ref[...], xc2 * xc2, precision=_HI,
                            preferred_element_type=jnp.float32),
                    axis=1, keepdims=True)
    q2 = xc2 * (g2_ref[...] * lax.rsqrt(var2 + EPS)) + be2_ref[...]

    # ---- convT3 (2x2, stride 2, out=1) + sigmoid: one matmul ----
    z = jnp.dot(w3_ref[...], q2, precision=_HI,
                preferred_element_type=jnp.float32) + b3_ref[...]
    s = _sig(z)
    shrink = s[0:16, :]
    thresh = s[16:32, :]
    out_ref[0] = shrink
    out_ref[1] = thresh
    out_ref[2] = _sig(K_DB * (shrink - thresh))   # DB step function


# ------------------------------ host wrapper -------------------------------
def _im2col(x):
    """(N, C, H, W) -> (C*9, N*H*W) 3x3 / pad-1 patch matrix (pure layout)."""
    N, C, H, W = x.shape
    xp = jnp.pad(x, ((0, 0), (0, 0), (1, 1), (1, 1)))
    cols = jnp.stack([xp[:, :, kh:kh + H, kw:kw + W]
                      for kh in range(3) for kw in range(3)], axis=2)  # (N,C,9,H,W)
    return cols.transpose(1, 2, 0, 3, 4).reshape(C * 9, N * H * W)


def _block_diag(b0, b1):
    r0, c0 = b0.shape
    r1, c1 = b1.shape
    z01 = jnp.zeros((r0, c1), b0.dtype)
    z10 = jnp.zeros((r1, c0), b1.dtype)
    return jnp.concatenate([jnp.concatenate([b0, z01], 1),
                            jnp.concatenate([z10, b1], 1)], 0)


def _round_up(v, m):
    return (v + m - 1) // m * m


def _pack_params(p_bin, p_thr, C, CM):
    """Fuse / reshape both heads' weights into MXU-friendly 2-D VMEM matrices."""
    heads = (p_bin, p_thr)
    f32 = jnp.float32
    c2 = 2 * CM                    # fused (both-heads) channel count
    c2p = _round_up(c2, 8)         # pad rows to a sublane multiple
    r2 = c2 * 4                    # convT2 rows: (head, co, phase a*2+b)

    # conv1: (CM, C, 3, 3) -> rows (head, co), cols (ci, kh, kw)
    w1 = jnp.concatenate([jnp.asarray(p['c1w'], f32).reshape(CM, C * 9)
                          for p in heads], 0)
    w1 = jnp.zeros((c2p, C * 9), f32).at[:c2].set(w1)

    def col(vecs, pad_to=None, pad_val=0.0):
        v = jnp.concatenate([jnp.asarray(v, f32).reshape(-1) for v in vecs])
        if pad_to is not None and pad_to > v.shape[0]:
            v = jnp.concatenate([v, jnp.full((pad_to - v.shape[0],), pad_val, f32)])
        return v.reshape(-1, 1)

    b1 = col([p['c1b'] for p in heads], c2p)
    g1 = col([p['bn1g'] for p in heads], c2p, 1.0)
    be1 = col([p['bn1b'] for p in heads], c2p)

    # convT2: weight (ci, co, a, b) -> per head rows (co*4 + a*2 + b), cols ci;
    # block-diagonal over heads; column dim zero-padded to c2p.
    blk2 = [jnp.asarray(p['t2w'], f32).transpose(1, 2, 3, 0).reshape(CM * 4, CM)
            for p in heads]
    w2 = jnp.zeros((r2, c2p), f32).at[:, :c2].set(_block_diag(*blk2))
    b2 = col([jnp.repeat(p['t2b'], 4) for p in heads])
    g2 = col([jnp.repeat(p['bn2g'], 4) for p in heads])
    be2 = col([jnp.repeat(p['bn2b'], 4) for p in heads])

    # convT3: weight (ci, 1, c, d) -> per head rows (2a+c)*4 + (2b+d),
    # cols ci*4 + a*2 + b (phase routing via identity factors); block-diag.
    eye2 = jnp.eye(2, dtype=f32)
    blk3 = [jnp.einsum('icd,aA,bB->acbdiAB', jnp.asarray(p['t3w'], f32)[:, 0],
                       eye2, eye2).reshape(16, CM * 4) for p in heads]
    w3 = _block_diag(*blk3)
    b3 = col([jnp.repeat(p['t3b'], 16) for p in heads])

    # bn2 phase-group averaging matrix (constant): averages the 4 phase rows
    # belonging to each (head, channel) group, replicated back onto every row.
    avg = jnp.kron(jnp.eye(c2, dtype=f32), jnp.full((4, 4), 0.25, f32))

    return (w1, b1, g1, be1, w2, b2, g2, be2, w3, b3, avg)


def dbhead_forward(x, params_bin, params_thr):
    """x: (N, C, H, W) float32 NCHW. Returns {'maps': (N, 3, 4H, 4W)} (training fwd)."""
    N, C, H, W = x.shape
    CM = C // 4
    NHW = N * H * W
    patches = _im2col(x.astype(jnp.float32))           # (C*9, N*H*W)
    args = _pack_params(params_bin, params_thr, C, CM)

    # TODO(synk): for production shapes (C=256, large H*W) add a spatial grid
    # (parallel over N / H-tiles with a 1-row halo) plus a cross-tile / two-pass
    # BN reduction so tiles fit v7x's 64 MiB VMEM and both TensorCores are used.
    vmem = pl.BlockSpec(memory_space=pltpu.MemorySpace.VMEM)
    sub = pl.pallas_call(
        dbhead_kernel,
        out_shape=jax.ShapeDtypeStruct((3, 16, NHW), jnp.float32),
        in_specs=[vmem] * (1 + len(args)),
        out_specs=vmem,
    )(patches, *args)

    # Phase interleave back to NCHW: out[n, c, 4i+e, 4j+f] = sub[c, e*4+f, n*HW+i*W+j]
    sub = sub.reshape(3, 4, 4, N, H, W)                 # (c, e, f, n, i, j)
    y = sub.transpose(3, 0, 4, 1, 5, 2).reshape(N, 3, 4 * H, 4 * W)
    return {'maps': y}


# ----------------------- pure-JAX reference (verification) -----------------------
def _bn_train_ref(x, g, b):
    mu = x.mean(axis=(0, 2, 3), keepdims=True)
    var = ((x - mu) ** 2).mean(axis=(0, 2, 3), keepdims=True)
    return (x - mu) / jnp.sqrt(var + EPS) * g[None, :, None, None] + b[None, :, None, None]


def _convT_2x2_s2_ref(x, w, b):
    n, cin, h, ww = x.shape
    cout = w.shape[1]
    out = jnp.zeros((n, cout, 2 * h, 2 * ww), x.dtype)
    for a in range(2):
        for d in range(2):
            contrib = jnp.einsum('nchw,co->nohw', x, w[:, :, a, d],
                                 precision=lax.Precision.HIGHEST)
            out = out.at[:, :, a::2, d::2].add(contrib)
    return out + b[None, :, None, None]


def _ref_head(x, p):
    y = lax.conv_general_dilated(x, p['c1w'], (1, 1), ((1, 1), (1, 1)),
                                 dimension_numbers=('NCHW', 'OIHW', 'NCHW'),
                                 precision=lax.Precision.HIGHEST)
    y = y + p['c1b'][None, :, None, None]
    y = _bn_train_ref(y, p['bn1g'], p['bn1b'])
    y = _convT_2x2_s2_ref(y, p['t2w'], p['t2b'])
    y = _bn_train_ref(y, p['bn2g'], p['bn2b'])
    y = _convT_2x2_s2_ref(y, p['t3w'], p['t3b'])
    return _sig(y)


def dbhead_reference(x, p0, p1):
    shrink = _ref_head(x, p0)
    thresh = _ref_head(x, p1)
    binary = _sig(K_DB * (shrink - thresh))
    return jnp.concatenate([shrink, thresh, binary], axis=1)


if __name__ == "__main__":
    N, C, H, W = 2, 8, 16, 16     # in_channels=8 -> mid channels CM=2
    CM = C // 4
    key = jax.random.PRNGKey(0)
    kx, k0, k1 = jax.random.split(key, 3)
    x = jax.random.normal(kx, (N, C, H, W), jnp.float32)

    def init_head(k):
        ks = jax.random.split(k, 10)
        return dict(
            c1w=0.2 * jax.random.normal(ks[0], (CM, C, 3, 3), jnp.float32),
            c1b=0.1 * jax.random.normal(ks[1], (CM,), jnp.float32),
            bn1g=1.0 + 0.1 * jax.random.normal(ks[2], (CM,), jnp.float32),
            bn1b=0.1 * jax.random.normal(ks[3], (CM,), jnp.float32),
            t2w=0.3 * jax.random.normal(ks[4], (CM, CM, 2, 2), jnp.float32),
            t2b=0.1 * jax.random.normal(ks[5], (CM,), jnp.float32),
            bn2g=1.0 + 0.1 * jax.random.normal(ks[6], (CM,), jnp.float32),
            bn2b=0.1 * jax.random.normal(ks[7], (CM,), jnp.float32),
            t3w=0.3 * jax.random.normal(ks[8], (CM, 1, 2, 2), jnp.float32),
            t3b=0.1 * jax.random.normal(ks[9], (1,), jnp.float32),
        )

    p_bin = init_head(k0)   # 'binarize' head params
    p_thr = init_head(k1)   # 'thresh' head params

    out = dbhead_forward(x, p_bin, p_thr)['maps']
    out = jax.block_until_ready(out)
    assert out.shape == (N, 3, 4 * H, 4 * W), out.shape

    ref = jax.block_until_ready(dbhead_reference(x, p_bin, p_thr))
    np.testing.assert_allclose(np.asarray(out), np.asarray(ref),
                               atol=5e-4, rtol=5e-4)
    print("KERNEL_OK")
</pallas_src>

<mosaic_0001>
module attributes {stable_mosaic.version = 11 : i64} {
  func.func @dbhead_kernel(%arg0: memref<72x512xf32, #tpu.memory_space<vmem>>, %arg1: memref<8x72xf32, #tpu.memory_space<vmem>>, %arg2: memref<8x1xf32, #tpu.memory_space<vmem>>, %arg3: memref<8x1xf32, #tpu.memory_space<vmem>>, %arg4: memref<8x1xf32, #tpu.memory_space<vmem>>, %arg5: memref<16x8xf32, #tpu.memory_space<vmem>>, %arg6: memref<16x1xf32, #tpu.memory_space<vmem>>, %arg7: memref<16x1xf32, #tpu.memory_space<vmem>>, %arg8: memref<16x1xf32, #tpu.memory_space<vmem>>, %arg9: memref<32x16xf32, #tpu.memory_space<vmem>>, %arg10: memref<32x1xf32, #tpu.memory_space<vmem>>, %arg11: memref<16x16xf32, #tpu.memory_space<vmem>>, %arg12: memref<3x16x512xf32, #tpu.memory_space<vmem>>) attributes {dimension_semantics = [], scalar_prefetch = 0 : i64, scratch_operands = 0 : i64, tpu.core_type = #tpu.core_type<tc>} {
    %c0 = arith.constant 0 : index
    %c0_0 = arith.constant 0 : index
    %0 = vector.load %arg0[%c0, %c0_0] : memref<72x512xf32, #tpu.memory_space<vmem>>, vector<72x512xf32>
    %c0_1 = arith.constant 0 : index
    %c0_2 = arith.constant 0 : index
    %1 = vector.load %arg1[%c0_1, %c0_2] : memref<8x72xf32, #tpu.memory_space<vmem>>, vector<8x72xf32>
    %cst = arith.constant dense<0.000000e+00> : vector<8x512xf32>
    %2 = tpu.matmul %1, %0, %cst {dimension_numbers = #tpu.dot_dimension_numbers<[1], [0], [0], [1], [0, 0, 1, 1], [], []>, precision = #tpu.contract_precision<fp32>} : vector<8x72xf32>, vector<72x512xf32>, vector<8x512xf32> -> vector<8x512xf32>
    %c0_3 = arith.constant 0 : index
    %c0_4 = arith.constant 0 : index
    %3 = vector.load %arg2[%c0_3, %c0_4] : memref<8x1xf32, #tpu.memory_space<vmem>>, vector<8x1xf32>
    %4 = vector.broadcast %3 : vector<8x1xf32> to vector<8x512xf32>
    %5 = arith.addf %2, %4 : vector<8x512xf32>
    %cst_5 = arith.constant dense<0.000000e+00> : vector<8xf32>
    %6 = vector.multi_reduction <add>, %5, %cst_5 [1] : vector<8x512xf32> to vector<8xf32>
    %7 = vector.shape_cast %6 : vector<8xf32> to vector<8x1xf32>
    %cst_6 = arith.constant 5.120000e+02 : f32
    %8 = vector.broadcast %cst_6 : f32 to vector<8x1xf32>
    %9 = arith.divf %7, %8 : vector<8x1xf32>
    %10 = vector.broadcast %9 : vector<8x1xf32> to vector<8x512xf32>
    %11 = arith.subf %5, %10 : vector<8x512xf32>
    %12 = arith.mulf %11, %11 : vector<8x512xf32>
    %cst_7 = arith.constant dense<0.000000e+00> : vector<8xf32>
    %13 = vector.multi_reduction <add>, %12, %cst_7 [1] : vector<8x512xf32> to vector<8xf32>
    %14 = vector.shape_cast %13 : vector<8xf32> to vector<8x1xf32>
    %cst_8 = arith.constant 5.120000e+02 : f32
    %15 = vector.broadcast %cst_8 : f32 to vector<8x1xf32>
    %16 = arith.divf %14, %15 : vector<8x1xf32>
    %c0_9 = arith.constant 0 : index
    %c0_10 = arith.constant 0 : index
    %17 = vector.load %arg3[%c0_9, %c0_10] : memref<8x1xf32, #tpu.memory_space<vmem>>, vector<8x1xf32>
    %cst_11 = arith.constant 9.99999974E-6 : f32
    %18 = vector.broadcast %cst_11 : f32 to vector<8x1xf32>
    %19 = arith.addf %16, %18 : vector<8x1xf32>
    %20 = math.rsqrt %19 : vector<8x1xf32>
    %21 = arith.mulf %17, %20 : vector<8x1xf32>
    %22 = vector.broadcast %21 : vector<8x1xf32> to vector<8x512xf32>
    %23 = arith.mulf %11, %22 : vector<8x512xf32>
    %c0_12 = arith.constant 0 : index
    %c0_13 = arith.constant 0 : index
    %24 = vector.load %arg4[%c0_12, %c0_13] : memref<8x1xf32, #tpu.memory_space<vmem>>, vector<8x1xf32>
    %25 = vector.broadcast %24 : vector<8x1xf32> to vector<8x512xf32>
    %26 = arith.addf %23, %25 : vector<8x512xf32>
    %c0_14 = arith.constant 0 : index
    %c0_15 = arith.constant 0 : index
    %27 = vector.load %arg5[%c0_14, %c0_15] : memref<16x8xf32, #tpu.memory_space<vmem>>, vector<16x8xf32>
    %cst_16 = arith.constant dense<0.000000e+00> : vector<16x512xf32>
    %28 = tpu.matmul %27, %26, %cst_16 {dimension_numbers = #tpu.dot_dimension_numbers<[1], [0], [0], [1], [0, 0, 1, 1], [], []>, precision = #tpu.contract_precision<fp32>} : vector<16x8xf32>, vector<8x512xf32>, vector<16x512xf32> -> vector<16x512xf32>
    %c0_17 = arith.constant 0 : index
    %c0_18 = arith.constant 0 : index
    %29 = vector.load %arg6[%c0_17, %c0_18] : memref<16x1xf32, #tpu.memory_space<vmem>>, vector<16x1xf32>
    %30 = vector.broadcast %29 : vector<16x1xf32> to vector<16x512xf32>
    %31 = arith.addf %28, %30 : vector<16x512xf32>
    %c0_19 = arith.constant 0 : index
    %c0_20 = arith.constant 0 : index
    %32 = vector.load %arg11[%c0_19, %c0_20] : memref<16x16xf32, #tpu.memory_space<vmem>>, vector<16x16xf32>
    %cst_21 = arith.constant dense<0.000000e+00> : vector<16x512xf32>
    %33 = tpu.matmul %32, %31, %cst_21 {dimension_numbers = #tpu.dot_dimension_numbers<[1], [0], [0], [1], [0, 0, 1, 1], [], []>, precision = #tpu.contract_precision<fp32>} : vector<16x16xf32>, vector<16x512xf32>, vector<16x512xf32> -> vector<16x512xf32>
    %cst_22 = arith.constant dense<0.000000e+00> : vector<16xf32>
    %34 = vector.multi_reduction <add>, %33, %cst_22 [1] : vector<16x512xf32> to vector<16xf32>
    %35 = vector.shape_cast %34 : vector<16xf32> to vector<16x1xf32>
    %cst_23 = arith.constant 5.120000e+02 : f32
    %36 = vector.broadcast %cst_23 : f32 to vector<16x1xf32>
    %37 = arith.divf %35, %36 : vector<16x1xf32>
    %38 = vector.broadcast %37 : vector<16x1xf32> to vector<16x512xf32>
    %39 = arith.subf %31, %38 : vector<16x512xf32>
    %c0_24 = arith.constant 0 : index
    %c0_25 = arith.constant 0 : index
    %40 = vector.load %arg11[%c0_24, %c0_25] : memref<16x16xf32, #tpu.memory_space<vmem>>, vector<16x16xf32>
    %41 = arith.mulf %39, %39 : vector<16x512xf32>
    %cst_26 = arith.constant dense<0.000000e+00> : vector<16x512xf32>
    %42 = tpu.matmul %40, %41, %cst_26 {dimension_numbers = #tpu.dot_dimension_numbers<[1], [0], [0], [1], [0, 0, 1, 1], [], []>, precision = #tpu.contract_precision<fp32>} : vector<16x16xf32>, vector<16x512xf32>, vector<16x512xf32> -> vector<16x512xf32>
    %cst_27 = arith.constant dense<0.000000e+00> : vector<16xf32>
    %43 = vector.multi_reduction <add>, %42, %cst_27 [1] : vector<16x512xf32> to vector<16xf32>
    %44 = vector.shape_cast %43 : vector<16xf32> to vector<16x1xf32>
    %cst_28 = arith.constant 5.120000e+02 : f32
    %45 = vector.broadcast %cst_28 : f32 to vector<16x1xf32>
    %46 = arith.divf %44, %45 : vector<16x1xf32>
    %c0_29 = arith.constant 0 : index
    %c0_30 = arith.constant 0 : index
    %47 = vector.load %arg7[%c0_29, %c0_30] : memref<16x1xf32, #tpu.memory_space<vmem>>, vector<16x1xf32>
    %cst_31 = arith.constant 9.99999974E-6 : f32
    %48 = vector.broadcast %cst_31 : f32 to vector<16x1xf32>
    %49 = arith.addf %46, %48 : vector<16x1xf32>
    %50 = math.rsqrt %49 : vector<16x1xf32>
    %51 = arith.mulf %47, %50 : vector<16x1xf32>
    %52 = vector.broadcast %51 : vector<16x1xf32> to vector<16x512xf32>
    %53 = arith.mulf %39, %52 : vector<16x512xf32>
    %c0_32 = arith.constant 0 : index
    %c0_33 = arith.constant 0 : index
    %54 = vector.load %arg8[%c0_32, %c0_33] : memref<16x1xf32, #tpu.memory_space<vmem>>, vector<16x1xf32>
    %55 = vector.broadcast %54 : vector<16x1xf32> to vector<16x512xf32>
    %56 = arith.addf %53, %55 : vector<16x512xf32>
    %c0_34 = arith.constant 0 : index
    %c0_35 = arith.constant 0 : index
    %57 = vector.load %arg9[%c0_34, %c0_35] : memref<32x16xf32, #tpu.memory_space<vmem>>, vector<32x16xf32>
    %cst_36 = arith.constant dense<0.000000e+00> : vector<32x512xf32>
    %58 = tpu.matmul %57, %56, %cst_36 {dimension_numbers = #tpu.dot_dimension_numbers<[1], [0], [0], [1], [0, 0, 1, 1], [], []>, precision = #tpu.contract_precision<fp32>} : vector<32x16xf32>, vector<16x512xf32>, vector<32x512xf32> -> vector<32x512xf32>
    %c0_37 = arith.constant 0 : index
    %c0_38 = arith.constant 0 : index
    %59 = vector.load %arg10[%c0_37, %c0_38] : memref<32x1xf32, #tpu.memory_space<vmem>>, vector<32x1xf32>
    %60 = vector.broadcast %59 : vector<32x1xf32> to vector<32x512xf32>
    %61 = arith.addf %58, %60 : vector<32x512xf32>
    %cst_39 = arith.constant 0.000000e+00 : f32
    %62 = vector.broadcast %cst_39 : f32 to vector<32x512xf32>
    %63 = arith.subf %62, %61 : vector<32x512xf32>
    %64 = math.exp %63 : vector<32x512xf32>
    %cst_40 = arith.constant 1.000000e+00 : f32
    %65 = vector.broadcast %cst_40 : f32 to vector<32x512xf32>
    %66 = arith.addf %65, %64 : vector<32x512xf32>
    %cst_41 = arith.constant 1.000000e+00 : f32
    %67 = vector.broadcast %cst_41 : f32 to vector<32x512xf32>
    %68 = arith.divf %67, %66 : vector<32x512xf32>
    %69 = vector.extract_strided_slice %68 {offsets = [0, 0], sizes = [16, 512], strides = [1, 1]} : vector<32x512xf32> to vector<16x512xf32>
    %70 = vector.extract_strided_slice %68 {offsets = [16, 0], sizes = [16, 512], strides = [1, 1]} : vector<32x512xf32> to vector<16x512xf32>
    %c0_42 = arith.constant 0 : index
    %c0_43 = arith.constant 0 : index
    %c0_44 = arith.constant 0 : index
    %71 = vector.load %arg12[%c0_42, %c0_43, %c0_44] : memref<3x16x512xf32, #tpu.memory_space<vmem>>, vector<1x16x512xf32>
    %72 = vector.shape_cast %71 : vector<1x16x512xf32> to vector<16x512xf32>
    %73 = vector.shape_cast %69 : vector<16x512xf32> to vector<1x16x512xf32>
    tpu.vector_store %arg12[%c0_42, %c0_43, %c0_44], %73 {strides = array<i32>} : memref<3x16x512xf32, #tpu.memory_space<vmem>>, vector<1x16x512xf32>,
    %c1 = arith.constant 1 : index
    %c0_45 = arith.constant 0 : index
    %c0_46 = arith.constant 0 : index
    %74 = vector.load %arg12[%c1, %c0_45, %c0_46] : memref<3x16x512xf32, #tpu.memory_space<vmem>>, vector<1x16x512xf32>
    %75 = vector.shape_cast %74 : vector<1x16x512xf32> to vector<16x512xf32>
    %76 = vector.shape_cast %70 : vector<16x512xf32> to vector<1x16x512xf32>
    tpu.vector_store %arg12[%c1, %c0_45, %c0_46], %76 {strides = array<i32>} : memref<3x16x512xf32, #tpu.memory_space<vmem>>, vector<1x16x512xf32>,
    %77 = arith.subf %69, %70 : vector<16x512xf32>
    %cst_47 = arith.constant 5.000000e+01 : f32
    %78 = vector.broadcast %cst_47 : f32 to vector<16x512xf32>
    %79 = arith.mulf %78, %77 : vector<16x512xf32>
    %cst_48 = arith.constant 0.000000e+00 : f32
    %80 = vector.broadcast %cst_48 : f32 to vector<16x512xf32>
    %81 = arith.subf %80, %79 : vector<16x512xf32>
    %82 = math.exp %81 : vector<16x512xf32>
    %cst_49 = arith.constant 1.000000e+00 : f32
    %83 = vector.broadcast %cst_49 : f32 to vector<16x512xf32>
    %84 = arith.addf %83, %82 : vector<16x512xf32>
    %cst_50 = arith.constant 1.000000e+00 : f32
    %85 = vector.broadcast %cst_50 : f32 to vector<16x512xf32>
    %86 = arith.divf %85, %84 : vector<16x512xf32>
    %c2 = arith.constant 2 : index
    %c0_51 = arith.constant 0 : index
    %c0_52 = arith.constant 0 : index
    %87 = vector.load %arg12[%c2, %c0_51, %c0_52] : memref<3x16x512xf32, #tpu.memory_space<vmem>>, vector<1x16x512xf32>
    %88 = vector.shape_cast %87 : vector<1x16x512xf32> to vector<16x512xf32>
    %89 = vector.shape_cast %86 : vector<16x512xf32> to vector<1x16x512xf32>
    tpu.vector_store %arg12[%c2, %c0_51, %c0_52], %89 {strides = array<i32>} : memref<3x16x512xf32, #tpu.memory_space<vmem>>, vector<1x16x512xf32>,
    return
  }
}

</mosaic_0001>

<llo_original>
// kernel: tpu_custom_call.1
$region0: #{tpu_custom_call.1}
  #allocation0 [shape = 'u32[]', space=smem, size = 0x4, offset = 0x4, fixed_abs, tag = 'smem constant byte address 0x4 - core index']
  #allocation1 [shape = 'u32[144,128]{1,0:T(1,128)}', space=vmem, size = 0x12000, scoped, tag = 'internal scratch']
  %s0 = inlined_call_operand.hbm [shape: f32[72,512], index: 0, kind: input, shape index: {}]
  %s1 = inlined_call_operand.vmem [shape: f32[8,72], index: 1, kind: input, shape index: {}]
  %s2 = inlined_call_operand.vmem [shape: f32[8,1], index: 2, kind: input, shape index: {}]
  %s3 = inlined_call_operand.vmem [shape: f32[8,1], index: 3, kind: input, shape index: {}]
  %s4 = inlined_call_operand.vmem [shape: f32[8,1], index: 4, kind: input, shape index: {}]
  %s5 = inlined_call_operand.vmem [shape: f32[16,8], index: 5, kind: input, shape index: {}]
  %s6 = inlined_call_operand.vmem [shape: f32[16,1], index: 6, kind: input, shape index: {}]
  %s7 = inlined_call_operand.vmem [shape: f32[16,1], index: 7, kind: input, shape index: {}]
  %s8 = inlined_call_operand.vmem [shape: f32[16,1], index: 8, kind: input, shape index: {}]
  %s9 = inlined_call_operand.vmem [shape: f32[32,16], index: 9, kind: input, shape index: {}]
  %s10 = inlined_call_operand.vmem [shape: f32[32,1], index: 10, kind: input, shape index: {}]
  %s11 = inlined_call_operand.vmem [shape: f32[16,16], index: 11, kind: input, shape index: {}]
  %s12 = inlined_call_operand.hbm [shape: f32[3,16,512], index: 12, kind: output, shape index: {}]
  %s13 = sld [smem:[#allocation0]]
  $region62: #{tpu_custom_call.1} parent=0
    _
  %s15 = ssub.s32 1, %s13
  %s16 = scalar_select 0, %s15, %s13
  $region1: #{tpu_custom_call.1} parent=0
    #allocation2 [shape = 'u8[147456]{0}', space=vmem, size = 0x24000, scoped, tag = 'input window, operand 0, single buffered']
    #allocation3 [shape = 's32[1]{0}', space=sflag, size = 0x4, scoped, tag = 'scoped memory for tpu_custom_call.1']
    #allocation4 [shape = 's32[1]{0}', space=sflag, size = 0x4, scoped, tag = 'scoped memory for tpu_custom_call.1']
    #allocation5 [shape = 'u8[98304]{0}', space=vmem, size = 0x18000, scoped, tag = 'output window, operand 0, single buffered']
    %17 = vsyncpa [#allocation3], 0
    %18 = vsyncpa [#allocation4], 0
    // Predicated region
    $region2: #{tpu_custom_call.1} parent=1 // pred_check
      _
    $region3: #{tpu_custom_call.1} parent=1 // pred_check_branch
      %20 = sbr.rel (0) target = $region5
    $region4: #{tpu_custom_call.1} parent=1 // pred_region
      %s22 = ssub.s32 4608, 4608
      %23 = vsyncadd [#allocation3], %s22
      %s24 = sshll.u32 [#allocation2], 4
      %s25 = int_to_ptr.vmem [resolvable:$true] %s24
      %30 = dma.hbm_to_vmem [thread:$0]  %s0, 4608, %s25, [#allocation3], 512, 512, 32
    $region5: #{tpu_custom_call.1} parent=1 // pred_fallthru
      _
    // Predicated region
    $region6: #{tpu_custom_call.1} parent=1 // pred_check
      _
    $region7: #{tpu_custom_call.1} parent=1 // pred_check_branch
      %32 = sbr.rel (0) target = $region9
    $region8: #{tpu_custom_call.1} parent=1 // pred_region
      _
    $region9: #{tpu_custom_call.1} parent=1 // pred_fallthru
      _
    // Predicated region
    $region10: #{tpu_custom_call.1} parent=1 // pred_check
      _
    $region11: #{tpu_custom_call.1} parent=1 // pred_check_branch
      %34 = sbr.rel (0) target = $region13
    $region12: #{tpu_custom_call.1} parent=1 // pred_region
      _
    $region13: #{tpu_custom_call.1} parent=1 // pred_fallthru
      _
    // Predicated region
    $region14: #{tpu_custom_call.1} parent=1 // pred_check
      _
    $region15: #{tpu_custom_call.1} parent=1 // pred_check_branch
      %36 = sbr.rel (0) target = $region17
    $region16: #{tpu_custom_call.1} parent=1 // pred_region
      _
    $region17: #{tpu_custom_call.1} parent=1 // pred_fallthru
      _
    // Predicated region
    $region18: #{tpu_custom_call.1} parent=1 // pred_check
      _
    $region19: #{tpu_custom_call.1} parent=1 // pred_check_branch
      %38 = sbr.rel (0) target = $region21
    $region20: #{tpu_custom_call.1} parent=1 // pred_region
      _
    $region21: #{tpu_custom_call.1} parent=1 // pred_fallthru
      _
    // Predicated region
    $region22: #{tpu_custom_call.1} parent=1 // pred_check
      _
    $region23: #{tpu_custom_call.1} parent=1 // pred_check_branch
      %40 = sbr.rel (0) target = $region25
    $region24: #{tpu_custom_call.1} parent=1 // pred_region
      _
    $region25: #{tpu_custom_call.1} parent=1 // pred_fallthru
      _
    // Predicated region
    $region26: #{tpu_custom_call.1} parent=1 // pred_check
      _
    $region27: #{tpu_custom_call.1} parent=1 // pred_check_branch
      %42 = sbr.rel (0) target = $region29
    $region28: #{tpu_custom_call.1} parent=1 // pred_region
      _
    $region29: #{tpu_custom_call.1} parent=1 // pred_fallthru
      _
    // Predicated region
    $region30: #{tpu_custom_call.1} parent=1 // pred_check
      _
    $region31: #{tpu_custom_call.1} parent=1 // pred_check_branch
      %44 = sbr.rel (0) target = $region33
    $region32: #{tpu_custom_call.1} parent=1 // pred_region
      _
    $region33: #{tpu_custom_call.1} parent=1 // pred_fallthru
      _
    // Predicated region
    $region34: #{tpu_custom_call.1} parent=1 // pred_check
      _
    $region35: #{tpu_custom_call.1} parent=1 // pred_check_branch
      %46 = sbr.rel (0) target = $region37
    $region36: #{tpu_custom_call.1} parent=1 // pred_region
      _
    $region37: #{tpu_custom_call.1} parent=1 // pred_fallthru
      _
    // Predicated region
    $region38: #{tpu_custom_call.1} parent=1 // pred_check
      _
    $region39: #{tpu_custom_call.1} parent=1 // pred_check_branch
      %48 = sbr.rel (0) target = $region41
    $region40: #{tpu_custom_call.1} parent=1 // pred_region
      _
    $region41: #{tpu_custom_call.1} parent=1 // pred_fallthru
      _
    // Predicated region
    $region42: #{tpu_custom_call.1} parent=1 // pred_check
      _
    $region43: #{tpu_custom_call.1} parent=1 // pred_check_branch
      %50 = sbr.rel (0) target = $region45
    $region44: #{tpu_custom_call.1} parent=1 // pred_region
      _
    $region45: #{tpu_custom_call.1} parent=1 // pred_fallthru
      _
    // Predicated region
    $region46: #{tpu_custom_call.1} parent=1 // pred_check
      _
    $region47: #{tpu_custom_call.1} parent=1 // pred_check_branch
      %52 = sbr.rel (0) target = $region49
    $region48: #{tpu_custom_call.1} parent=1 // pred_region
      _
    $region49: #{tpu_custom_call.1} parent=1 // pred_fallthru
      _
    // Predicated region
    $region50: #{tpu_custom_call.1} parent=1 // pred_check
      _
    $region51: #{tpu_custom_call.1} parent=1 // pred_check_branch
      %54 = sbr.rel (0) target = $region53
    $region52: #{tpu_custom_call.1} parent=1 // pred_region
      %55 = dma.done [#allocation3], 4608
    $region53: #{tpu_custom_call.1} parent=1 // pred_fallthru
      _
    %v56 = vld [vmem:[#allocation2] sm:$0xff]
    %v57 = vld [vmem:[#allocation2 + $0x8] sm:$0xff]
    %v58 = vld [vmem:[#allocation2 + $0x10] sm:$0xff]
    %v59 = vld [vmem:[#allocation2 + $0x18] sm:$0xff]
    %v60 = vld [vmem:[#allocation2 + $0x20] sm:$0xff]
    %v61 = vld [vmem:[#allocation2 + $0x28] sm:$0xff]
    %v62 = vld [vmem:[#allocation2 + $0x30] sm:$0xff]
    %v63 = vld [vmem:[#allocation2 + $0x38] sm:$0xff]
    %v64 = vld [vmem:[#allocation2 + $0x40] sm:$0xff]
    %v65 = vld [vmem:[#allocation2 + $0x48] sm:$0xff]
    %v66 = vld [vmem:[#allocation2 + $0x50] sm:$0xff]
    %v67 = vld [vmem:[#allocation2 + $0x58] sm:$0xff]
    %v68 = vld [vmem:[#allocation2 + $0x60] sm:$0xff]
    %v69 = vld [vmem:[#allocation2 + $0x68] sm:$0xff]
    %v70 = vld [vmem:[#allocation2 + $0x70] sm:$0xff]
    %v71 = vld [vmem:[#allocation2 + $0x78] sm:$0xff]
    %v72 = vld [vmem:[#allocation2 + $0x80] sm:$0xff]
    %v73 = vld [vmem:[#allocation2 + $0x88] sm:$0xff]
    %v74 = vld [vmem:[#allocation2 + $0x90] sm:$0xff]
    %v75 = vld [vmem:[#allocation2 + $0x98] sm:$0xff]
    %v76 = vld [vmem:[#allocation2 + $0xa0] sm:$0xff]
    %v77 = vld [vmem:[#allocation2 + $0xa8] sm:$0xff]
    %v78 = vld [vmem:[#allocation2 + $0xb0] sm:$0xff]
    %v79 = vld [vmem:[#allocation2 + $0xb8] sm:$0xff]
    %v80 = vld [vmem:[#allocation2 + $0xc0] sm:$0xff]
    %v81 = vld [vmem:[#allocation2 + $0xc8] sm:$0xff]
    %v82 = vld [vmem:[#allocation2 + $0xd0] sm:$0xff]
    %v83 = vld [vmem:[#allocation2 + $0xd8] sm:$0xff]
    %v84 = vld [vmem:[#allocation2 + $0xe0] sm:$0xff]
    %v85 = vld [vmem:[#allocation2 + $0xe8] sm:$0xff]
    %v86 = vld [vmem:[#allocation2 + $0xf0] sm:$0xff]
    %v87 = vld [vmem:[#allocation2 + $0xf8] sm:$0xff]
    %v88 = vld [vmem:[#allocation2 + $0x100] sm:$0xff]
    %v89 = vld [vmem:[#allocation2 + $0x108] sm:$0xff]
    %v90 = vld [vmem:[#allocation2 + $0x110] sm:$0xff]
    %v91 = vld [vmem:[#allocation2 + $0x118] sm:$0xff]
    %v92 = vld [vmem:[%s1] sm:$0xff]
    %v93 = vld [vmem:[%s2] sm:$0xff]
    %95 = vset.pattern.permute.xlu0 0
    %96 = vperm.xlu0 %95, %v93
    %v97 = vpop.permute.xlu0 %96
    %vm99 = vcmask 588800
    %v101 = vsel %vm99, %v92, 0
    %v103 = vand.u32 %v57, 4294901760
    %104 = vmatprep.subr.mxu0 %v103
    %v105 = vand.u32 %v56, 4294901760
    %106 = vmatpush1.msra.mxu0 %v105
    %v107 = vand.u32 %v61, 4294901760
    %108 = vmatprep.subr.mxu0 %v107
    %v109 = vand.u32 %v60, 4294901760
    %110 = vmatpush1.msra.mxu0 %v109
    %v111 = vand.u32 %v65, 4294901760
    %112 = vmatprep.subr.mxu0 %v111
    %v113 = vand.u32 %v64, 4294901760
    %114 = vmatpush1.msra.mxu0 %v113
    %v115 = vand.u32 %v69, 4294901760
    %116 = vmatprep.subr.mxu0 %v115
    %v117 = vand.u32 %v68, 4294901760
    %118 = vmatpush1.msra.mxu0 %v117
    %v119 = vand.u32 %v73, 4294901760
    %120 = vmatprep.subr.mxu0 %v119
    %v121 = vand.u32 %v72, 4294901760
    %122 = vmatpush1.msra.mxu0 %v121
    %v123 = vand.u32 %v77, 4294901760
    %124 = vmatprep.subr.mxu0 %v123
    %v125 = vand.u32 %v76, 4294901760
    %126 = vmatpush1.msra.mxu0 %v125
    %v127 = vand.u32 %v81, 4294901760
    %128 = vmatprep.subr.mxu0 %v127
    %v129 = vand.u32 %v80, 4294901760
    %130 = vmatpush1.msra.mxu0 %v129
    %v131 = vand.u32 %v85, 4294901760
    %132 = vmatprep.subr.mxu0 %v131
    %v133 = vand.u32 %v84, 4294901760
    %134 = vmatpush1.msra.mxu0 %v133
    %v135 = vand.u32 %v89, 4294901760
    %136 = vmatprep.subr.mxu0 %v135
    %v137 = vand.u32 %v88, 4294901760
    %138 = vmatpush1.msra.mxu0 %v137
    %139 = vmatprep.subr.mxu0 0.0
    %140 = vmatpush1.msra.mxu0 0.0
    %141 = vmatprep.subr.mxu0 0.0
    %142 = vmatpush1.msra.mxu0 0.0
    %143 = vmatprep.subr.mxu0 0.0
    %144 = vmatpush1.msra.mxu0 0.0
    %145 = vmatprep.subr.mxu0 0.0
    %146 = vmatpush1.msra.mxu0 0.0
    %147 = vmatprep.subr.mxu0 0.0
    %148 = vmatpush1.msra.mxu0 0.0
    %149 = vmatprep.subr.mxu0 0.0
    %150 = vmatpush1.msra.mxu0 0.0
    %151 = vmatprep.subr.mxu0 0.0
    %152 = vmatpush1.msra.mxu0 0.0
    %153 = vmatprep.subr.mxu0 0.0
    %154 = vmatpush1.msra.mxu0 0.0
    %155 = vmatprep.subr.mxu0 0.0
    %156 = vmatpush1.msra.mxu0 0.0
    %157 = vmatprep.subr.mxu0 0.0
    %158 = vmatpush1.msra.mxu0 0.0
    %159 = vmatprep.subr.mxu0 0.0
    %160 = vmatpush1.msra.mxu0 0.0
    %161 = vmatprep.subr.mxu0 0.0
    %162 = vmatpush1.msra.mxu0 0.0
    %163 = vmatprep.subr.mxu0 0.0
    %164 = vmatpush1.msra.mxu0 0.0
    %165 = vmatprep.subr.mxu0 0.0
    %166 = vmatpush1.msra.mxu0 0.0
    %167 = vmatprep.subr.mxu0 0.0
    %168 = vmatpush1.msra.mxu0 0.0
    %169 = vmatprep.subr.mxu0 0.0
    %170 = vmatpush1.msra.mxu0 0.0
    %171 = vmatprep.subr.mxu0 0.0
    %172 = vmatpush1.msra.mxu0 0.0
    %173 = vmatprep.subr.mxu0 0.0
    %174 = vmatpush1.msra.mxu0 0.0
    %175 = vmatprep.subr.mxu0 0.0
    %176 = vmatpush1.msra.mxu0 0.0
    %177 = vmatprep.subr.mxu0 0.0
    %178 = vmatpush1.msra.mxu0 0.0
    %179 = vmatprep.subr.mxu0 0.0
    %180 = vmatpush1.msra.mxu0 0.0
    %181 = vmatprep.subr.mxu0 0.0
    %182 = vmatpush1.msra.mxu0 0.0
    %183 = vmatprep.subr.mxu0 0.0
    %184 = vmatpush1.msra.mxu0 0.0
    %185 = vmatprep.mubr.f32.mxu0 0.0
    %v186 = vand.u32 %v101, 4294901760
    %v187 = vsub.f32 %v101, %v186
    %v188 = vand.u32 %v187, 4294901760
    %v189 = vsub.f32 %v187, %v188
    %v190 = vand.u32 %v189, 4294901760
    %191 = vmatmul.mubr.f32.gmra.mrb[0].mxu0 %v190
    %v192 = vpop.f32.mrb[0].mxu0
    %v193 = vadd.f32 %v97, %v192
    %v194 = vpop.f32.mrb[0].mxu0
    %v195 = vadd.f32 %v97, %v194
    %196 = vdwg.mxu0
    %v197 = vand.u32 %v57, 4294901760
    %v198 = vsub.f32 %v57, %v197
    %v199 = vand.u32 %v198, 4294901760
    %v200 = vsub.f32 %v198, %v199
    %v201 = vand.u32 %v200, 4294901760
    %202 = vmatprep.subr.mxu0 %v201
    %v203 = vand.u32 %v56, 4294901760
    %v204 = vsub.f32 %v56, %v203
    %v205 = vand.u32 %v204, 4294901760
    %v206 = vsub.f32 %v204, %v205
    %v207 = vand.u32 %v206, 4294901760
    %208 = vmatpush1.msra.mxu0 %v207
    %v209 = vand.u32 %v61, 4294901760
    %v210 = vsub.f32 %v61, %v209
    %v211 = vand.u32 %v210, 4294901760
    %v212 = vsub.f32 %v210, %v211
    %v213 = vand.u32 %v212, 4294901760
    %214 = vmatprep.subr.mxu0 %v213
    %v215 = vand.u32 %v60, 4294901760
    %v216 = vsub.f32 %v60, %v215
    %v217 = vand.u32 %v216, 4294901760
    %v218 = vsub.f32 %v216, %v217
    %v219 = vand.u32 %v218, 4294901760
    %220 = vmatpush1.msra.mxu0 %v219
    %v221 = vand.u32 %v65, 4294901760
    %v222 = vsub.f32 %v65, %v221
    %v223 = vand.u32 %v222, 4294901760
    %v224 = vsub.f32 %v222, %v223
    %v225 = vand.u32 %v224, 4294901760
    %226 = vmatprep.subr.mxu0 %v225
    %v227 = vand.u32 %v64, 4294901760
    %v228 = vsub.f32 %v64, %v227
    %v229 = vand.u32 %v228, 4294901760
    %v230 = vsub.f32 %v228, %v229
    %v231 = vand.u32 %v230, 4294901760
    %232 = vmatpush1.msra.mxu0 %v231
    %v233 = vand.u32 %v69, 4294901760
    %v234 = vsub.f32 %v69, %v233
    %v235 = vand.u32 %v234, 4294901760
    %v236 = vsub.f32 %v234, %v235
    %v237 = vand.u32 %v236, 4294901760
    %238 = vmatprep.subr.mxu0 %v237
    %v239 = vand.u32 %v68, 4294901760
    %v240 = vsub.f32 %v68, %v239
    %v241 = vand.u32 %v240, 4294901760
    %v242 = vsub.f32 %v240, %v241
    %v243 = vand.u32 %v242, 4294901760
    %244 = vmatpush1.msra.mxu0 %v243
    %v245 = vand.u32 %v73, 4294901760
    %v246 = vsub.f32 %v73, %v245
    %v247 = vand.u32 %v246, 4294901760
    %v248 = vsub.f32 %v246, %v247
    %v249 = vand.u32 %v248, 4294901760
    %250 = vmatprep.subr.mxu0 %v249
    %v251 = vand.u32 %v72, 4294901760
    %v252 = vsub.f32 %v72, %v251
    %v253 = vand.u32 %v252, 4294901760
    %v254 = vsub.f32 %v252, %v253
    %v255 = vand.u32 %v254, 4294901760
    %256 = vmatpush1.msra.mxu0 %v255
    %v257 = vand.u32 %v77, 4294901760
    %v258 = vsub.f32 %v77, %v257
    %v259 = vand.u32 %v258, 4294901760
    %v260 = vsub.f32 %v258, %v259
    %v261 = vand.u32 %v260, 4294901760
    %262 = vmatprep.subr.mxu0 %v261
    %v263 = vand.u32 %v76, 4294901760
    %v264 = vsub.f32 %v76, %v263
    %v265 = vand.u32 %v264, 4294901760
    %v266 = vsub.f32 %v264, %v265
    %v267 = vand.u32 %v266, 4294901760
    %268 = vmatpush1.msra.mxu0 %v267
    %v269 = vand.u32 %v81, 4294901760
    %v270 = vsub.f32 %v81, %v269
    %v271 = vand.u32 %v270, 4294901760
    %v272 = vsub.f32 %v270, %v271
    %v273 = vand.u32 %v272, 4294901760
    %274 = vmatprep.subr.mxu0 %v273
    %v275 = vand.u32 %v80, 4294901760
    %v276 = vsub.f32 %v80, %v275
    %v277 = vand.u32 %v276, 4294901760
    %v278 = vsub.f32 %v276, %v277
    %v279 = vand.u32 %v278, 4294901760
    %280 = vmatpush1.msra.mxu0 %v279
    %v281 = vand.u32 %v85, 4294901760
    %v282 = vsub.f32 %v85, %v281
    %v283 = vand.u32 %v282, 4294901760
    %v284 = vsub.f32 %v282, %v283
    %v285 = vand.u32 %v284, 4294901760
    %286 = vmatprep.subr.mxu0 %v285
    %v287 = vand.u32 %v84, 4294901760
    %v288 = vsub.f32 %v84, %v287
    %v289 = vand.u32 %v288, 4294901760
    %v290 = vsub.f32 %v288, %v289
    %v291 = vand.u32 %v290, 4294901760
    %292 = vmatpush1.msra.mxu0 %v291
    %v293 = vand.u32 %v89, 4294901760
    %v294 = vsub.f32 %v89, %v293
    %v295 = vand.u32 %v294, 4294901760
    %v296 = vsub.f32 %v294, %v295
    %v297 = vand.u32 %v296, 4294901760
    %298 = vmatprep.subr.mxu0 %v297
    %v299 = vand.u32 %v88, 4294901760
    %v300 = vsub.f32 %v88, %v299
    %v301 = vand.u32 %v300, 4294901760
    %v302 = vsub.f32 %v300, %v301
    %v303 = vand.u32 %v302, 4294901760
    %304 = vmatpush1.msra.mxu0 %v303
    %305 = vmatprep.subr.mxu0 0.0
    %306 = vmatpush1.msra.mxu0 0.0
    %307 = vmatprep.subr.mxu0 0.0
    %308 = vmatpush1.msra.mxu0 0.0
    %309 = vmatprep.subr.mxu0 0.0
    %310 = vmatpush1.msra.mxu0 0.0
    %311 = vmatprep.subr.mxu0 0.0
    %312 = vmatpush1.msra.mxu0 0.0
    %313 = vmatprep.subr.mxu0 0.0
    %314 = vmatpush1.msra.mxu0 0.0
    %315 = vmatprep.subr.mxu0 0.0
    %316 = vmatpush1.msra.mxu0 0.0
    %317 = vmatprep.subr.mxu0 0.0
    %318 = vmatpush1.msra.mxu0 0.0
    %319 = vmatprep.subr.mxu0 0.0
    %320 = vmatpush1.msra.mxu0 0.0
    %321 = vmatprep.subr.mxu0 0.0
    %322 = vmatpush1.msra.mxu0 0.0
    %323 = vmatprep.subr.mxu0 0.0
    %324 = vmatpush1.msra.mxu0 0.0
    %325 = vmatprep.subr.mxu0 0.0
    %326 = vmatpush1.msra.mxu0 0.0
    %327 = vmatprep.subr.mxu0 0.0
    %328 = vmatpush1.msra.mxu0 0.0
    %329 = vmatprep.subr.mxu0 0.0
    %330 = vmatpush1.msra.mxu0 0.0
    %331 = vmatprep.subr.mxu0 0.0
    %332 = vmatpush1.msra.mxu0 0.0
    %333 = vmatprep.subr.mxu0 0.0
    %334 = vmatpush1.msra.mxu0 0.0
    %335 = vmatprep.subr.mxu0 0.0
    %336 = vmatpush1.msra.mxu0 0.0
    %337 = vmatprep.subr.mxu0 0.0
    %338 = vmatpush1.msra.mxu0 0.0
    %339 = vmatprep.subr.mxu0 0.0
    %340 = vmatpush1.msra.mxu0 0.0
    %341 = vmatprep.subr.mxu0 0.0
    %342 = vmatpush1.msra.mxu0 0.0
    %343 = vmatprep.subr.mxu0 0.0
    %344 = vmatpush1.msra.mxu0 0.0
    %345 = vmatprep.subr.mxu0 0.0
    %346 = vmatpush1.msra.mxu0 0.0
    %347 = vmatprep.subr.mxu0 0.0
    %348 = vmatpush1.msra.mxu0 0.0
    %349 = vmatprep.subr.mxu0 0.0
    %350 = vmatpush1.msra.mxu0 0.0
    %351 = vmatprep.mubr.f32.mxu0 0.0
    %v352 = vand.u32 %v101, 4294901760
    %353 = vmatmul.mubr.f32.gmra.mrb[0].mxu0 %v352
    %v354 = vpop.f32.mrb[0].mxu0
    %v355 = vadd.f32 %v193, %v354
    %v356 = vpop.f32.mrb[0].mxu0
    %v357 = vadd.f32 %v195, %v356
    %358 = vdwg.mxu0
    %v359 = vand.u32 %v57, 4294901760
    %v360 = vsub.f32 %v57, %v359
    %361 = vmatprep.subr.mxu0 %v360
    %v362 = vand.u32 %v56, 4294901760
    %v363 = vsub.f32 %v56, %v362
    %364 = vmatpush1.msra.mxu0 %v363
    %v365 = vand.u32 %v61, 4294901760
    %v366 = vsub.f32 %v61, %v365
    %367 = vmatprep.subr.mxu0 %v366
    %v368 = vand.u32 %v60, 4294901760
    %v369 = vsub.f32 %v60, %v368
    %370 = vmatpush1.msra.mxu0 %v369
    %v371 = vand.u32 %v65, 4294901760
    %v372 = vsub.f32 %v65, %v371
    %373 = vmatprep.subr.mxu0 %v372
    %v374 = vand.u32 %v64, 4294901760
    %v375 = vsub.f32 %v64, %v374
    %376 = vmatpush1.msra.mxu0 %v375
    %v377 = vand.u32 %v69, 4294901760
    %v378 = vsub.f32 %v69, %v377
    %379 = vmatprep.subr.mxu0 %v378
    %v380 = vand.u32 %v68, 4294901760
    %v381 = vsub.f32 %v68, %v380
    %382 = vmatpush1.msra.mxu0 %v381
    %v383 = vand.u32 %v73, 4294901760
    %v384 = vsub.f32 %v73, %v383
    %385 = vmatprep.subr.mxu0 %v384
    %v386 = vand.u32 %v72, 4294901760
    %v387 = vsub.f32 %v72, %v386
    %388 = vmatpush1.msra.mxu0 %v387
    %v389 = vand.u32 %v77, 4294901760
    %v390 = vsub.f32 %v77, %v389
    %391 = vmatprep.subr.mxu0 %v390
    %v392 = vand.u32 %v76, 4294901760
    %v393 = vsub.f32 %v76, %v392
    %394 = vmatpush1.msra.mxu0 %v393
    %v395 = vand.u32 %v81, 4294901760
    %v396 = vsub.f32 %v81, %v395
    %397 = vmatprep.subr.mxu0 %v396
    %v398 = vand.u32 %v80, 4294901760
    %v399 = vsub.f32 %v80, %v398
    %400 = vmatpush1.msra.mxu0 %v399
    %v401 = vand.u32 %v85, 4294901760
    %v402 = vsub.f32 %v85, %v401
    %403 = vmatprep.subr.mxu0 %v402
    %v404 = vand.u32 %v84, 4294901760
    %v405 = vsub.f32 %v84, %v404
    %406 = vmatpush1.msra.mxu0 %v405
    %v407 = vand.u32 %v89, 4294901760
    %v408 = vsub.f32 %v89, %v407
    %409 = vmatprep.subr.mxu0 %v408
    %v410 = vand.u32 %v88, 4294901760
    %v411 = vsub.f32 %v88, %v410
    %412 = vmatpush1.msra.mxu0 %v411
    %413 = vmatprep.subr.mxu0 0.0
    %414 = vmatpush1.msra.mxu0 0.0
    %415 = vmatprep.subr.mxu0 0.0
    %416 = vmatpush1.msra.mxu0 0.0
    %417 = vmatprep.subr.mxu0 0.0
    %418 = vmatpush1.msra.mxu0 0.0
    %419 = vmatprep.subr.mxu0 0.0
    %420 = vmatpush1.msra.mxu0 0.0
    %421 = vmatprep.subr.mxu0 0.0
    %422 = vmatpush1.msra.mxu0 0.0
    %423 = vmatprep.subr.mxu0 0.0
    %424 = vmatpush1.msra.mxu0 0.0
    %425 = vmatprep.subr.mxu0 0.0
    %426 = vmatpush1.msra.mxu0 0.0
    %427 = vmatprep.subr.mxu0 0.0
    %428 = vmatpush1.msra.mxu0 0.0
    %429 = vmatprep.subr.mxu0 0.0
    %430 = vmatpush1.msra.mxu0 0.0
    %431 = vmatprep.subr.mxu0 0.0
    %432 = vmatpush1.msra.mxu0 0.0
    %433 = vmatprep.subr.mxu0 0.0
    %434 = vmatpush1.msra.mxu0 0.0
    %435 = vmatprep.subr.mxu0 0.0
    %436 = vmatpush1.msra.mxu0 0.0
    %437 = vmatprep.subr.mxu0 0.0
    %438 = vmatpush1.msra.mxu0 0.0
    %439 = vmatprep.subr.mxu0 0.0
    %440 = vmatpush1.msra.mxu0 0.0
    %441 = vmatprep.subr.mxu0 0.0
    %442 = vmatpush1.msra.mxu0 0.0
    %443 = vmatprep.subr.mxu0 0.0
    %444 = vmatpush1.msra.mxu0 0.0
    %445 = vmatprep.subr.mxu0 0.0
    %446 = vmatpush1.msra.mxu0 0.0
    %447 = vmatprep.subr.mxu0 0.0
    %448 = vmatpush1.msra.mxu0 0.0
    %449 = vmatprep.subr.mxu0 0.0
    %450 = vmatpush1.msra.mxu0 0.0
    %451 = vmatprep.subr.mxu0 0.0
    %452 = vmatpush1.msra.mxu0 0.0
    %453 = vmatprep.subr.mxu0 0.0
    %454 = vmatpush1.msra.mxu0 0.0
    %455 = vmatprep.subr.mxu0 0.0
    %456 = vmatpush1.msra.mxu0 0.0
    %457 = vmatprep.subr.mxu0 0.0
    %458 = vmatpush1.msra.mxu0 0.0
    %459 = vmatprep.mubr.f32.mxu0 0.0
    %v460 = vand.u32 %v101, 4294901760
    %v461 = vsub.f32 %v101, %v460
    %462 = vmatmul.mubr.f32.gmra.mrb[0].mxu0 %v461
    %v463 = vpop.f32.mrb[0].mxu0
    %v464 = vadd.f32 %v355, %v463
    %v465 = vpop.f32.mrb[0].mxu0
    %v466 = vadd.f32 %v357, %v465
    %467 = vdwg.mxu0
    %v468 = vand.u32 %v57, 4294901760
    %469 = vmatprep.subr.mxu0 %v468
    %v470 = vand.u32 %v56, 4294901760
    %471 = vmatpush1.msra.mxu0 %v470
    %v472 = vand.u32 %v61, 4294901760
    %473 = vmatprep.subr.mxu0 %v472
    %v474 = vand.u32 %v60, 4294901760
    %475 = vmatpush1.msra.mxu0 %v474
    %v476 = vand.u32 %v65, 4294901760
    %477 = vmatprep.subr.mxu0 %v476
    %v478 = vand.u32 %v64, 4294901760
    %479 = vmatpush1.msra.mxu0 %v478
    %v480 = vand.u32 %v69, 4294901760
    %481 = vmatprep.subr.mxu0 %v480
    %v482 = vand.u32 %v68, 4294901760
    %483 = vmatpush1.msra.mxu0 %v482
    %v484 = vand.u32 %v73, 4294901760
    %485 = vmatprep.subr.mxu0 %v484
    %v486 = vand.u32 %v72, 4294901760
    %487 = vmatpush1.msra.mxu0 %v486
    %v488 = vand.u32 %v77, 4294901760
    %489 = vmatprep.subr.mxu0 %v488
    %v490 = vand.u32 %v76, 4294901760
    %491 = vmatpush1.msra.mxu0 %v490
    %v492 = vand.u32 %v81, 4294901760
    %493 = vmatprep.subr.mxu0 %v492
    %v494 = vand.u32 %v80, 4294901760
    %495 = vmatpush1.msra.mxu0 %v494
    %v496 = vand.u32 %v85, 4294901760
    %497 = vmatprep.subr.mxu0 %v496
    %v498 = vand.u32 %v84, 4294901760
    %499 = vmatpush1.msra.mxu0 %v498
    %v500 = vand.u32 %v89, 4294901760
    %501 = vmatprep.subr.mxu0 %v500
    %v502 = vand.u32 %v88, 4294901760
    %503 = vmatpush1.msra.mxu0 %v502
    %504 = vmatprep.subr.mxu0 0.0
    %505 = vmatpush1.msra.mxu0 0.0
    %506 = vmatprep.subr.mxu0 0.0
    %507 = vmatpush1.msra.mxu0 0.0
    %508 = vmatprep.subr.mxu0 0.0
    %509 = vmatpush1.msra.mxu0 0.0
    %510 = vmatprep.subr.mxu0 0.0
    %511 = vmatpush1.msra.mxu0 0.0
    %512 = vmatprep.subr.mxu0 0.0
    %513 = vmatpush1.msra.mxu0 0.0
    %514 = vmatprep.subr.mxu0 0.0
    %515 = vmatpush1.msra.mxu0 0.0
    %516 = vmatprep.subr.mxu0 0.0
    %517 = vmatpush1.msra.mxu0 0.0
    %518 = vmatprep.subr.mxu0 0.0
    %519 = vmatpush1.msra.mxu0 0.0
    %520 = vmatprep.subr.mxu0 0.0
    %521 = vmatpush1.msra.mxu0 0.0
    %522 = vmatprep.subr.mxu0 0.0
    %523 = vmatpush1.msra.mxu0 0.0
    %524 = vmatprep.subr.mxu0 0.0
    %525 = vmatpush1.msra.mxu0 0.0
    %526 = vmatprep.subr.mxu0 0.0
    %527 = vmatpush1.msra.mxu0 0.0
    %528 = vmatprep.subr.mxu0 0.0
    %529 = vmatpush1.msra.mxu0 0.0
    %530 = vmatprep.subr.mxu0 0.0
    %531 = vmatpush1.msra.mxu0 0.0
    %532 = vmatprep.subr.mxu0 0.0
    %533 = vmatpush1.msra.mxu0 0.0
    %534 = vmatprep.subr.mxu0 0.0
    %535 = vmatpush1.msra.mxu0 0.0
    %536 = vmatprep.subr.mxu0 0.0
    %537 = vmatpush1.msra.mxu0 0.0
    %538 = vmatprep.subr.mxu0 0.0
    %539 = vmatpush1.msra.mxu0 0.0
    %540 = vmatprep.subr.mxu0 0.0
    %541 = vmatpush1.msra.mxu0 0.0
    %542 = vmatprep.subr.mxu0 0.0
    %543 = vmatpush1.msra.mxu0 0.0
    %544 = vmatprep.subr.mxu0 0.0
    %545 = vmatpush1.msra.mxu0 0.0
    %546 = vmatprep.subr.mxu0 0.0
    %547 = vmatpush1.msra.mxu0 0.0
    %548 = vmatprep.subr.mxu0 0.0
    %549 = vmatpush1.msra.mxu0 0.0
    %550 = vmatprep.mubr.f32.mxu0 0.0
    %v551 = vand.u32 %v101, 4294901760
    %v552 = vsub.f32 %v101, %v551
    %v553 = vand.u32 %v552, 4294901760
    %554 = vmatmul.mubr.f32.gmra.mrb[0].mxu0 %v553
    %v555 = vpop.f32.mrb[0].mxu0
    %v556 = vadd.f32 %v464, %v555
    %v557 = vpop.f32.mrb[0].mxu0
    %v558 = vadd.f32 %v466, %v557
    %559 = vdwg.mxu0
    %v560 = vand.u32 %v57, 4294901760
    %v561 = vsub.f32 %v57, %v560
    %v562 = vand.u32 %v561, 4294901760
    %563 = vmatprep.subr.mxu0 %v562
    %v564 = vand.u32 %v56, 4294901760
    %v565 = vsub.f32 %v56, %v564
    %v566 = vand.u32 %v565, 4294901760
    %567 = vmatpush1.msra.mxu0 %v566
    %v568 = vand.u32 %v61, 4294901760
    %v569 = vsub.f32 %v61, %v568
    %v570 = vand.u32 %v569, 4294901760
    %571 = vmatprep.subr.mxu0 %v570
    %v572 = vand.u32 %v60, 4294901760
    %v573 = vsub.f32 %v60, %v572
    %v574 = vand.u32 %v573, 4294901760
    %575 = vmatpush1.msra.mxu0 %v574
    %v576 = vand.u32 %v65, 4294901760
    %v577 = vsub.f32 %v65, %v576
    %v578 = vand.u32 %v577, 4294901760
    %579 = vmatprep.subr.mxu0 %v578
    %v580 = vand.u32 %v64, 4294901760
    %v581 = vsub.f32 %v64, %v580
    %v582 = vand.u32 %v581, 4294901760
    %583 = vmatpush1.msra.mxu0 %v582
    %v584 = vand.u32 %v69, 4294901760
    %v585 = vsub.f32 %v69, %v584
    %v586 = vand.u32 %v585, 4294901760
    %587 = vmatprep.subr.mxu0 %v586
    %v588 = vand.u32 %v68, 4294901760
    %v589 = vsub.f32 %v68, %v588
    %v590 = vand.u32 %v589, 4294901760
    %591 = vmatpush1.msra.mxu0 %v590
    %v592 = vand.u32 %v73, 4294901760
    %v593 = vsub.f32 %v73, %v592
    %v594 = vand.u32 %v593, 4294901760
    %595 = vmatprep.subr.mxu0 %v594
    %v596 = vand.u32 %v72, 4294901760
    %v597 = vsub.f32 %v72, %v596
    %v598 = vand.u32 %v597, 4294901760
    %599 = vmatpush1.msra.mxu0 %v598
    %v600 = vand.u32 %v77, 4294901760
    %v601 = vsub.f32 %v77, %v600
    %v602 = vand.u32 %v601, 4294901760
    %603 = vmatprep.subr.mxu0 %v602
    %v604 = vand.u32 %v76, 4294901760
    %v605 = vsub.f32 %v76, %v604
    %v606 = vand.u32 %v605, 4294901760
    %607 = vmatpush1.msra.mxu0 %v606
    %v608 = vand.u32 %v81, 4294901760
    %v609 = vsub.f32 %v81, %v608
    %v610 = vand.u32 %v609, 4294901760
    %611 = vmatprep.subr.mxu0 %v610
    %v612 = vand.u32 %v80, 4294901760
    %v613 = vsub.f32 %v80, %v612
    %v614 = vand.u32 %v613, 4294901760
    %615 = vmatpush1.msra.mxu0 %v614
    %v616 = vand.u32 %v85, 4294901760
    %v617 = vsub.f32 %v85, %v616
    %v618 = vand.u32 %v617, 4294901760
    %619 = vmatprep.subr.mxu0 %v618
    %v620 = vand.u32 %v84, 4294901760
    %v621 = vsub.f32 %v84, %v620
    %v622 = vand.u32 %v621, 4294901760
    %623 = vmatpush1.msra.mxu0 %v622
    %v624 = vand.u32 %v89, 4294901760
    %v625 = vsub.f32 %v89, %v624
    %v626 = vand.u32 %v625, 4294901760
    %627 = vmatprep.subr.mxu0 %v626
    %v628 = vand.u32 %v88, 4294901760
    %v629 = vsub.f32 %v88, %v628
    %v630 = vand.u32 %v629, 4294901760
    %631 = vmatpush1.msra.mxu0 %v630
    %632 = vmatprep.subr.mxu0 0.0
    %633 = vmatpush1.msra.mxu0 0.0
    %634 = vmatprep.subr.mxu0 0.0
    %635 = vmatpush1.msra.mxu0 0.0
    %636 = vmatprep.subr.mxu0 0.0
    %637 = vmatpush1.msra.mxu0 0.0
    %638 = vmatprep.subr.mxu0 0.0
    %639 = vmatpush1.msra.mxu0 0.0
    %640 = vmatprep.subr.mxu0 0.0
    %641 = vmatpush1.msra.mxu0 0.0
    %642 = vmatprep.subr.mxu0 0.0
    %643 = vmatpush1.msra.mxu0 0.0
    %644 = vmatprep.subr.mxu0 0.0
    %645 = vmatpush1.msra.mxu0 0.0
    %646 = vmatprep.subr.mxu0 0.0
    %647 = vmatpush1.msra.mxu0 0.0
    %648 = vmatprep.subr.mxu0 0.0
    %649 = vmatpush1.msra.mxu0 0.0
    %650 = vmatprep.subr.mxu0 0.0
    %651 = vmatpush1.msra.mxu0 0.0
    %652 = vmatprep.subr.mxu0 0.0
    %653 = vmatpush1.msra.mxu0 0.0
    %654 = vmatprep.subr.mxu0 0.0
    %655 = vmatpush1.msra.mxu0 0.0
    %656 = vmatprep.subr.mxu0 0.0
    %657 = vmatpush1.msra.mxu0 0.0
    %658 = vmatprep.subr.mxu0 0.0
    %659 = vmatpush1.msra.mxu0 0.0
    %660 = vmatprep.subr.mxu0 0.0
    %661 = vmatpush1.msra.mxu0 0.0
    %662 = vmatprep.subr.mxu0 0.0
    %663 = vmatpush1.msra.mxu0 0.0
    %664 = vmatprep.subr.mxu0 0.0
    %665 = vmatpush1.msra.mxu0 0.0
    %666 = vmatprep.subr.mxu0 0.0
    %667 = vmatpush1.msra.mxu0 0.0
    %668 = vmatprep.subr.mxu0 0.0
    %669 = vmatpush1.msra.mxu0 0.0
    %670 = vmatprep.subr.mxu0 0.0
    %671 = vmatpush1.msra.mxu0 0.0
    %672 = vmatprep.subr.mxu0 0.0
    %673 = vmatpush1.msra.mxu0 0.0
    %674 = vmatprep.subr.mxu0 0.0
    %675 = vmatpush1.msra.mxu0 0.0
    %676 = vmatprep.subr.mxu0 0.0
    %677 = vmatpush1.msra.mxu0 0.0
    %678 = vmatprep.mubr.f32.mxu0 0.0
    %v679 = vand.u32 %v101, 4294901760
    %680 = vmatmul.mubr.f32.gmra.mrb[0].mxu0 %v679
    %v681 = vpop.f32.mrb[0].mxu0
    %v682 = vadd.f32 %v556, %v681
    %v683 = vpop.f32.mrb[0].mxu0
    %v684 = vadd.f32 %v558, %v683
    %685 = vdwg.mxu0
    %v686 = vand.u32 %v57, 4294901760
    %687 = vmatprep.subr.mxu0 %v686
    %v688 = vand.u32 %v56, 4294901760
    %689 = vmatpush1.msra.mxu0 %v688
    %v690 = vand.u32 %v61, 4294901760
    %691 = vmatprep.subr.mxu0 %v690
    %v692 = vand.u32 %v60, 4294901760
    %693 = vmatpush1.msra.mxu0 %v692
    %v694 = vand.u32 %v65, 4294901760
    %695 = vmatprep.subr.mxu0 %v694
    %v696 = vand.u32 %v64, 4294901760
    %697 = vmatpush1.msra.mxu0 %v696
    %v698 = vand.u32 %v69, 4294901760
    %699 = vmatprep.subr.mxu0 %v698
    %v700 = vand.u32 %v68, 4294901760
    %701 = vmatpush1.msra.mxu0 %v700
    %v702 = vand.u32 %v73, 4294901760
    %703 = vmatprep.subr.mxu0 %v702
    %v704 = vand.u32 %v72, 4294901760
    %705 = vmatpush1.msra.mxu0 %v704
    %v706 = vand.u32 %v77, 4294901760
    %707 = vmatprep.subr.mxu0 %v706
    %v708 = vand.u32 %v76, 4294901760
    %709 = vmatpush1.msra.mxu0 %v708
    %v710 = vand.u32 %v81, 4294901760
    %711 = vmatprep.subr.mxu0 %v710
    %v712 = vand.u32 %v80, 4294901760
    %713 = vmatpush1.msra.mxu0 %v712
    %v714 = vand.u32 %v85, 4294901760
    %715 = vmatprep.subr.mxu0 %v714
    %v716 = vand.u32 %v84, 4294901760
    %717 = vmatpush1.msra.mxu0 %v716
    %v718 = vand.u32 %v89, 4294901760
    %719 = vmatprep.subr.mxu0 %v718
    %v720 = vand.u32 %v88, 4294901760
    %721 = vmatpush1.msra.mxu0 %v720
    %722 = vmatprep.subr.mxu0 0.0
    %723 = vmatpush1.msra.mxu0 0.0
    %724 = vmatprep.subr.mxu0 0.0
    %725 = vmatpush1.msra.mxu0 0.0
    %726 = vmatprep.subr.mxu0 0.0
    %727 = vmatpush1.msra.mxu0 0.0
    %728 = vmatprep.subr.mxu0 0.0
    %729 = vmatpush1.msra.mxu0 0.0
    %730 = vmatprep.subr.mxu0 0.0
    %731 = vmatpush1.msra.mxu0 0.0
    %732 = vmatprep.subr.mxu0 0.0
    %733 = vmatpush1.msra.mxu0 0.0
    %734 = vmatprep.subr.mxu0 0.0
    %735 = vmatpush1.msra.mxu0 0.0
    %736 = vmatprep.subr.mxu0 0.0
    %737 = vmatpush1.msra.mxu0 0.0
    %738 = vmatprep.subr.mxu0 0.0
    %739 = vmatpush1.msra.mxu0 0.0
    %740 = vmatprep.subr.mxu0 0.0
    %741 = vmatpush1.msra.mxu0 0.0
    %742 = vmatprep.subr.mxu0 0.0
    %743 = vmatpush1.msra.mxu0 0.0
    %744 = vmatprep.subr.mxu0 0.0
    %745 = vmatpush1.msra.mxu0 0.0
    %746 = vmatprep.subr.mxu0 0.0
    %747 = vmatpush1.msra.mxu0 0.0
    %748 = vmatprep.subr.mxu0 0.0
    %749 = vmatpush1.msra.mxu0 0.0
    %750 = vmatprep.subr.mxu0 0.0
    %751 = vmatpush1.msra.mxu0 0.0
    %752 = vmatprep.subr.mxu0 0.0
    %753 = vmatpush1.msra.mxu0 0.0
    %754 = vmatprep.subr.mxu0 0.0
    %755 = vmatpush1.msra.mxu0 0.0
    %756 = vmatprep.subr.mxu0 0.0
    %757 = vmatpush1.msra.mxu0 0.0
    %758 = vmatprep.subr.mxu0 0.0
    %759 = vmatpush1.msra.mxu0 0.0
    %760 = vmatprep.subr.mxu0 0.0
    %761 = vmatpush1.msra.mxu0 0.0
    %762 = vmatprep.subr.mxu0 0.0
    %763 = vmatpush1.msra.mxu0 0.0
    %764 = vmatprep.subr.mxu0 0.0
    %765 = vmatpush1.msra.mxu0 0.0
    %766 = vmatprep.subr.mxu0 0.0
    %767 = vmatpush1.msra.mxu0 0.0
    %768 = vmatprep.mubr.f32.mxu0 0.0
    %v769 = vand.u32 %v101, 4294901760
    %770 = vmatmul.mubr.f32.gmra.mrb[0].mxu0 %v769
    %v771 = vpop.f32.mrb[0].mxu0
    %v772 = vadd.f32 %v682, %v771
    %v773 = vpop.f32.mrb[0].mxu0
    %v774 = vadd.f32 %v684, %v773
    %775 = vdwg.mxu0
    %v776 = vand.u32 %v59, 4294901760
    %777 = vmatprep.subr.mxu0 %v776
    %v778 = vand.u32 %v58, 4294901760
    %779 = vmatpush1.msra.mxu0 %v778
    %v780 = vand.u32 %v63, 4294901760
    %781 = vmatprep.subr.mxu0 %v780
    %v782 = vand.u32 %v62, 4294901760
    %783 = vmatpush1.msra.mxu0 %v782
    %v784 = vand.u32 %v67, 4294901760
    %785 = vmatprep.subr.mxu0 %v784
    %v786 = vand.u32 %v66, 4294901760
    %787 = vmatpush1.msra.mxu0 %v786
    %v788 = vand.u32 %v71, 4294901760
    %789 = vmatprep.subr.mxu0 %v788
    %v790 = vand.u32 %v70, 4294901760
    %791 = vmatpush1.msra.mxu0 %v790
    %v792 = vand.u32 %v75, 4294901760
    %793 = vmatprep.subr.mxu0 %v792
    %v794 = vand.u32 %v74, 4294901760
    %795 = vmatpush1.msra.mxu0 %v794
    %v796 = vand.u32 %v79, 4294901760
    %797 = vmatprep.subr.mxu0 %v796
    %v798 = vand.u32 %v78, 4294901760
    %799 = vmatpush1.msra.mxu0 %v798
    %v800 = vand.u32 %v83, 4294901760
    %801 = vmatprep.subr.mxu0 %v800
    %v802 = vand.u32 %v82, 4294901760
    %803 = vmatpush1.msra.mxu0 %v802
    %v804 = vand.u32 %v87, 4294901760
    %805 = vmatprep.subr.mxu0 %v804
    %v806 = vand.u32 %v86, 4294901760
    %807 = vmatpush1.msra.mxu0 %v806
    %v808 = vand.u32 %v91, 4294901760
    %809 = vmatprep.subr.mxu0 %v808
    %v810 = vand.u32 %v90, 4294901760
    %811 = vmatpush1.msra.mxu0 %v810
    %812 = vmatprep.subr.mxu0 0.0
    %813 = vmatpush1.msra.mxu0 0.0
    %814 = vmatprep.subr.mxu0 0.0
    %815 = vmatpush1.msra.mxu0 0.0
    %816 = vmatprep.subr.mxu0 0.0
    %817 = vmatpush1.msra.mxu0 0.0
    %818 = vmatprep.subr.mxu0 0.0
    %819 = vmatpush1.msra.mxu0 0.0
    %820 = vmatprep.subr.mxu0 0.0
    %821 = vmatpush1.msra.mxu0 0.0
    %822 = vmatprep.subr.mxu0 0.0
    %823 = vmatpush1.msra.mxu0 0.0
    %824 = vmatprep.subr.mxu0 0.0
    %825 = vmatpush1.msra.mxu0 0.0
    %826 = vmatprep.subr.mxu0 0.0
    %827 = vmatpush1.msra.mxu0 0.0
    %828 = vmatprep.subr.mxu0 0.0
    %829 = vmatpush1.msra.mxu0 0.0
    %830 = vmatprep.subr.mxu0 0.0
    %831 = vmatpush1.msra.mxu0 0.0
    %832 = vmatprep.subr.mxu0 0.0
    %833 = vmatpush1.msra.mxu0 0.0
    %834 = vmatprep.subr.mxu0 0.0
    %835 = vmatpush1.msra.mxu0 0.0
    %836 = vmatprep.subr.mxu0 0.0
    %837 = vmatpush1.msra.mxu0 0.0
    %838 = vmatprep.subr.mxu0 0.0
    %839 = vmatpush1.msra.mxu0 0.0
    %840 = vmatprep.subr.mxu0 0.0
    %841 = vmatpush1.msra.mxu0 0.0
    %842 = vmatprep.subr.mxu0 0.0
    %843 = vmatpush1.msra.mxu0 0.0
    %844 = vmatprep.subr.mxu0 0.0
    %845 = vmatpush1.msra.mxu0 0.0
    %846 = vmatprep.subr.mxu0 0.0
    %847 = vmatpush1.msra.mxu0 0.0
    %848 = vmatprep.subr.mxu0 0.0
    %849 = vmatpush1.msra.mxu0 0.0
    %850 = vmatprep.subr.mxu0 0.0
    %851 = vmatpush1.msra.mxu0 0.0
    %852 = vmatprep.subr.mxu0 0.0
    %853 = vmatpush1.msra.mxu0 0.0
    %854 = vmatprep.subr.mxu0 0.0
    %855 = vmatpush1.msra.mxu0 0.0
    %856 = vmatprep.subr.mxu0 0.0
    %857 = vmatpush1.msra.mxu0 0.0
    %858 = vmatprep.mubr.f32.mxu0 0.0
    %v859 = vand.u32 %v101, 4294901760
    %v860 = vsub.f32 %v101, %v859
    %v861 = vand.u32 %v860, 4294901760
    %v862 = vsub.f32 %v860, %v861
    %v863 = vand.u32 %v862, 4294901760
    %864 = vmatmul.mubr.f32.gmra.mrb[0].mxu0 %v863
    %v865 = vpop.f32.mrb[0].mxu0
    %v866 = vadd.f32 %v97, %v865
    %v867 = vpop.f32.mrb[0].mxu0
    %v868 = vadd.f32 %v97, %v867
    %869 = vdwg.mxu0
    %v870 = vand.u32 %v59, 4294901760
    %v871 = vsub.f32 %v59, %v870
    %v872 = vand.u32 %v871, 4294901760
    %v873 = vsub.f32 %v871, %v872
    %v874 = vand.u32 %v873, 4294901760
    %875 = vmatprep.subr.mxu0 %v874
    %v876 = vand.u32 %v58, 4294901760
    %v877 = vsub.f32 %v58, %v876
    %v878 = vand.u32 %v877, 4294901760
    %v879 = vsub.f32 %v877, %v878
    %v880 = vand.u32 %v879, 4294901760
    %881 = vmatpush1.msra.mxu0 %v880
    %v882 = vand.u32 %v63, 4294901760
    %v883 = vsub.f32 %v63, %v882
    %v884 = vand.u32 %v883, 4294901760
    %v885 = vsub.f32 %v883, %v884
    %v886 = vand.u32 %v885, 4294901760
    %887 = vmatprep.subr.mxu0 %v886
    %v888 = vand.u32 %v62, 4294901760
    %v889 = vsub.f32 %v62, %v888
    %v890 = vand.u32 %v889, 4294901760
    %v891 = vsub.f32 %v889, %v890
    %v892 = vand.u32 %v891, 4294901760
    %893 = vmatpush1.msra.mxu0 %v892
    %v894 = vand.u32 %v67, 4294901760
    %v895 = vsub.f32 %v67, %v894
    %v896 = vand.u32 %v895, 4294901760
    %v897 = vsub.f32 %v895, %v896
    %v898 = vand.u32 %v897, 4294901760
    %899 = vmatprep.subr.mxu0 %v898
    %v900 = vand.u32 %v66, 4294901760
    %v901 = vsub.f32 %v66, %v900
    %v902 = vand.u32 %v901, 4294901760
    %v903 = vsub.f32 %v901, %v902
    %v904 = vand.u32 %v903, 4294901760
    %905 = vmatpush1.msra.mxu0 %v904
    %v906 = vand.u32 %v71, 4294901760
    %v907 = vsub.f32 %v71, %v906
    %v908 = vand.u32 %v907, 4294901760
    %v909 = vsub.f32 %v907, %v908
    %v910 = vand.u32 %v909, 4294901760
    %911 = vmatprep.subr.mxu0 %v910
    %v912 = vand.u32 %v70, 4294901760
    %v913 = vsub.f32 %v70, %v912
    %v914 = vand.u32 %v913, 4294901760
    %v915 = vsub.f32 %v913, %v914
    %v916 = vand.u32 %v915, 4294901760
    %917 = vmatpush1.msra.mxu0 %v916
    %v918 = vand.u32 %v75, 4294901760
    %v919 = vsub.f32 %v75, %v918
    %v920 = vand.u32 %v919, 4294901760
    %v921 = vsub.f32 %v919, %v920
    %v922 = vand.u32 %v921, 4294901760
    %923 = vmatprep.subr.mxu0 %v922
    %v924 = vand.u32 %v74, 4294901760
    %v925 = vsub.f32 %v74, %v924
    %v926 = vand.u32 %v925, 4294901760
    %v927 = vsub.f32 %v925, %v926
    %v928 = vand.u32 %v927, 4294901760
    %929 = vmatpush1.msra.mxu0 %v928
    %v930 = vand.u32 %v79, 4294901760
    %v931 = vsub.f32 %v79, %v930
    %v932 = vand.u32 %v931, 4294901760
    %v933 = vsub.f32 %v931, %v932
    %v934 = vand.u32 %v933, 4294901760
    %935 = vmatprep.subr.mxu0 %v934
    %v936 = vand.u32 %v78, 4294901760
    %v937 = vsub.f32 %v78, %v936
    %v938 = vand.u32 %v937, 4294901760
    %v939 = vsub.f32 %v937, %v938
    %v940 = vand.u32 %v939, 4294901760
    %941 = vmatpush1.msra.mxu0 %v940
    %v942 = vand.u32 %v83, 4294901760
    %v943 = vsub.f32 %v83, %v942
    %v944 = vand.u32 %v943, 4294901760
    %v945 = vsub.f32 %v943, %v944
    %v946 = vand.u32 %v945, 4294901760
    %947 = vmatprep.subr.mxu0 %v946
    %v948 = vand.u32 %v82, 4294901760
    %v949 = vsub.f32 %v82, %v948
    %v950 = vand.u32 %v949, 4294901760
    %v951 = vsub.f32 %v949, %v950
    %v952 = vand.u32 %v951, 4294901760
    %953 = vmatpush1.msra.mxu0 %v952
    %v954 = vand.u32 %v87, 4294901760
    %v955 = vsub.f32 %v87, %v954
    %v956 = vand.u32 %v955, 4294901760
    %v957 = vsub.f32 %v955, %v956
    %v958 = vand.u32 %v957, 4294901760
    %959 = vmatprep.subr.mxu0 %v958
    %v960 = vand.u32 %v86, 4294901760
    %v961 = vsub.f32 %v86, %v960
    %v962 = vand.u32 %v961, 4294901760
    %v963 = vsub.f32 %v961, %v962
    %v964 = vand.u32 %v963, 4294901760
    %965 = vmatpush1.msra.mxu0 %v964
    %v966 = vand.u32 %v91, 4294901760
    %v967 = vsub.f32 %v91, %v966
    %v968 = vand.u32 %v967, 4294901760
    %v969 = vsub.f32 %v967, %v968
    %v970 = vand.u32 %v969, 4294901760
    %971 = vmatprep.subr.mxu0 %v970
    %v972 = vand.u32 %v90, 4294901760
    %v973 = vsub.f32 %v90, %v972
    %v974 = vand.u32 %v973, 4294901760
    %v975 = vsub.f32 %v973, %v974
    %v976 = vand.u32 %v975, 4294901760
    %977 = vmatpush1.msra.mxu0 %v976
    %978 = vmatprep.subr.mxu0 0.0
    %979 = vmatpush1.msra.mxu0 0.0
    %980 = vmatprep.subr.mxu0 0.0
    %981 = vmatpush1.msra.mxu0 0.0
    %982 = vmatprep.subr.mxu0 0.0
    %983 = vmatpush1.msra.mxu0 0.0
    %984 = vmatprep.subr.mxu0 0.0
    %985 = vmatpush1.msra.mxu0 0.0
    %986 = vmatprep.subr.mxu0 0.0
    %987 = vmatpush1.msra.mxu0 0.0
    %988 = vmatprep.subr.mxu0 0.0
    %989 = vmatpush1.msra.mxu0 0.0
    %990 = vmatprep.subr.mxu0 0.0
    %991 = vmatpush1.msra.mxu0 0.0
    %992 = vmatprep.subr.mxu0 0.0
    %993 = vmatpush1.msra.mxu0 0.0
    %994 = vmatprep.subr.mxu0 0.0
    %995 = vmatpush1.msra.mxu0 0.0
    %996 = vmatprep.subr.mxu0 0.0
    %997 = vmatpush1.msra.mxu0 0.0
    %998 = vmatprep.subr.mxu0 0.0
    %999 = vmatpush1.msra.mxu0 0.0
    %1000 = vmatprep.subr.mxu0 0.0
    %1001 = vmatpush1.msra.mxu0 0.0
    %1002 = vmatprep.subr.mxu0 0.0
    %1003 = vmatpush1.msra.mxu0 0.0
    %1004 = vmatprep.subr.mxu0 0.0
    %1005 = vmatpush1.msra.mxu0 0.0
    %1006 = vmatprep.subr.mxu0 0.0
    %1007 = vmatpush1.msra.mxu0 0.0
    %1008 = vmatprep.subr.mxu0 0.0
    %1009 = vmatpush1.msra.mxu0 0.0
    %1010 = vmatprep.subr.mxu0 0.0
    %1011 = vmatpush1.msra.mxu0 0.0
    %1012 = vmatprep.subr.mxu0 0.0
    %1013 = vmatpush1.msra.mxu0 0.0
    %1014 = vmatprep.subr.mxu0 0.0
    %1015 = vmatpush1.msra.mxu0 0.0
    %1016 = vmatprep.subr.mxu0 0.0
    %1017 = vmatpush1.msra.mxu0 0.0
    %1018 = vmatprep.subr.mxu0 0.0
    %1019 = vmatpush1.msra.mxu0 0.0
    %1020 = vmatprep.subr.mxu0 0.0
    %1021 = vmatpush1.msra.mxu0 0.0
    %1022 = vmatprep.subr.mxu0 0.0
    %1023 = vmatpush1.msra.mxu0 0.0
    %1024 = vmatprep.mubr.f32.mxu0 0.0
    %v1025 = vand.u32 %v101, 4294901760
    %1026 = vmatmul.mubr.f32.gmra.mrb[0].mxu0 %v1025
    %v1027 = vpop.f32.mrb[0].mxu0
    %v1028 = vadd.f32 %v866, %v1027
    %v1029 = vpop.f32.mrb[0].mxu0
    %v1030 = vadd.f32 %v868, %v1029
    %1031 = vdwg.mxu0
    %v1032 = vand.u32 %v59, 4294901760
    %v1033 = vsub.f32 %v59, %v1032
    %1034 = vmatprep.subr.mxu0 %v1033
    %v1035 = vand.u32 %v58, 4294901760
    %v1036 = vsub.f32 %v58, %v1035
    %1037 = vmatpush1.msra.mxu0 %v1036
    %v1038 = vand.u32 %v63, 4294901760
    %v1039 = vsub.f32 %v63, %v1038
    %1040 = vmatprep.subr.mxu0 %v1039
    %v1041 = vand.u32 %v62, 4294901760
    %v1042 = vsub.f32 %v62, %v1041
    %1043 = vmatpush1.msra.mxu0 %v1042
    %v1044 = vand.u32 %v67, 4294901760
    %v1045 = vsub.f32 %v67, %v1044
    %1046 = vmatprep.subr.mxu0 %v1045
    %v1047 = vand.u32 %v66, 4294901760
    %v1048 = vsub.f32 %v66, %v1047
    %1049 = vmatpush1.msra.mxu0 %v1048
    %v1050 = vand.u32 %v71, 4294901760
    %v1051 = vsub.f32 %v71, %v1050
    %1052 = vmatprep.subr.mxu0 %v1051
    %v1053 = vand.u32 %v70, 4294901760
    %v1054 = vsub.f32 %v70, %v1053
    %1055 = vmatpush1.msra.mxu0 %v1054
    %v1056 = vand.u32 %v75, 4294901760
    %v1057 = vsub.f32 %v75, %v1056
    %1058 = vmatprep.subr.mxu0 %v1057
    %v1059 = vand.u32 %v74, 4294901760
    %v1060 = vsub.f32 %v74, %v1059
    %1061 = vmatpush1.msra.mxu0 %v1060
    %v1062 = vand.u32 %v79, 4294901760
    %v1063 = vsub.f32 %v79, %v1062
    %1064 = vmatprep.subr.mxu0 %v1063
    %v1065 = vand.u32 %v78, 4294901760
    %v1066 = vsub.f32 %v78, %v1065
    %1067 = vmatpush1.msra.mxu0 %v1066
    %v1068 = vand.u32 %v83, 4294901760
    %v1069 = vsub.f32 %v83, %v1068
    %1070 = vmatprep.subr.mxu0 %v1069
    %v1071 = vand.u32 %v82, 4294901760
    %v1072 = vsub.f32 %v82, %v1071
    %1073 = vmatpush1.msra.mxu0 %v1072
    %v1074 = vand.u32 %v87, 4294901760
    %v1075 = vsub.f32 %v87, %v1074
    %1076 = vmatprep.subr.mxu0 %v1075
    %v1077 = vand.u32 %v86, 4294901760
    %v1078 = vsub.f32 %v86, %v1077
    %1079 = vmatpush1.msra.mxu0 %v1078
    %v1080 = vand.u32 %v91, 4294901760
    %v1081 = vsub.f32 %v91, %v1080
    %1082 = vmatprep.subr.mxu0 %v1081
    %v1083 = vand.u32 %v90, 4294901760
    %v1084 = vsub.f32 %v90, %v1083
    %1085 = vmatpush1.msra.mxu0 %v1084
    %1086 = vmatprep.subr.mxu0 0.0
    %1087 = vmatpush1.msra.mxu0 0.0
    %1088 = vmatprep.subr.mxu0 0.0
    %1089 = vmatpush1.msra.mxu0 0.0
    %1090 = vmatprep.subr.mxu0 0.0
    %1091 = vmatpush1.msra.mxu0 0.0
    %1092 = vmatprep.subr.mxu0 0.0
    %1093 = vmatpush1.msra.mxu0 0.0
    %1094 = vmatprep.subr.mxu0 0.0
    %1095 = vmatpush1.msra.mxu0 0.0
    %1096 = vmatprep.subr.mxu0 0.0
    %1097 = vmatpush1.msra.mxu0 0.0
    %1098 = vmatprep.subr.mxu0 0.0
    %1099 = vmatpush1.msra.mxu0 0.0
    %1100 = vmatprep.subr.mxu0 0.0
    %1101 = vmatpush1.msra.mxu0 0.0
    %1102 = vmatprep.subr.mxu0 0.0
    %1103 = vmatpush1.msra.mxu0 0.0
    %1104 = vmatprep.subr.mxu0 0.0
    %1105 = vmatpush1.msra.mxu0 0.0
    %1106 = vmatprep.subr.mxu0 0.0
    %1107 = vmatpush1.msra.mxu0 0.0
    %1108 = vmatprep.subr.mxu0 0.0
    %1109 = vmatpush1.msra.mxu0 0.0
    %1110 = vmatprep.subr.mxu0 0.0
    %1111 = vmatpush1.msra.mxu0 0.0
    %1112 = vmatprep.subr.mxu0 0.0
    %1113 = vmatpush1.msra.mxu0 0.0
    %1114 = vmatprep.subr.mxu0 0.0
    %1115 = vmatpush1.msra.mxu0 0.0
    %1116 = vmatprep.subr.mxu0 0.0
    %1117 = vmatpush1.msra.mxu0 0.0
    %1118 = vmatprep.subr.mxu0 0.0
    %1119 = vmatpush1.msra.mxu0 0.0
    %1120 = vmatprep.subr.mxu0 0.0
    %1121 = vmatpush1.msra.mxu0 0.0
    %1122 = vmatprep.subr.mxu0 0.0
    %1123 = vmatpush1.msra.mxu0 0.0
    %1124 = vmatprep.subr.mxu0 0.0
    %1125 = vmatpush1.msra.mxu0 0.0
    %1126 = vmatprep.subr.mxu0 0.0
    %1127 = vmatpush1.msra.mxu0 0.0
    %1128 = vmatprep.subr.mxu0 0.0
    %1129 = vmatpush1.msra.mxu0 0.0
    %1130 = vmatprep.subr.mxu0 0.0
    %1131 = vmatpush1.msra.mxu0 0.0
    %1132 = vmatprep.mubr.f32.mxu0 0.0
    %v1133 = vand.u32 %v101, 4294901760
    %v1134 = vsub.f32 %v101, %v1133
    %1135 = vmatmul.mubr.f32.gmra.mrb[0].mxu0 %v1134
    %v1136 = vpop.f32.mrb[0].mxu0
    %v1137 = vadd.f32 %v1028, %v1136
    %v1138 = vpop.f32.mrb[0].mxu0
    %v1139 = vadd.f32 %v1030, %v1138
    %1140 = vdwg.mxu0
    %v1141 = vand.u32 %v59, 4294901760
    %1142 = vmatprep.subr.mxu0 %v1141
    %v1143 = vand.u32 %v58, 4294901760
    %1144 = vmatpush1.msra.mxu0 %v1143
    %v1145 = vand.u32 %v63, 4294901760
    %1146 = vmatprep.subr.mxu0 %v1145
    %v1147 = vand.u32 %v62, 4294901760
    %1148 = vmatpush1.msra.mxu0 %v1147
    %v1149 = vand.u32 %v67, 4294901760
    %1150 = vmatprep.subr.mxu0 %v1149
    %v1151 = vand.u32 %v66, 4294901760
    %1152 = vmatpush1.msra.mxu0 %v1151
    %v1153 = vand.u32 %v71, 4294901760
    %1154 = vmatprep.subr.mxu0 %v1153
    %v1155 = vand.u32 %v70, 4294901760
    %1156 = vmatpush1.msra.mxu0 %v1155
    %v1157 = vand.u32 %v75, 4294901760
    %1158 = vmatprep.subr.mxu0 %v1157
    %v1159 = vand.u32 %v74, 4294901760
    %1160 = vmatpush1.msra.mxu0 %v1159
    %v1161 = vand.u32 %v79, 4294901760
    %1162 = vmatprep.subr.mxu0 %v1161
    %v1163 = vand.u32 %v78, 4294901760
    %1164 = vmatpush1.msra.mxu0 %v1163
    %v1165 = vand.u32 %v83, 4294901760
    %1166 = vmatprep.subr.mxu0 %v1165
    %v1167 = vand.u32 %v82, 4294901760
    %1168 = vmatpush1.msra.mxu0 %v1167
    %v1169 = vand.u32 %v87, 4294901760
    %1170 = vmatprep.subr.mxu0 %v1169
    %v1171 = vand.u32 %v86, 4294901760
    %1172 = vmatpush1.msra.mxu0 %v1171
    %v1173 = vand.u32 %v91, 4294901760
    %1174 = vmatprep.subr.mxu0 %v1173
    %v1175 = vand.u32 %v90, 4294901760
    %1176 = vmatpush1.msra.mxu0 %v1175
    %1177 = vmatprep.subr.mxu0 0.0
    %1178 = vmatpush1.msra.mxu0 0.0
    %1179 = vmatprep.subr.mxu0 0.0
    %1180 = vmatpush1.msra.mxu0 0.0
    %1181 = vmatprep.subr.mxu0 0.0
    %1182 = vmatpush1.msra.mxu0 0.0
    %1183 = vmatprep.subr.mxu0 0.0
    %1184 = vmatpush1.msra.mxu0 0.0
    %1185 = vmatprep.subr.mxu0 0.0
    %1186 = vmatpush1.msra.mxu0 0.0
    %1187 = vmatprep.subr.mxu0 0.0
    %1188 = vmatpush1.msra.mxu0 0.0
    %1189 = vmatprep.subr.mxu0 0.0
    %1190 = vmatpush1.msra.mxu0 0.0
    %1191 = vmatprep.subr.mxu0 0.0
    %1192 = vmatpush1.msra.mxu0 0.0
    %1193 = vmatprep.subr.mxu0 0.0
    %1194 = vmatpush1.msra.mxu0 0.0
    %1195 = vmatprep.subr.mxu0 0.0
    %1196 = vmatpush1.msra.mxu0 0.0
    %1197 = vmatprep.subr.mxu0 0.0
    %1198 = vmatpush1.msra.mxu0 0.0
    %1199 = vmatprep.subr.mxu0 0.0
    %1200 = vmatpush1.msra.mxu0 0.0
    %1201 = vmatprep.subr.mxu0 0.0
    %1202 = vmatpush1.msra.mxu0 0.0
    %1203 = vmatprep.subr.mxu0 0.0
    %1204 = vmatpush1.msra.mxu0 0.0
    %1205 = vmatprep.subr.mxu0 0.0
    %1206 = vmatpush1.msra.mxu0 0.0
    %1207 = vmatprep.subr.mxu0 0.0
    %1208 = vmatpush1.msra.mxu0 0.0
    %1209 = vmatprep.subr.mxu0 0.0
    %1210 = vmatpush1.msra.mxu0 0.0
    %1211 = vmatprep.subr.mxu0 0.0
    %1212 = vmatpush1.msra.mxu0 0.0
    %1213 = vmatprep.subr.mxu0 0.0
    %1214 = vmatpush1.msra.mxu0 0.0
    %1215 = vmatprep.subr.mxu0 0.0
    %1216 = vmatpush1.msra.mxu0 0.0
    %1217 = vmatprep.subr.mxu0 0.0
    %1218 = vmatpush1.msra.mxu0 0.0
    %1219 = vmatprep.subr.mxu0 0.0
    %1220 = vmatpush1.msra.mxu0 0.0
    %1221 = vmatprep.subr.mxu0 0.0
    %1222 = vmatpush1.msra.mxu0 0.0
    %1223 = vmatprep.mubr.f32.mxu0 0.0
    %v1224 = vand.u32 %v101, 4294901760
    %v1225 = vsub.f32 %v101, %v1224
    %v1226 = vand.u32 %v1225, 4294901760
    %1227 = vmatmul.mubr.f32.gmra.mrb[0].mxu0 %v1226
    %v1228 = vpop.f32.mrb[0].mxu0
    %v1229 = vadd.f32 %v1137, %v1228
    %v1230 = vpop.f32.mrb[0].mxu0
    %v1231 = vadd.f32 %v1139, %v1230
    %1232 = vdwg.mxu0
    %v1233 = vand.u32 %v59, 4294901760
    %v1234 = vsub.f32 %v59, %v1233
    %v1235 = vand.u32 %v1234, 4294901760
    %1236 = vmatprep.subr.mxu0 %v1235
    %v1237 = vand.u32 %v58, 4294901760
    %v1238 = vsub.f32 %v58, %v1237
    %v1239 = vand.u32 %v1238, 4294901760
    %1240 = vmatpush1.msra.mxu0 %v1239
    %v1241 = vand.u32 %v63, 4294901760
    %v1242 = vsub.f32 %v63, %v1241
    %v1243 = vand.u32 %v1242, 4294901760
    %1244 = vmatprep.subr.mxu0 %v1243
    %v1245 = vand.u32 %v62, 4294901760
    %v1246 = vsub.f32 %v62, %v1245
    %v1247 = vand.u32 %v1246, 4294901760
    %1248 = vmatpush1.msra.mxu0 %v1247
    %v1249 = vand.u32 %v67, 4294901760
    %v1250 = vsub.f32 %v67, %v1249
    %v1251 = vand.u32 %v1250, 4294901760
    %1252 = vmatprep.subr.mxu0 %v1251
    %v1253 = vand.u32 %v66, 4294901760
    %v1254 = vsub.f32 %v66, %v1253
    %v1255 = vand.u32 %v1254, 4294901760
    %1256 = vmatpush1.msra.mxu0 %v1255
    %v1257 = vand.u32 %v71, 4294901760
    %v1258 = vsub.f32 %v71, %v1257
    %v1259 = vand.u32 %v1258, 4294901760
    %1260 = vmatprep.subr.mxu0 %v1259
    %v1261 = vand.u32 %v70, 4294901760
    %v1262 = vsub.f32 %v70, %v1261
    %v1263 = vand.u32 %v1262, 4294901760
    %1264 = vmatpush1.msra.mxu0 %v1263
    %v1265 = vand.u32 %v75, 4294901760
    %v1266 = vsub.f32 %v75, %v1265
    %v1267 = vand.u32 %v1266, 4294901760
    %1268 = vmatprep.subr.mxu0 %v1267
    %v1269 = vand.u32 %v74, 4294901760
    %v1270 = vsub.f32 %v74, %v1269
    %v1271 = vand.u32 %v1270, 4294901760
    %1272 = vmatpush1.msra.mxu0 %v1271
    %v1273 = vand.u32 %v79, 4294901760
    %v1274 = vsub.f32 %v79, %v1273
    %v1275 = vand.u32 %v1274, 4294901760
    %1276 = vmatprep.subr.mxu0 %v1275
    %v1277 = vand.u32 %v78, 4294901760
    %v1278 = vsub.f32 %v78, %v1277
    %v1279 = vand.u32 %v1278, 4294901760
    %1280 = vmatpush1.msra.mxu0 %v1279
    %v1281 = vand.u32 %v83, 4294901760
    %v1282 = vsub.f32 %v83, %v1281
    %v1283 = vand.u32 %v1282, 4294901760
    %1284 = vmatprep.subr.mxu0 %v1283
    %v1285 = vand.u32 %v82, 4294901760
    %v1286 = vsub.f32 %v82, %v1285
    %v1287 = vand.u32 %v1286, 4294901760
    %1288 = vmatpush1.msra.mxu0 %v1287
    %v1289 = vand.u32 %v87, 4294901760
    %v1290 = vsub.f32 %v87, %v1289
    %v1291 = vand.u32 %v1290, 4294901760
    %1292 = vmatprep.subr.mxu0 %v1291
    %v1293 = vand.u32 %v86, 4294901760
    %v1294 = vsub.f32 %v86, %v1293
    %v1295 = vand.u32 %v1294, 4294901760
    %1296 = vmatpush1.msra.mxu0 %v1295
    %v1297 = vand.u32 %v91, 4294901760
    %v1298 = vsub.f32 %v91, %v1297
    %v1299 = vand.u32 %v1298, 4294901760
    %1300 = vmatprep.subr.mxu0 %v1299
    %v1301 = vand.u32 %v90, 4294901760
    %v1302 = vsub.f32 %v90, %v1301
    %v1303 = vand.u32 %v1302, 4294901760
    %1304 = vmatpush1.msra.mxu0 %v1303
    %1305 = vmatprep.subr.mxu0 0.0
    %1306 = vmatpush1.msra.mxu0 0.0
    %1307 = vmatprep.subr.mxu0 0.0
    %1308 = vmatpush1.msra.mxu0 0.0
    %1309 = vmatprep.subr.mxu0 0.0
    %1310 = vmatpush1.msra.mxu0 0.0
    %1311 = vmatprep.subr.mxu0 0.0
    %1312 = vmatpush1.msra.mxu0 0.0
    %1313 = vmatprep.subr.mxu0 0.0
    %1314 = vmatpush1.msra.mxu0 0.0
    %1315 = vmatprep.subr.mxu0 0.0
    %1316 = vmatpush1.msra.mxu0 0.0
    %1317 = vmatprep.subr.mxu0 0.0
    %1318 = vmatpush1.msra.mxu0 0.0
    %1319 = vmatprep.subr.mxu0 0.0
    %1320 = vmatpush1.msra.mxu0 0.0
    %1321 = vmatprep.subr.mxu0 0.0
    %1322 = vmatpush1.msra.mxu0 0.0
    %1323 = vmatprep.subr.mxu0 0.0
    %1324 = vmatpush1.msra.mxu0 0.0
    %1325 = vmatprep.subr.mxu0 0.0
    %1326 = vmatpush1.msra.mxu0 0.0
    %1327 = vmatprep.subr.mxu0 0.0
    %1328 = vmatpush1.msra.mxu0 0.0
    %1329 = vmatprep.subr.mxu0 0.0
    %1330 = vmatpush1.msra.mxu0 0.0
    %1331 = vmatprep.subr.mxu0 0.0
    %1332 = vmatpush1.msra.mxu0 0.0
    %1333 = vmatprep.subr.mxu0 0.0
    %1334 = vmatpush1.msra.mxu0 0.0
    %1335 = vmatprep.subr.mxu0 0.0
    %1336 = vmatpush1.msra.mxu0 0.0
    %1337 = vmatprep.subr.mxu0 0.0
    %1338 = vmatpush1.msra.mxu0 0.0
    %1339 = vmatprep.subr.mxu0 0.0
    %1340 = vmatpush1.msra.mxu0 0.0
    %1341 = vmatprep.subr.mxu0 0.0
    %1342 = vmatpush1.msra.mxu0 0.0
    %1343 = vmatprep.subr.mxu0 0.0
    %1344 = vmatpush1.msra.mxu0 0.0
    %1345 = vmatprep.subr.mxu0 0.0
    %1346 = vmatpush1.msra.mxu0 0.0
    %1347 = vmatprep.subr.mxu0 0.0
    %1348 = vmatpush1.msra.mxu0 0.0
    %1349 = vmatprep.subr.mxu0 0.0
    %1350 = vmatpush1.msra.mxu0 0.0
    %1351 = vmatprep.mubr.f32.mxu0 0.0
    %v1352 = vand.u32 %v101, 4294901760
    %1353 = vmatmul.mubr.f32.gmra.mrb[0].mxu0 %v1352
    %v1354 = vpop.f32.mrb[0].mxu0
    %v1355 = vadd.f32 %v1229, %v1354
    %v1356 = vpop.f32.mrb[0].mxu0
    %v1357 = vadd.f32 %v1231, %v1356
    %1358 = vdwg.mxu0
    %v1359 = vand.u32 %v59, 4294901760
    %1360 = vmatprep.subr.mxu0 %v1359
    %v1361 = vand.u32 %v58, 4294901760
    %1362 = vmatpush1.msra.mxu0 %v1361
    %v1363 = vand.u32 %v63, 4294901760
    %1364 = vmatprep.subr.mxu0 %v1363
    %v1365 = vand.u32 %v62, 4294901760
    %1366 = vmatpush1.msra.mxu0 %v1365
    %v1367 = vand.u32 %v67, 4294901760
    %1368 = vmatprep.subr.mxu0 %v1367
    %v1369 = vand.u32 %v66, 4294901760
    %1370 = vmatpush1.msra.mxu0 %v1369
    %v1371 = vand.u32 %v71, 4294901760
    %1372 = vmatprep.subr.mxu0 %v1371
    %v1373 = vand.u32 %v70, 4294901760
    %1374 = vmatpush1.msra.mxu0 %v1373
    %v1375 = vand.u32 %v75, 4294901760
    %1376 = vmatprep.subr.mxu0 %v1375
    %v1377 = vand.u32 %v74, 4294901760
    %1378 = vmatpush1.msra.mxu0 %v1377
    %v1379 = vand.u32 %v79, 4294901760
    %1380 = vmatprep.subr.mxu0 %v1379
    %v1381 = vand.u32 %v78, 4294901760
    %1382 = vmatpush1.msra.mxu0 %v1381
    %v1383 = vand.u32 %v83, 4294901760
    %1384 = vmatprep.subr.mxu0 %v1383
    %v1385 = vand.u32 %v82, 4294901760
    %1386 = vmatpush1.msra.mxu0 %v1385
    %v1387 = vand.u32 %v87, 4294901760
    %1388 = vmatprep.subr.mxu0 %v1387
    %v1389 = vand.u32 %v86, 4294901760
    %1390 = vmatpush1.msra.mxu0 %v1389
    %v1391 = vand.u32 %v91, 4294901760
    %1392 = vmatprep.subr.mxu0 %v1391
    %v1393 = vand.u32 %v90, 4294901760
    %1394 = vmatpush1.msra.mxu0 %v1393
    %1395 = vmatprep.subr.mxu0 0.0
    %1396 = vmatpush1.msra.mxu0 0.0
    %1397 = vmatprep.subr.mxu0 0.0
    %1398 = vmatpush1.msra.mxu0 0.0
    %1399 = vmatprep.subr.mxu0 0.0
    %1400 = vmatpush1.msra.mxu0 0.0
    %1401 = vmatprep.subr.mxu0 0.0
    %1402 = vmatpush1.msra.mxu0 0.0
    %1403 = vmatprep.subr.mxu0 0.0
    %1404 = vmatpush1.msra.mxu0 0.0
    %1405 = vmatprep.subr.mxu0 0.0
    %1406 = vmatpush1.msra.mxu0 0.0
    %1407 = vmatprep.subr.mxu0 0.0
    %1408 = vmatpush1.msra.mxu0 0.0
    %1409 = vmatprep.subr.mxu0 0.0
    %1410 = vmatpush1.msra.mxu0 0.0
    %1411 = vmatprep.subr.mxu0 0.0
    %1412 = vmatpush1.msra.mxu0 0.0
    %1413 = vmatprep.subr.mxu0 0.0
    %1414 = vmatpush1.msra.mxu0 0.0
    %1415 = vmatprep.subr.mxu0 0.0
    %1416 = vmatpush1.msra.mxu0 0.0
    %1417 = vmatprep.subr.mxu0 0.0
    %1418 = vmatpush1.msra.mxu0 0.0
    %1419 = vmatprep.subr.mxu0 0.0
    %1420 = vmatpush1.msra.mxu0 0.0
    %1421 = vmatprep.subr.mxu0 0.0
    %1422 = vmatpush1.msra.mxu0 0.0
    %1423 = vmatprep.subr.mxu0 0.0
    %1424 = vmatpush1.msra.mxu0 0.0
    %1425 = vmatprep.subr.mxu0 0.0
    %1426 = vmatpush1.msra.mxu0 0.0
    %1427 = vmatprep.subr.mxu0 0.0
    %1428 = vmatpush1.msra.mxu0 0.0
    %1429 = vmatprep.subr.mxu0 0.0
    %1430 = vmatpush1.msra.mxu0 0.0
    %1431 = vmatprep.subr.mxu0 0.0
    %1432 = vmatpush1.msra.mxu0 0.0
    %1433 = vmatprep.subr.mxu0 0.0
    %1434 = vmatpush1.msra.mxu0 0.0
    %1435 = vmatprep.subr.mxu0 0.0
    %1436 = vmatpush1.msra.mxu0 0.0
    %1437 = vmatprep.subr.mxu0 0.0
    %1438 = vmatpush1.msra.mxu0 0.0
    %1439 = vmatprep.subr.mxu0 0.0
    %1440 = vmatpush1.msra.mxu0 0.0
    %1441 = vmatprep.mubr.f32.mxu0 0.0
    %v1442 = vand.u32 %v101, 4294901760
    %1443 = vmatmul.mubr.f32.gmra.mrb[0].mxu0 %v1442
    %v1444 = vpop.f32.mrb[0].mxu0
    %v1445 = vadd.f32 %v1355, %v1444
    %v1446 = vpop.f32.mrb[0].mxu0
    %v1447 = vadd.f32 %v1357, %v1446
    %1448 = vdwg.mxu0
    %v1449 = vadd.f32 %v772, %v774
    %v1450 = vadd.f32 %v1449, %v1445
    %v1451 = vadd.f32 %v1450, %v1447
    %1452 = vadd.xlane.f32.xlu0 %v1451
    %v1453 = vpop.xlane.xlu0 %1452
    %v1454 = vrcp.pop 512.0
    %v1455 = vmul.f32 %v1453, %v1454
    %v1456 = vsub.f32 %v772, %v1455
    %v1457 = vsub.f32 %v774, %v1455
    %v1458 = vsub.f32 %v1445, %v1455
    %v1459 = vsub.f32 %v1447, %v1455
    %v1460 = vmul.f32 %v1456, %v1456
    %v1461 = vmul.f32 %v1457, %v1457
    %v1462 = vmul.f32 %v1458, %v1458
    %v1463 = vmul.f32 %v1459, %v1459
    %v1464 = vadd.f32 %v1460, %v1461
    %v1465 = vadd.f32 %v1464, %v1462
    %v1466 = vadd.f32 %v1465, %v1463
    %1467 = vadd.xlane.f32.xlu0 %v1466
    %v1468 = vpop.xlane.xlu0 %1467
    %v1469 = vmul.f32 %v1468, %v1454
    %v1470 = vld [vmem:[%s3] sm:$0xff]
    %v1471 = vadd.f32 %v1469, 1e-05
    %v1472 = vrsqrt.pop %v1471
    %v1473 = vmul.f32 %v1470, %v1472
    %1475 = vset.pattern.permute.xlu0 0
    %1476 = vperm.xlu0 %1475, %v1473
    %v1477 = vpop.permute.xlu0 %1476
    %v1479 = vmul.f32 %v1456, %v1477
    %v1480 = vmul.f32 %v1457, %v1477
    %v1481 = vmul.f32 %v1458, %v1477
    %v1482 = vmul.f32 %v1459, %v1477
    %v1483 = vld [vmem:[%s4] sm:$0xff]
    %1485 = vset.pattern.permute.xlu0 0
    %1486 = vperm.xlu0 %1485, %v1483
    %v1487 = vpop.permute.xlu0 %1486
    %v1489 = vadd.f32 %v1479, %v1487
    %v1490 = vadd.f32 %v1480, %v1487
    %v1491 = vadd.f32 %v1481, %v1487
    %v1492 = vadd.f32 %v1482, %v1487
    %v1493 = vld [vmem:[%s5] sm:$0xff]
    %v1494 = vld [vmem:[%s5 + $0x8] sm:$0xff]
    %v1495 = vld [vmem:[%s6] sm:$0xff]
    %v1496 = vld [vmem:[%s6 + $0x8] sm:$0xff]
    %1498 = vset.pattern.permute.xlu0 0
    %1499 = vperm.xlu0 %1498, %v1495
    %v1500 = vpop.permute.xlu0 %1499
    %1503 = vset.pattern.permute.xlu0 0
    %1504 = vperm.xlu0 %1503, %v1496
    %v1505 = vpop.permute.xlu0 %1504
    %vm1507 = vcmask 64512
    %v1509 = vsel %vm1507, %v1493, 0
    %v1512 = vsel %vm1507, %v1494, 0
    %v1514 = vand.u32 %v1490, 4294901760
    %1515 = vmatprep.subr.mxu0 %v1514
    %v1516 = vand.u32 %v1489, 4294901760
    %1517 = vmatpush1.msra.mxu0 %v1516
    %1518 = vmatprep.subr.mxu0 0.0
    %1519 = vmatpush1.msra.mxu0 0.0
    %1520 = vmatprep.subr.mxu0 0.0
    %1521 = vmatpush1.msra.mxu0 0.0
    %1522 = vmatprep.subr.mxu0 0.0
    %1523 = vmatpush1.msra.mxu0 0.0
    %1524 = vmatprep.subr.mxu0 0.0
    %1525 = vmatpush1.msra.mxu0 0.0
    %1526 = vmatprep.subr.mxu0 0.0
    %1527 = vmatpush1.msra.mxu0 0.0
    %1528 = vmatprep.subr.mxu0 0.0
    %1529 = vmatpush1.msra.mxu0 0.0
    %1530 = vmatprep.subr.mxu0 0.0
    %1531 = vmatpush1.msra.mxu0 0.0
    %1532 = vmatprep.subr.mxu0 0.0
    %1533 = vmatpush1.msra.mxu0 0.0
    %1534 = vmatprep.subr.mxu0 0.0
    %1535 = vmatpush1.msra.mxu0 0.0
    %1536 = vmatprep.subr.mxu0 0.0
    %1537 = vmatpush1.msra.mxu0 0.0
    %1538 = vmatprep.subr.mxu0 0.0
    %1539 = vmatpush1.msra.mxu0 0.0
    %1540 = vmatprep.subr.mxu0 0.0
    %1541 = vmatpush1.msra.mxu0 0.0
    %1542 = vmatprep.subr.mxu0 0.0
    %1543 = vmatpush1.msra.mxu0 0.0
    %1544 = vmatprep.subr.mxu0 0.0
    %1545 = vmatpush1.msra.mxu0 0.0
    %1546 = vmatprep.subr.mxu0 0.0
    %1547 = vmatpush1.msra.mxu0 0.0
    %1548 = vmatprep.subr.mxu0 0.0
    %1549 = vmatpush1.msra.mxu0 0.0
    %1550 = vmatprep.subr.mxu0 0.0
    %1551 = vmatpush1.msra.mxu0 0.0
    %1552 = vmatprep.subr.mxu0 0.0
    %1553 = vmatpush1.msra.mxu0 0.0
    %1554 = vmatprep.subr.mxu0 0.0
    %1555 = vmatpush1.msra.mxu0 0.0
    %1556 = vmatprep.subr.mxu0 0.0
    %1557 = vmatpush1.msra.mxu0 0.0
    %1558 = vmatprep.subr.mxu0 0.0
    %1559 = vmatpush1.msra.mxu0 0.0
    %1560 = vmatprep.subr.mxu0 0.0
    %1561 = vmatpush1.msra.mxu0 0.0
    %1562 = vmatprep.subr.mxu0 0.0
    %1563 = vmatpush1.msra.mxu0 0.0
    %1564 = vmatprep.subr.mxu0 0.0
    %1565 = vmatpush1.msra.mxu0 0.0
    %1566 = vmatprep.subr.mxu0 0.0
    %1567 = vmatpush1.msra.mxu0 0.0
    %1568 = vmatprep.subr.mxu0 0.0
    %1569 = vmatpush1.msra.mxu0 0.0
    %1570 = vmatprep.subr.mxu0 0.0
    %1571 = vmatpush1.msra.mxu0 0.0
    %1572 = vmatprep.subr.mxu0 0.0
    %1573 = vmatpush1.msra.mxu0 0.0
    %1574 = vmatprep.subr.mxu0 0.0
    %1575 = vmatpush1.msra.mxu0 0.0
    %1576 = vmatprep.subr.mxu0 0.0
    %1577 = vmatpush1.msra.mxu0 0.0
    %1578 = vmatprep.subr.mxu0 0.0
    %1579 = vmatpush1.msra.mxu0 0.0
    %1580 = vmatprep.mubr.f32.mxu0 0.0
    %v1581 = vand.u32 %v1509, 4294901760
    %v1582 = vsub.f32 %v1509, %v1581
    %v1583 = vand.u32 %v1582, 4294901760
    %v1584 = vsub.f32 %v1582, %v1583
    %v1585 = vand.u32 %v1584, 4294901760
    %1586 = vmatmul.mubr.f32.gmra.mrb[0].mxu0 %v1585
    %v1587 = vpop.f32.mrb[0].mxu0
    %v1588 = vadd.f32 %v1500, %v1587
    %v1589 = vpop.f32.mrb[0].mxu0
    %v1590 = vadd.f32 %v1500, %v1589
    %1591 = vmatprep.mubr.f32.mxu0 0.0
    %v1592 = vand.u32 %v1512, 4294901760
    %v1593 = vsub.f32 %v1512, %v1592
    %v1594 = vand.u32 %v1593, 4294901760
    %v1595 = vsub.f32 %v1593, %v1594
    %v1596 = vand.u32 %v1595, 4294901760
    %1597 = vmatmul.mubr.f32.gmra.mrb[0].mxu0 %v1596
    %v1598 = vpop.f32.mrb[0].mxu0
    %v1599 = vadd.f32 %v1505, %v1598
    %v1600 = vpop.f32.mrb[0].mxu0
    %v1601 = vadd.f32 %v1505, %v1600
    %1602 = vdwg.mxu0
    %v1603 = vand.u32 %v1490, 4294901760
    %v1604 = vsub.f32 %v1490, %v1603
    %v1605 = vand.u32 %v1604, 4294901760
    %v1606 = vsub.f32 %v1604, %v1605
    %v1607 = vand.u32 %v1606, 4294901760
    %1608 = vmatprep.subr.mxu0 %v1607
    %v1609 = vand.u32 %v1489, 4294901760
    %v1610 = vsub.f32 %v1489, %v1609
    %v1611 = vand.u32 %v1610, 4294901760
    %v1612 = vsub.f32 %v1610, %v1611
    %v1613 = vand.u32 %v1612, 4294901760
    %1614 = vmatpush1.msra.mxu0 %v1613
    %1615 = vmatprep.subr.mxu0 0.0
    %1616 = vmatpush1.msra.mxu0 0.0
    %1617 = vmatprep.subr.mxu0 0.0
    %1618 = vmatpush1.msra.mxu0 0.0
    %1619 = vmatprep.subr.mxu0 0.0
    %1620 = vmatpush1.msra.mxu0 0.0
    %1621 = vmatprep.subr.mxu0 0.0
    %1622 = vmatpush1.msra.mxu0 0.0
    %1623 = vmatprep.subr.mxu0 0.0
    %1624 = vmatpush1.msra.mxu0 0.0
    %1625 = vmatprep.subr.mxu0 0.0
    %1626 = vmatpush1.msra.mxu0 0.0
    %1627 = vmatprep.subr.mxu0 0.0
    %1628 = vmatpush1.msra.mxu0 0.0
    %1629 = vmatprep.subr.mxu0 0.0
    %1630 = vmatpush1.msra.mxu0 0.0
    %1631 = vmatprep.subr.mxu0 0.0
    %1632 = vmatpush1.msra.mxu0 0.0
    %1633 = vmatprep.subr.mxu0 0.0
    %1634 = vmatpush1.msra.mxu0 0.0
    %1635 = vmatprep.subr.mxu0 0.0
    %1636 = vmatpush1.msra.mxu0 0.0
    %1637 = vmatprep.subr.mxu0 0.0
    %1638 = vmatpush1.msra.mxu0 0.0
    %1639 = vmatprep.subr.mxu0 0.0
    %1640 = vmatpush1.msra.mxu0 0.0
    %1641 = vmatprep.subr.mxu0 0.0
    %1642 = vmatpush1.msra.mxu0 0.0
    %1643 = vmatprep.subr.mxu0 0.0
    %1644 = vmatpush1.msra.mxu0 0.0
    %1645 = vmatprep.subr.mxu0 0.0
    %1646 = vmatpush1.msra.mxu0 0.0
    %1647 = vmatprep.subr.mxu0 0.0
    %1648 = vmatpush1.msra.mxu0 0.0
    %1649 = vmatprep.subr.mxu0 0.0
    %1650 = vmatpush1.msra.mxu0 0.0
    %1651 = vmatprep.subr.mxu0 0.0
    %1652 = vmatpush1.msra.mxu0 0.0
    %1653 = vmatprep.subr.mxu0 0.0
    %1654 = vmatpush1.msra.mxu0 0.0
    %1655 = vmatprep.subr.mxu0 0.0
    %1656 = vmatpush1.msra.mxu0 0.0
    %1657 = vmatprep.subr.mxu0 0.0
    %1658 = vmatpush1.msra.mxu0 0.0
    %1659 = vmatprep.subr.mxu0 0.0
    %1660 = vmatpush1.msra.mxu0 0.0
    %1661 = vmatprep.subr.mxu0 0.0
    %1662 = vmatpush1.msra.mxu0 0.0
    %1663 = vmatprep.subr.mxu0 0.0
    %1664 = vmatpush1.msra.mxu0 0.0
    %1665 = vmatprep.subr.mxu0 0.0
    %1666 = vmatpush1.msra.mxu0 0.0
    %1667 = vmatprep.subr.mxu0 0.0
    %1668 = vmatpush1.msra.mxu0 0.0
    %1669 = vmatprep.subr.mxu0 0.0
    %1670 = vmatpush1.msra.mxu0 0.0
    %1671 = vmatprep.subr.mxu0 0.0
    %1672 = vmatpush1.msra.mxu0 0.0
    %1673 = vmatprep.subr.mxu0 0.0
    %1674 = vmatpush1.msra.mxu0 0.0
    %1675 = vmatprep.subr.mxu0 0.0
    %1676 = vmatpush1.msra.mxu0 0.0
    %1677 = vmatprep.mubr.f32.mxu0 0.0
    %v1678 = vand.u32 %v1509, 4294901760
    %1679 = vmatmul.mubr.f32.gmra.mrb[0].mxu0 %v1678
    %v1680 = vpop.f32.mrb[0].mxu0
    %v1681 = vadd.f32 %v1588, %v1680
    %v1682 = vpop.f32.mrb[0].mxu0
    %v1683 = vadd.f32 %v1590, %v1682
    %1684 = vmatprep.mubr.f32.mxu0 0.0
    %v1685 = vand.u32 %v1512, 4294901760
    %1686 = vmatmul.mubr.f32.gmra.mrb[0].mxu0 %v1685
    %v1687 = vpop.f32.mrb[0].mxu0
    %v1688 = vadd.f32 %v1599, %v1687
    %v1689 = vpop.f32.mrb[0].mxu0
    %v1690 = vadd.f32 %v1601, %v1689
    %1691 = vdwg.mxu0
    %v1692 = vand.u32 %v1490, 4294901760
    %v1693 = vsub.f32 %v1490, %v1692
    %1694 = vmatprep.subr.mxu0 %v1693
    %v1695 = vand.u32 %v1489, 4294901760
    %v1696 = vsub.f32 %v1489, %v1695
    %1697 = vmatpush1.msra.mxu0 %v1696
    %1698 = vmatprep.subr.mxu0 0.0
    %1699 = vmatpush1.msra.mxu0 0.0
    %1700 = vmatprep.subr.mxu0 0.0
    %1701 = vmatpush1.msra.mxu0 0.0
    %1702 = vmatprep.subr.mxu0 0.0
    %1703 = vmatpush1.msra.mxu0 0.0
    %1704 = vmatprep.subr.mxu0 0.0
    %1705 = vmatpush1.msra.mxu0 0.0
    %1706 = vmatprep.subr.mxu0 0.0
    %1707 = vmatpush1.msra.mxu0 0.0
    %1708 = vmatprep.subr.mxu0 0.0
    %1709 = vmatpush1.msra.mxu0 0.0
    %1710 = vmatprep.subr.mxu0 0.0
    %1711 = vmatpush1.msra.mxu0 0.0
    %1712 = vmatprep.subr.mxu0 0.0
    %1713 = vmatpush1.msra.mxu0 0.0
    %1714 = vmatprep.subr.mxu0 0.0
    %1715 = vmatpush1.msra.mxu0 0.0
    %1716 = vmatprep.subr.mxu0 0.0
    %1717 = vmatpush1.msra.mxu0 0.0
    %1718 = vmatprep.subr.mxu0 0.0
    %1719 = vmatpush1.msra.mxu0 0.0
    %1720 = vmatprep.subr.mxu0 0.0
    %1721 = vmatpush1.msra.mxu0 0.0
    %1722 = vmatprep.subr.mxu0 0.0
    %1723 = vmatpush1.msra.mxu0 0.0
    %1724 = vmatprep.subr.mxu0 0.0
    %1725 = vmatpush1.msra.mxu0 0.0
    %1726 = vmatprep.subr.mxu0 0.0
    %1727 = vmatpush1.msra.mxu0 0.0
    %1728 = vmatprep.subr.mxu0 0.0
    %1729 = vmatpush1.msra.mxu0 0.0
    %1730 = vmatprep.subr.mxu0 0.0
    %1731 = vmatpush1.msra.mxu0 0.0
    %1732 = vmatprep.subr.mxu0 0.0
    %1733 = vmatpush1.msra.mxu0 0.0
    %1734 = vmatprep.subr.mxu0 0.0
    %1735 = vmatpush1.msra.mxu0 0.0
    %1736 = vmatprep.subr.mxu0 0.0
    %1737 = vmatpush1.msra.mxu0 0.0
    %1738 = vmatprep.subr.mxu0 0.0
    %1739 = vmatpush1.msra.mxu0 0.0
    %1740 = vmatprep.subr.mxu0 0.0
    %1741 = vmatpush1.msra.mxu0 0.0
    %1742 = vmatprep.subr.mxu0 0.0
    %1743 = vmatpush1.msra.mxu0 0.0
    %1744 = vmatprep.subr.mxu0 0.0
    %1745 = vmatpush1.msra.mxu0 0.0
    %1746 = vmatprep.subr.mxu0 0.0
    %1747 = vmatpush1.msra.mxu0 0.0
    %1748 = vmatprep.subr.mxu0 0.0
    %1749 = vmatpush1.msra.mxu0 0.0
    %1750 = vmatprep.subr.mxu0 0.0
    %1751 = vmatpush1.msra.mxu0 0.0
    %1752 = vmatprep.subr.mxu0 0.0
    %1753 = vmatpush1.msra.mxu0 0.0
    %1754 = vmatprep.subr.mxu0 0.0
    %1755 = vmatpush1.msra.mxu0 0.0
    %1756 = vmatprep.subr.mxu0 0.0
    %1757 = vmatpush1.msra.mxu0 0.0
    %1758 = vmatprep.subr.mxu0 0.0
    %1759 = vmatpush1.msra.mxu0 0.0
    %1760 = vmatprep.mubr.f32.mxu0 0.0
    %v1761 = vand.u32 %v1509, 4294901760
    %v1762 = vsub.f32 %v1509, %v1761
    %1763 = vmatmul.mubr.f32.gmra.mrb[0].mxu0 %v1762
    %v1764 = vpop.f32.mrb[0].mxu0
    %v1765 = vadd.f32 %v1681, %v1764
    %v1766 = vpop.f32.mrb[0].mxu0
    %v1767 = vadd.f32 %v1683, %v1766
    %1768 = vmatprep.mubr.f32.mxu0 0.0
    %v1769 = vand.u32 %v1512, 4294901760
    %v1770 = vsub.f32 %v1512, %v1769
    %1771 = vmatmul.mubr.f32.gmra.mrb[0].mxu0 %v1770
    %v1772 = vpop.f32.mrb[0].mxu0
    %v1773 = vadd.f32 %v1688, %v1772
    %v1774 = vpop.f32.mrb[0].mxu0
    %v1775 = vadd.f32 %v1690, %v1774
    %1776 = vdwg.mxu0
    %v1777 = vand.u32 %v1490, 4294901760
    %1778 = vmatprep.subr.mxu0 %v1777
    %v1779 = vand.u32 %v1489, 4294901760
    %1780 = vmatpush1.msra.mxu0 %v1779
    %1781 = vmatprep.subr.mxu0 0.0
    %1782 = vmatpush1.msra.mxu0 0.0
    %1783 = vmatprep.subr.mxu0 0.0
    %1784 = vmatpush1.msra.mxu0 0.0
    %1785 = vmatprep.subr.mxu0 0.0
    %1786 = vmatpush1.msra.mxu0 0.0
    %1787 = vmatprep.subr.mxu0 0.0
    %1788 = vmatpush1.msra.mxu0 0.0
    %1789 = vmatprep.subr.mxu0 0.0
    %1790 = vmatpush1.msra.mxu0 0.0
    %1791 = vmatprep.subr.mxu0 0.0
    %1792 = vmatpush1.msra.mxu0 0.0
    %1793 = vmatprep.subr.mxu0 0.0
    %1794 = vmatpush1.msra.mxu0 0.0
    %1795 = vmatprep.subr.mxu0 0.0
    %1796 = vmatpush1.msra.mxu0 0.0
    %1797 = vmatprep.subr.mxu0 0.0
    %1798 = vmatpush1.msra.mxu0 0.0
    %1799 = vmatprep.subr.mxu0 0.0
    %1800 = vmatpush1.msra.mxu0 0.0
    %1801 = vmatprep.subr.mxu0 0.0
    %1802 = vmatpush1.msra.mxu0 0.0
    %1803 = vmatprep.subr.mxu0 0.0
    %1804 = vmatpush1.msra.mxu0 0.0
    %1805 = vmatprep.subr.mxu0 0.0
    %1806 = vmatpush1.msra.mxu0 0.0
    %1807 = vmatprep.subr.mxu0 0.0
    %1808 = vmatpush1.msra.mxu0 0.0
    %1809 = vmatprep.subr.mxu0 0.0
    %1810 = vmatpush1.msra.mxu0 0.0
    %1811 = vmatprep.subr.mxu0 0.0
    %1812 = vmatpush1.msra.mxu0 0.0
    %1813 = vmatprep.subr.mxu0 0.0
    %1814 = vmatpush1.msra.mxu0 0.0
    %1815 = vmatprep.subr.mxu0 0.0
    %1816 = vmatpush1.msra.mxu0 0.0
    %1817 = vmatprep.subr.mxu0 0.0
    %1818 = vmatpush1.msra.mxu0 0.0
    %1819 = vmatprep.subr.mxu0 0.0
    %1820 = vmatpush1.msra.mxu0 0.0
    %1821 = vmatprep.subr.mxu0 0.0
    %1822 = vmatpush1.msra.mxu0 0.0
    %1823 = vmatprep.subr.mxu0 0.0
    %1824 = vmatpush1.msra.mxu0 0.0
    %1825 = vmatprep.subr.mxu0 0.0
    %1826 = vmatpush1.msra.mxu0 0.0
    %1827 = vmatprep.subr.mxu0 0.0
    %1828 = vmatpush1.msra.mxu0 0.0
    %1829 = vmatprep.subr.mxu0 0.0
    %1830 = vmatpush1.msra.mxu0 0.0
    %1831 = vmatprep.subr.mxu0 0.0
    %1832 = vmatpush1.msra.mxu0 0.0
    %1833 = vmatprep.subr.mxu0 0.0
    %1834 = vmatpush1.msra.mxu0 0.0
    %1835 = vmatprep.subr.mxu0 0.0
    %1836 = vmatpush1.msra.mxu0 0.0
    %1837 = vmatprep.subr.mxu0 0.0
    %1838 = vmatpush1.msra.mxu0 0.0
    %1839 = vmatprep.subr.mxu0 0.0
    %1840 = vmatpush1.msra.mxu0 0.0
    %1841 = vmatprep.subr.mxu0 0.0
    %1842 = vmatpush1.msra.mxu0 0.0
    %1843 = vmatprep.mubr.f32.mxu0 0.0
    %v1844 = vand.u32 %v1509, 4294901760
    %v1845 = vsub.f32 %v1509, %v1844
    %v1846 = vand.u32 %v1845, 4294901760
    %1847 = vmatmul.mubr.f32.gmra.mrb[0].mxu0 %v1846
    %v1848 = vpop.f32.mrb[0].mxu0
    %v1849 = vadd.f32 %v1765, %v1848
    %v1850 = vpop.f32.mrb[0].mxu0
    %v1851 = vadd.f32 %v1767, %v1850
    %1852 = vmatprep.mubr.f32.mxu0 0.0
    %v1853 = vand.u32 %v1512, 4294901760
    %v1854 = vsub.f32 %v1512, %v1853
    %v1855 = vand.u32 %v1854, 4294901760
    %1856 = vmatmul.mubr.f32.gmra.mrb[0].mxu0 %v1855
    %v1857 = vpop.f32.mrb[0].mxu0
    %v1858 = vadd.f32 %v1773, %v1857
    %v1859 = vpop.f32.mrb[0].mxu0
    %v1860 = vadd.f32 %v1775, %v1859
    %1861 = vdwg.mxu0
    %v1862 = vand.u32 %v1490, 4294901760
    %v1863 = vsub.f32 %v1490, %v1862
    %v1864 = vand.u32 %v1863, 4294901760
    %1865 = vmatprep.subr.mxu0 %v1864
    %v1866 = vand.u32 %v1489, 4294901760
    %v1867 = vsub.f32 %v1489, %v1866
    %v1868 = vand.u32 %v1867, 4294901760
    %1869 = vmatpush1.msra.mxu0 %v1868
    %1870 = vmatprep.subr.mxu0 0.0
    %1871 = vmatpush1.msra.mxu0 0.0
    %1872 = vmatprep.subr.mxu0 0.0
    %1873 = vmatpush1.msra.mxu0 0.0
    %1874 = vmatprep.subr.mxu0 0.0
    %1875 = vmatpush1.msra.mxu0 0.0
    %1876 = vmatprep.subr.mxu0 0.0
    %1877 = vmatpush1.msra.mxu0 0.0
    %1878 = vmatprep.subr.mxu0 0.0
    %1879 = vmatpush1.msra.mxu0 0.0
    %1880 = vmatprep.subr.mxu0 0.0
    %1881 = vmatpush1.msra.mxu0 0.0
    %1882 = vmatprep.subr.mxu0 0.0
    %1883 = vmatpush1.msra.mxu0 0.0
    %1884 = vmatprep.subr.mxu0 0.0
    %1885 = vmatpush1.msra.mxu0 0.0
    %1886 = vmatprep.subr.mxu0 0.0
    %1887 = vmatpush1.msra.mxu0 0.0
    %1888 = vmatprep.subr.mxu0 0.0
    %1889 = vmatpush1.msra.mxu0 0.0
    %1890 = vmatprep.subr.mxu0 0.0
    %1891 = vmatpush1.msra.mxu0 0.0
    %1892 = vmatprep.subr.mxu0 0.0
    %1893 = vmatpush1.msra.mxu0 0.0
    %1894 = vmatprep.subr.mxu0 0.0
    %1895 = vmatpush1.msra.mxu0 0.0
    %1896 = vmatprep.subr.mxu0 0.0
    %1897 = vmatpush1.msra.mxu0 0.0
    %1898 = vmatprep.subr.mxu0 0.0
    %1899 = vmatpush1.msra.mxu0 0.0
    %1900 = vmatprep.subr.mxu0 0.0
    %1901 = vmatpush1.msra.mxu0 0.0
    %1902 = vmatprep.subr.mxu0 0.0
    %1903 = vmatpush1.msra.mxu0 0.0
    %1904 = vmatprep.subr.mxu0 0.0
    %1905 = vmatpush1.msra.mxu0 0.0
    %1906 = vmatprep.subr.mxu0 0.0
    %1907 = vmatpush1.msra.mxu0 0.0
    %1908 = vmatprep.subr.mxu0 0.0
    %1909 = vmatpush1.msra.mxu0 0.0
    %1910 = vmatprep.subr.mxu0 0.0
    %1911 = vmatpush1.msra.mxu0 0.0
    %1912 = vmatprep.subr.mxu0 0.0
    %1913 = vmatpush1.msra.mxu0 0.0
    %1914 = vmatprep.subr.mxu0 0.0
    %1915 = vmatpush1.msra.mxu0 0.0
    %1916 = vmatprep.subr.mxu0 0.0
    %1917 = vmatpush1.msra.mxu0 0.0
    %1918 = vmatprep.subr.mxu0 0.0
    %1919 = vmatpush1.msra.mxu0 0.0
    %1920 = vmatprep.subr.mxu0 0.0
    %1921 = vmatpush1.msra.mxu0 0.0
    %1922 = vmatprep.subr.mxu0 0.0
    %1923 = vmatpush1.msra.mxu0 0.0
    %1924 = vmatprep.subr.mxu0 0.0
    %1925 = vmatpush1.msra.mxu0 0.0
    %1926 = vmatprep.subr.mxu0 0.0
    %1927 = vmatpush1.msra.mxu0 0.0
    %1928 = vmatprep.subr.mxu0 0.0
    %1929 = vmatpush1.msra.mxu0 0.0
    %1930 = vmatprep.subr.mxu0 0.0
    %1931 = vmatpush1.msra.mxu0 0.0
    %1932 = vmatprep.mubr.f32.mxu0 0.0
    %v1933 = vand.u32 %v1509, 4294901760
    %1934 = vmatmul.mubr.f32.gmra.mrb[0].mxu0 %v1933
    %v1935 = vpop.f32.mrb[0].mxu0
    %v1936 = vadd.f32 %v1849, %v1935
    %v1937 = vpop.f32.mrb[0].mxu0
    %v1938 = vadd.f32 %v1851, %v1937
    %1939 = vmatprep.mubr.f32.mxu0 0.0
    %v1940 = vand.u32 %v1512, 4294901760
    %1941 = vmatmul.mubr.f32.gmra.mrb[0].mxu0 %v1940
    %v1942 = vpop.f32.mrb[0].mxu0
    %v1943 = vadd.f32 %v1858, %v1942
    %v1944 = vpop.f32.mrb[0].mxu0
    %v1945 = vadd.f32 %v1860, %v1944
    %1946 = vdwg.mxu0
    %v1947 = vand.u32 %v1490, 4294901760
    %1948 = vmatprep.subr.mxu0 %v1947
    %v1949 = vand.u32 %v1489, 4294901760
    %1950 = vmatpush1.msra.mxu0 %v1949
    %1951 = vmatprep.subr.mxu0 0.0
    %1952 = vmatpush1.msra.mxu0 0.0
    %1953 = vmatprep.subr.mxu0 0.0
    %1954 = vmatpush1.msra.mxu0 0.0
    %1955 = vmatprep.subr.mxu0 0.0
    %1956 = vmatpush1.msra.mxu0 0.0
    %1957 = vmatprep.subr.mxu0 0.0
    %1958 = vmatpush1.msra.mxu0 0.0
    %1959 = vmatprep.subr.mxu0 0.0
    %1960 = vmatpush1.msra.mxu0 0.0
    %1961 = vmatprep.subr.mxu0 0.0
    %1962 = vmatpush1.msra.mxu0 0.0
    %1963 = vmatprep.subr.mxu0 0.0
    %1964 = vmatpush1.msra.mxu0 0.0
    %1965 = vmatprep.subr.mxu0 0.0
    %1966 = vmatpush1.msra.mxu0 0.0
    %1967 = vmatprep.subr.mxu0 0.0
    %1968 = vmatpush1.msra.mxu0 0.0
    %1969 = vmatprep.subr.mxu0 0.0
    %1970 = vmatpush1.msra.mxu0 0.0
    %1971 = vmatprep.subr.mxu0 0.0
    %1972 = vmatpush1.msra.mxu0 0.0
    %1973 = vmatprep.subr.mxu0 0.0
    %1974 = vmatpush1.msra.mxu0 0.0
    %1975 = vmatprep.subr.mxu0 0.0
    %1976 = vmatpush1.msra.mxu0 0.0
    %1977 = vmatprep.subr.mxu0 0.0
    %1978 = vmatpush1.msra.mxu0 0.0
    %1979 = vmatprep.subr.mxu0 0.0
    %1980 = vmatpush1.msra.mxu0 0.0
    %1981 = vmatprep.subr.mxu0 0.0
    %1982 = vmatpush1.msra.mxu0 0.0
    %1983 = vmatprep.subr.mxu0 0.0
    %1984 = vmatpush1.msra.mxu0 0.0
    %1985 = vmatprep.subr.mxu0 0.0
    %1986 = vmatpush1.msra.mxu0 0.0
    %1987 = vmatprep.subr.mxu0 0.0
    %1988 = vmatpush1.msra.mxu0 0.0
    %1989 = vmatprep.subr.mxu0 0.0
    %1990 = vmatpush1.msra.mxu0 0.0
    %1991 = vmatprep.subr.mxu0 0.0
    %1992 = vmatpush1.msra.mxu0 0.0
    %1993 = vmatprep.subr.mxu0 0.0
    %1994 = vmatpush1.msra.mxu0 0.0
    %1995 = vmatprep.subr.mxu0 0.0
    %1996 = vmatpush1.msra.mxu0 0.0
    %1997 = vmatprep.subr.mxu0 0.0
    %1998 = vmatpush1.msra.mxu0 0.0
    %1999 = vmatprep.subr.mxu0 0.0
    %2000 = vmatpush1.msra.mxu0 0.0
    %2001 = vmatprep.subr.mxu0 0.0
    %2002 = vmatpush1.msra.mxu0 0.0
    %2003 = vmatprep.subr.mxu0 0.0
    %2004 = vmatpush1.msra.mxu0 0.0
    %2005 = vmatprep.subr.mxu0 0.0
    %2006 = vmatpush1.msra.mxu0 0.0
    %2007 = vmatprep.subr.mxu0 0.0
    %2008 = vmatpush1.msra.mxu0 0.0
    %2009 = vmatprep.subr.mxu0 0.0
    %2010 = vmatpush1.msra.mxu0 0.0
    %2011 = vmatprep.subr.mxu0 0.0
    %2012 = vmatpush1.msra.mxu0 0.0
    %2013 = vmatprep.mubr.f32.mxu0 0.0
    %v2014 = vand.u32 %v1509, 4294901760
    %2015 = vmatmul.mubr.f32.gmra.mrb[0].mxu0 %v2014
    %v2016 = vpop.f32.mrb[0].mxu0
    %v2017 = vadd.f32 %v1936, %v2016
    %v2018 = vpop.f32.mrb[0].mxu0
    %v2019 = vadd.f32 %v1938, %v2018
    %2020 = vmatprep.mubr.f32.mxu0 0.0
    %v2021 = vand.u32 %v1512, 4294901760
    %2022 = vmatmul.mubr.f32.gmra.mrb[0].mxu0 %v2021
    %v2023 = vpop.f32.mrb[0].mxu0
    %v2024 = vadd.f32 %v1943, %v2023
    %v2025 = vpop.f32.mrb[0].mxu0
    %v2026 = vadd.f32 %v1945, %v2025
    %2027 = vdwg.mxu0
    %v2028 = vand.u32 %v1492, 4294901760
    %2029 = vmatprep.subr.mxu0 %v2028
    %v2030 = vand.u32 %v1491, 4294901760
    %2031 = vmatpush1.msra.mxu0 %v2030
    %2032 = vmatprep.subr.mxu0 0.0
    %2033 = vmatpush1.msra.mxu0 0.0
    %2034 = vmatprep.subr.mxu0 0.0
    %2035 = vmatpush1.msra.mxu0 0.0
    %2036 = vmatprep.subr.mxu0 0.0
    %2037 = vmatpush1.msra.mxu0 0.0
    %2038 = vmatprep.subr.mxu0 0.0
    %2039 = vmatpush1.msra.mxu0 0.0
    %2040 = vmatprep.subr.mxu0 0.0
    %2041 = vmatpush1.msra.mxu0 0.0
    %2042 = vmatprep.subr.mxu0 0.0
    %2043 = vmatpush1.msra.mxu0 0.0
    %2044 = vmatprep.subr.mxu0 0.0
    %2045 = vmatpush1.msra.mxu0 0.0
    %2046 = vmatprep.subr.mxu0 0.0
    %2047 = vmatpush1.msra.mxu0 0.0
    %2048 = vmatprep.subr.mxu0 0.0
    %2049 = vmatpush1.msra.mxu0 0.0
    %2050 = vmatprep.subr.mxu0 0.0
    %2051 = vmatpush1.msra.mxu0 0.0
    %2052 = vmatprep.subr.mxu0 0.0
    %2053 = vmatpush1.msra.mxu0 0.0
    %2054 = vmatprep.subr.mxu0 0.0
    %2055 = vmatpush1.msra.mxu0 0.0
    %2056 = vmatprep.subr.mxu0 0.0
    %2057 = vmatpush1.msra.mxu0 0.0
    %2058 = vmatprep.subr.mxu0 0.0
    %2059 = vmatpush1.msra.mxu0 0.0
    %2060 = vmatprep.subr.mxu0 0.0
    %2061 = vmatpush1.msra.mxu0 0.0
    %2062 = vmatprep.subr.mxu0 0.0
    %2063 = vmatpush1.msra.mxu0 0.0
    %2064 = vmatprep.subr.mxu0 0.0
    %2065 = vmatpush1.msra.mxu0 0.0
    %2066 = vmatprep.subr.mxu0 0.0
    %2067 = vmatpush1.msra.mxu0 0.0
    %2068 = vmatprep.subr.mxu0 0.0
    %2069 = vmatpush1.msra.mxu0 0.0
    %2070 = vmatprep.subr.mxu0 0.0
    %2071 = vmatpush1.msra.mxu0 0.0
    %2072 = vmatprep.subr.mxu0 0.0
    %2073 = vmatpush1.msra.mxu0 0.0
    %2074 = vmatprep.subr.mxu0 0.0
    %2075 = vmatpush1.msra.mxu0 0.0
    %2076 = vmatprep.subr.mxu0 0.0
    %2077 = vmatpush1.msra.mxu0 0.0
    %2078 = vmatprep.subr.mxu0 0.0
    %2079 = vmatpush1.msra.mxu0 0.0
    %2080 = vmatprep.subr.mxu0 0.0
    %2081 = vmatpush1.msra.mxu0 0.0
    %2082 = vmatprep.subr.mxu0 0.0
    %2083 = vmatpush1.msra.mxu0 0.0
    %2084 = vmatprep.subr.mxu0 0.0
    %2085 = vmatpush1.msra.mxu0 0.0
    %2086 = vmatprep.subr.mxu0 0.0
    %2087 = vmatpush1.msra.mxu0 0.0
    %2088 = vmatprep.subr.mxu0 0.0
    %2089 = vmatpush1.msra.mxu0 0.0
    %2090 = vmatprep.subr.mxu0 0.0
    %2091 = vmatpush1.msra.mxu0 0.0
    %2092 = vmatprep.subr.mxu0 0.0
    %2093 = vmatpush1.msra.mxu0 0.0
    %2094 = vmatprep.mubr.f32.mxu0 0.0
    %v2095 = vand.u32 %v1509, 4294901760
    %v2096 = vsub.f32 %v1509, %v2095
    %v2097 = vand.u32 %v2096, 4294901760
    %v2098 = vsub.f32 %v2096, %v2097
    %v2099 = vand.u32 %v2098, 4294901760
    %2100 = vmatmul.mubr.f32.gmra.mrb[0].mxu0 %v2099
    %v2101 = vpop.f32.mrb[0].mxu0
    %v2102 = vadd.f32 %v1500, %v2101
    %v2103 = vpop.f32.mrb[0].mxu0
    %v2104 = vadd.f32 %v1500, %v2103
    %2105 = vmatprep.mubr.f32.mxu0 0.0
    %v2106 = vand.u32 %v1512, 4294901760
    %v2107 = vsub.f32 %v1512, %v2106
    %v2108 = vand.u32 %v2107, 4294901760
    %v2109 = vsub.f32 %v2107, %v2108
    %v2110 = vand.u32 %v2109, 4294901760
    %2111 = vmatmul.mubr.f32.gmra.mrb[0].mxu0 %v2110
    %v2112 = vpop.f32.mrb[0].mxu0
    %v2113 = vadd.f32 %v1505, %v2112
    %v2114 = vpop.f32.mrb[0].mxu0
    %v2115 = vadd.f32 %v1505, %v2114
    %2116 = vdwg.mxu0
    %v2117 = vand.u32 %v1492, 4294901760
    %v2118 = vsub.f32 %v1492, %v2117
    %v2119 = vand.u32 %v2118, 4294901760
    %v2120 = vsub.f32 %v2118, %v2119
    %v2121 = vand.u32 %v2120, 4294901760
    %2122 = vmatprep.subr.mxu0 %v2121
    %v2123 = vand.u32 %v1491, 4294901760
    %v2124 = vsub.f32 %v1491, %v2123
    %v2125 = vand.u32 %v2124, 4294901760
    %v2126 = vsub.f32 %v2124, %v2125
    %v2127 = vand.u32 %v2126, 4294901760
    %2128 = vmatpush1.msra.mxu0 %v2127
    %2129 = vmatprep.subr.mxu0 0.0
    %2130 = vmatpush1.msra.mxu0 0.0
    %2131 = vmatprep.subr.mxu0 0.0
    %2132 = vmatpush1.msra.mxu0 0.0
    %2133 = vmatprep.subr.mxu0 0.0
    %2134 = vmatpush1.msra.mxu0 0.0
    %2135 = vmatprep.subr.mxu0 0.0
    %2136 = vmatpush1.msra.mxu0 0.0
    %2137 = vmatprep.subr.mxu0 0.0
    %2138 = vmatpush1.msra.mxu0 0.0
    %2139 = vmatprep.subr.mxu0 0.0
    %2140 = vmatpush1.msra.mxu0 0.0
    %2141 = vmatprep.subr.mxu0 0.0
    %2142 = vmatpush1.msra.mxu0 0.0
    %2143 = vmatprep.subr.mxu0 0.0
    %2144 = vmatpush1.msra.mxu0 0.0
    %2145 = vmatprep.subr.mxu0 0.0
    %2146 = vmatpush1.msra.mxu0 0.0
    %2147 = vmatprep.subr.mxu0 0.0
    %2148 = vmatpush1.msra.mxu0 0.0
    %2149 = vmatprep.subr.mxu0 0.0
    %2150 = vmatpush1.msra.mxu0 0.0
    %2151 = vmatprep.subr.mxu0 0.0
    %2152 = vmatpush1.msra.mxu0 0.0
    %2153 = vmatprep.subr.mxu0 0.0
    %2154 = vmatpush1.msra.mxu0 0.0
    %2155 = vmatprep.subr.mxu0 0.0
    %2156 = vmatpush1.msra.mxu0 0.0
    %2157 = vmatprep.subr.mxu0 0.0
    %2158 = vmatpush1.msra.mxu0 0.0
    %2159 = vmatprep.subr.mxu0 0.0
    %2160 = vmatpush1.msra.mxu0 0.0
    %2161 = vmatprep.subr.mxu0 0.0
    %2162 = vmatpush1.msra.mxu0 0.0
    %2163 = vmatprep.subr.mxu0 0.0
    %2164 = vmatpush1.msra.mxu0 0.0
    %2165 = vmatprep.subr.mxu0 0.0
    %2166 = vmatpush1.msra.mxu0 0.0
    %2167 = vmatprep.subr.mxu0 0.0
    %2168 = vmatpush1.msra.mxu0 0.0
    %2169 = vmatprep.subr.mxu0 0.0
    %2170 = vmatpush1.msra.mxu0 0.0
    %2171 = vmatprep.subr.mxu0 0.0
    %2172 = vmatpush1.msra.mxu0 0.0
    %2173 = vmatprep.subr.mxu0 0.0
    %2174 = vmatpush1.msra.mxu0 0.0
    %2175 = vmatprep.subr.mxu0 0.0
    %2176 = vmatpush1.msra.mxu0 0.0
    %2177 = vmatprep.subr.mxu0 0.0
    %2178 = vmatpush1.msra.mxu0 0.0
    %2179 = vmatprep.subr.mxu0 0.0
    %2180 = vmatpush1.msra.mxu0 0.0
    %2181 = vmatprep.subr.mxu0 0.0
    %2182 = vmatpush1.msra.mxu0 0.0
    %2183 = vmatprep.subr.mxu0 0.0
    %2184 = vmatpush1.msra.mxu0 0.0
    %2185 = vmatprep.subr.mxu0 0.0
    %2186 = vmatpush1.msra.mxu0 0.0
    %2187 = vmatprep.subr.mxu0 0.0
    %2188 = vmatpush1.msra.mxu0 0.0
    %2189 = vmatprep.subr.mxu0 0.0
    %2190 = vmatpush1.msra.mxu0 0.0
    %2191 = vmatprep.mubr.f32.mxu0 0.0
    %v2192 = vand.u32 %v1509, 4294901760
    %2193 = vmatmul.mubr.f32.gmra.mrb[0].mxu0 %v2192
    %v2194 = vpop.f32.mrb[0].mxu0
    %v2195 = vadd.f32 %v2102, %v2194
    %v2196 = vpop.f32.mrb[0].mxu0
    %v2197 = vadd.f32 %v2104, %v2196
    %2198 = vmatprep.mubr.f32.mxu0 0.0
    %v2199 = vand.u32 %v1512, 4294901760
    %2200 = vmatmul.mubr.f32.gmra.mrb[0].mxu0 %v2199
    %v2201 = vpop.f32.mrb[0].mxu0
    %v2202 = vadd.f32 %v2113, %v2201
    %v2203 = vpop.f32.mrb[0].mxu0
    %v2204 = vadd.f32 %v2115, %v2203
    %2205 = vdwg.mxu0
    %v2206 = vand.u32 %v1492, 4294901760
    %v2207 = vsub.f32 %v1492, %v2206
    %2208 = vmatprep.subr.mxu0 %v2207
    %v2209 = vand.u32 %v1491, 4294901760
    %v2210 = vsub.f32 %v1491, %v2209
    %2211 = vmatpush1.msra.mxu0 %v2210
    %2212 = vmatprep.subr.mxu0 0.0
    %2213 = vmatpush1.msra.mxu0 0.0
    %2214 = vmatprep.subr.mxu0 0.0
    %2215 = vmatpush1.msra.mxu0 0.0
    %2216 = vmatprep.subr.mxu0 0.0
    %2217 = vmatpush1.msra.mxu0 0.0
    %2218 = vmatprep.subr.mxu0 0.0
    %2219 = vmatpush1.msra.mxu0 0.0
    %2220 = vmatprep.subr.mxu0 0.0
    %2221 = vmatpush1.msra.mxu0 0.0
    %2222 = vmatprep.subr.mxu0 0.0
    %2223 = vmatpush1.msra.mxu0 0.0
    %2224 = vmatprep.subr.mxu0 0.0
    %2225 = vmatpush1.msra.mxu0 0.0
    %2226 = vmatprep.subr.mxu0 0.0
    %2227 = vmatpush1.msra.mxu0 0.0
    %2228 = vmatprep.subr.mxu0 0.0
    %2229 = vmatpush1.msra.mxu0 0.0
    %2230 = vmatprep.subr.mxu0 0.0
    %2231 = vmatpush1.msra.mxu0 0.0
    %2232 = vmatprep.subr.mxu0 0.0
    %2233 = vmatpush1.msra.mxu0 0.0
    %2234 = vmatprep.subr.mxu0 0.0
    %2235 = vmatpush1.msra.mxu0 0.0
    %2236 = vmatprep.subr.mxu0 0.0
    %2237 = vmatpush1.msra.mxu0 0.0
    %2238 = vmatprep.subr.mxu0 0.0
    %2239 = vmatpush1.msra.mxu0 0.0
    %2240 = vmatprep.subr.mxu0 0.0
    %2241 = vmatpush1.msra.mxu0 0.0
    %2242 = vmatprep.subr.mxu0 0.0
    %2243 = vmatpush1.msra.mxu0 0.0
    %2244 = vmatprep.subr.mxu0 0.0
    %2245 = vmatpush1.msra.mxu0 0.0
    %2246 = vmatprep.subr.mxu0 0.0
    %2247 = vmatpush1.msra.mxu0 0.0
    %2248 = vmatprep.subr.mxu0 0.0
    %2249 = vmatpush1.msra.mxu0 0.0
    %2250 = vmatprep.subr.mxu0 0.0
    %2251 = vmatpush1.msra.mxu0 0.0
    %2252 = vmatprep.subr.mxu0 0.0
    %2253 = vmatpush1.msra.mxu0 0.0
    %2254 = vmatprep.subr.mxu0 0.0
    %2255 = vmatpush1.msra.mxu0 0.0
    %2256 = vmatprep.subr.mxu0 0.0
    %2257 = vmatpush1.msra.mxu0 0.0
    %2258 = vmatprep.subr.mxu0 0.0
    %2259 = vmatpush1.msra.mxu0 0.0
    %2260 = vmatprep.subr.mxu0 0.0
    %2261 = vmatpush1.msra.mxu0 0.0
    %2262 = vmatprep.subr.mxu0 0.0
    %2263 = vmatpush1.msra.mxu0 0.0
    %2264 = vmatprep.subr.mxu0 0.0
    %2265 = vmatpush1.msra.mxu0 0.0
    %2266 = vmatprep.subr.mxu0 0.0
    %2267 = vmatpush1.msra.mxu0 0.0
    %2268 = vmatprep.subr.mxu0 0.0
    %2269 = vmatpush1.msra.mxu0 0.0
    %2270 = vmatprep.subr.mxu0 0.0
    %2271 = vmatpush1.msra.mxu0 0.0
    %2272 = vmatprep.subr.mxu0 0.0
    %2273 = vmatpush1.msra.mxu0 0.0
    %2274 = vmatprep.mubr.f32.mxu0 0.0
    %v2275 = vand.u32 %v1509, 4294901760
    %v2276 = vsub.f32 %v1509, %v2275
    %2277 = vmatmul.mubr.f32.gmra.mrb[0].mxu0 %v2276
    %v2278 = vpop.f32.mrb[0].mxu0
    %v2279 = vadd.f32 %v2195, %v2278
    %v2280 = vpop.f32.mrb[0].mxu0
    %v2281 = vadd.f32 %v2197, %v2280
    %2282 = vmatprep.mubr.f32.mxu0 0.0
    %v2283 = vand.u32 %v1512, 4294901760
    %v2284 = vsub.f32 %v1512, %v2283
    %2285 = vmatmul.mubr.f32.gmra.mrb[0].mxu0 %v2284
    %v2286 = vpop.f32.mrb[0].mxu0
    %v2287 = vadd.f32 %v2202, %v2286
    %v2288 = vpop.f32.mrb[0].mxu0
    %v2289 = vadd.f32 %v2204, %v2288
    %2290 = vdwg.mxu0
    %v2291 = vand.u32 %v1492, 4294901760
    %2292 = vmatprep.subr.mxu0 %v2291
    %v2293 = vand.u32 %v1491, 4294901760
    %2294 = vmatpush1.msra.mxu0 %v2293
    %2295 = vmatprep.subr.mxu0 0.0
    %2296 = vmatpush1.msra.mxu0 0.0
    %2297 = vmatprep.subr.mxu0 0.0
    %2298 = vmatpush1.msra.mxu0 0.0
    %2299 = vmatprep.subr.mxu0 0.0
    %2300 = vmatpush1.msra.mxu0 0.0
    %2301 = vmatprep.subr.mxu0 0.0
    %2302 = vmatpush1.msra.mxu0 0.0
    %2303 = vmatprep.subr.mxu0 0.0
    %2304 = vmatpush1.msra.mxu0 0.0
    %2305 = vmatprep.subr.mxu0 0.0
    %2306 = vmatpush1.msra.mxu0 0.0
    %2307 = vmatprep.subr.mxu0 0.0
    %2308 = vmatpush1.msra.mxu0 0.0
    %2309 = vmatprep.subr.mxu0 0.0
    %2310 = vmatpush1.msra.mxu0 0.0
    %2311 = vmatprep.subr.mxu0 0.0
    %2312 = vmatpush1.msra.mxu0 0.0
    %2313 = vmatprep.subr.mxu0 0.0
    %2314 = vmatpush1.msra.mxu0 0.0
    %2315 = vmatprep.subr.mxu0 0.0
    %2316 = vmatpush1.msra.mxu0 0.0
    %2317 = vmatprep.subr.mxu0 0.0
    %2318 = vmatpush1.msra.mxu0 0.0
    %2319 = vmatprep.subr.mxu0 0.0
    %2320 = vmatpush1.msra.mxu0 0.0
    %2321 = vmatprep.subr.mxu0 0.0
    %2322 = vmatpush1.msra.mxu0 0.0
    %2323 = vmatprep.subr.mxu0 0.0
    %2324 = vmatpush1.msra.mxu0 0.0
    %2325 = vmatprep.subr.mxu0 0.0
    %2326 = vmatpush1.msra.mxu0 0.0
    %2327 = vmatprep.subr.mxu0 0.0
    %2328 = vmatpush1.msra.mxu0 0.0
    %2329 = vmatprep.subr.mxu0 0.0
    %2330 = vmatpush1.msra.mxu0 0.0
    %2331 = vmatprep.subr.mxu0 0.0
    %2332 = vmatpush1.msra.mxu0 0.0
    %2333 = vmatprep.subr.mxu0 0.0
    %2334 = vmatpush1.msra.mxu0 0.0
    %2335 = vmatprep.subr.mxu0 0.0
    %2336 = vmatpush1.msra.mxu0 0.0
    %2337 = vmatprep.subr.mxu0 0.0
    %2338 = vmatpush1.msra.mxu0 0.0
    %2339 = vmatprep.subr.mxu0 0.0
    %2340 = vmatpush1.msra.mxu0 0.0
    %2341 = vmatprep.subr.mxu0 0.0
    %2342 = vmatpush1.msra.mxu0 0.0
    %2343 = vmatprep.subr.mxu0 0.0
    %2344 = vmatpush1.msra.mxu0 0.0
    %2345 = vmatprep.subr.mxu0 0.0
    %2346 = vmatpush1.msra.mxu0 0.0
    %2347 = vmatprep.subr.mxu0 0.0
    %2348 = vmatpush1.msra.mxu0 0.0
    %2349 = vmatprep.subr.mxu0 0.0
    %2350 = vmatpush1.msra.mxu0 0.0
    %2351 = vmatprep.subr.mxu0 0.0
    %2352 = vmatpush1.msra.mxu0 0.0
    %2353 = vmatprep.subr.mxu0 0.0
    %2354 = vmatpush1.msra.mxu0 0.0
    %2355 = vmatprep.subr.mxu0 0.0
    %2356 = vmatpush1.msra.mxu0 0.0
    %2357 = vmatprep.mubr.f32.mxu0 0.0
    %v2358 = vand.u32 %v1509, 4294901760
    %v2359 = vsub.f32 %v1509, %v2358
    %v2360 = vand.u32 %v2359, 4294901760
    %2361 = vmatmul.mubr.f32.gmra.mrb[0].mxu0 %v2360
    %v2362 = vpop.f32.mrb[0].mxu0
    %v2363 = vadd.f32 %v2279, %v2362
    %v2364 = vpop.f32.mrb[0].mxu0
    %v2365 = vadd.f32 %v2281, %v2364
    %2366 = vmatprep.mubr.f32.mxu0 0.0
    %v2367 = vand.u32 %v1512, 4294901760
    %v2368 = vsub.f32 %v1512, %v2367
    %v2369 = vand.u32 %v2368, 4294901760
    %2370 = vmatmul.mubr.f32.gmra.mrb[0].mxu0 %v2369
    %v2371 = vpop.f32.mrb[0].mxu0
    %v2372 = vadd.f32 %v2287, %v2371
    %v2373 = vpop.f32.mrb[0].mxu0
    %v2374 = vadd.f32 %v2289, %v2373
    %2375 = vdwg.mxu0
    %v2376 = vand.u32 %v1492, 4294901760
    %v2377 = vsub.f32 %v1492, %v2376
    %v2378 = vand.u32 %v2377, 4294901760
    %2379 = vmatprep.subr.mxu0 %v2378
    %v2380 = vand.u32 %v1491, 4294901760
    %v2381 = vsub.f32 %v1491, %v2380
    %v2382 = vand.u32 %v2381, 4294901760
    %2383 = vmatpush1.msra.mxu0 %v2382
    %2384 = vmatprep.subr.mxu0 0.0
    %2385 = vmatpush1.msra.mxu0 0.0
    %2386 = vmatprep.subr.mxu0 0.0
    %2387 = vmatpush1.msra.mxu0 0.0
    %2388 = vmatprep.subr.mxu0 0.0
    %2389 = vmatpush1.msra.mxu0 0.0
    %2390 = vmatprep.subr.mxu0 0.0
    %2391 = vmatpush1.msra.mxu0 0.0
    %2392 = vmatprep.subr.mxu0 0.0
    %2393 = vmatpush1.msra.mxu0 0.0
    %2394 = vmatprep.subr.mxu0 0.0
    %2395 = vmatpush1.msra.mxu0 0.0
    %2396 = vmatprep.subr.mxu0 0.0
    %2397 = vmatpush1.msra.mxu0 0.0
    %2398 = vmatprep.subr.mxu0 0.0
    %2399 = vmatpush1.msra.mxu0 0.0
    %2400 = vmatprep.subr.mxu0 0.0
    %2401 = vmatpush1.msra.mxu0 0.0
    %2402 = vmatprep.subr.mxu0 0.0
    %2403 = vmatpush1.msra.mxu0 0.0
    %2404 = vmatprep.subr.mxu0 0.0
    %2405 = vmatpush1.msra.mxu0 0.0
    %2406 = vmatprep.subr.mxu0 0.0
    %2407 = vmatpush1.msra.mxu0 0.0
    %2408 = vmatprep.subr.mxu0 0.0
    %2409 = vmatpush1.msra.mxu0 0.0
    %2410 = vmatprep.subr.mxu0 0.0
    %2411 = vmatpush1.msra.mxu0 0.0
    %2412 = vmatprep.subr.mxu0 0.0
    %2413 = vmatpush1.msra.mxu0 0.0
    %2414 = vmatprep.subr.mxu0 0.0
    %2415 = vmatpush1.msra.mxu0 0.0
    %2416 = vmatprep.subr.mxu0 0.0
    %2417 = vmatpush1.msra.mxu0 0.0
    %2418 = vmatprep.subr.mxu0 0.0
    %2419 = vmatpush1.msra.mxu0 0.0
    %2420 = vmatprep.subr.mxu0 0.0
    %2421 = vmatpush1.msra.mxu0 0.0
    %2422 = vmatprep.subr.mxu0 0.0
    %2423 = vmatpush1.msra.mxu0 0.0
    %2424 = vmatprep.subr.mxu0 0.0
    %2425 = vmatpush1.msra.mxu0 0.0
    %2426 = vmatprep.subr.mxu0 0.0
    %2427 = vmatpush1.msra.mxu0 0.0
    %2428 = vmatprep.subr.mxu0 0.0
    %2429 = vmatpush1.msra.mxu0 0.0
    %2430 = vmatprep.subr.mxu0 0.0
    %2431 = vmatpush1.msra.mxu0 0.0
    %2432 = vmatprep.subr.mxu0 0.0
    %2433 = vmatpush1.msra.mxu0 0.0
    %2434 = vmatprep.subr.mxu0 0.0
    %2435 = vmatpush1.msra.mxu0 0.0
    %2436 = vmatprep.subr.mxu0 0.0
    %2437 = vmatpush1.msra.mxu0 0.0
    %2438 = vmatprep.subr.mxu0 0.0
    %2439 = vmatpush1.msra.mxu0 0.0
    %2440 = vmatprep.subr.mxu0 0.0
    %2441 = vmatpush1.msra.mxu0 0.0
    %2442 = vmatprep.subr.mxu0 0.0
    %2443 = vmatpush1.msra.mxu0 0.0
    %2444 = vmatprep.subr.mxu0 0.0
    %2445 = vmatpush1.msra.mxu0 0.0
    %2446 = vmatprep.mubr.f32.mxu0 0.0
    %v2447 = vand.u32 %v1509, 4294901760
    %2448 = vmatmul.mubr.f32.gmra.mrb[0].mxu0 %v2447
    %v2449 = vpop.f32.mrb[0].mxu0
    %v2450 = vadd.f32 %v2363, %v2449
    %v2451 = vpop.f32.mrb[0].mxu0
    %v2452 = vadd.f32 %v2365, %v2451
    %2453 = vmatprep.mubr.f32.mxu0 0.0
    %v2454 = vand.u32 %v1512, 4294901760
    %2455 = vmatmul.mubr.f32.gmra.mrb[0].mxu0 %v2454
    %v2456 = vpop.f32.mrb[0].mxu0
    %v2457 = vadd.f32 %v2372, %v2456
    %v2458 = vpop.f32.mrb[0].mxu0
    %v2459 = vadd.f32 %v2374, %v2458
    %2460 = vdwg.mxu0
    %v2461 = vand.u32 %v1492, 4294901760
    %2462 = vmatprep.subr.mxu0 %v2461
    %v2463 = vand.u32 %v1491, 4294901760
    %2464 = vmatpush1.msra.mxu0 %v2463
    %2465 = vmatprep.subr.mxu0 0.0
    %2466 = vmatpush1.msra.mxu0 0.0
    %2467 = vmatprep.subr.mxu0 0.0
    %2468 = vmatpush1.msra.mxu0 0.0
    %2469 = vmatprep.subr.mxu0 0.0
    %2470 = vmatpush1.msra.mxu0 0.0
    %2471 = vmatprep.subr.mxu0 0.0
    %2472 = vmatpush1.msra.mxu0 0.0
    %2473 = vmatprep.subr.mxu0 0.0
    %2474 = vmatpush1.msra.mxu0 0.0
    %2475 = vmatprep.subr.mxu0 0.0
    %2476 = vmatpush1.msra.mxu0 0.0
    %2477 = vmatprep.subr.mxu0 0.0
    %2478 = vmatpush1.msra.mxu0 0.0
    %2479 = vmatprep.subr.mxu0 0.0
    %2480 = vmatpush1.msra.mxu0 0.0
    %2481 = vmatprep.subr.mxu0 0.0
    %2482 = vmatpush1.msra.mxu0 0.0
    %2483 = vmatprep.subr.mxu0 0.0
    %2484 = vmatpush1.msra.mxu0 0.0
    %2485 = vmatprep.subr.mxu0 0.0
    %2486 = vmatpush1.msra.mxu0 0.0
    %2487 = vmatprep.subr.mxu0 0.0
    %2488 = vmatpush1.msra.mxu0 0.0
    %2489 = vmatprep.subr.mxu0 0.0
    %2490 = vmatpush1.msra.mxu0 0.0
    %2491 = vmatprep.subr.mxu0 0.0
    %2492 = vmatpush1.msra.mxu0 0.0
    %2493 = vmatprep.subr.mxu0 0.0
    %2494 = vmatpush1.msra.mxu0 0.0
    %2495 = vmatprep.subr.mxu0 0.0
    %2496 = vmatpush1.msra.mxu0 0.0
    %2497 = vmatprep.subr.mxu0 0.0
    %2498 = vmatpush1.msra.mxu0 0.0
    %2499 = vmatprep.subr.mxu0 0.0
    %2500 = vmatpush1.msra.mxu0 0.0
    %2501 = vmatprep.subr.mxu0 0.0
    %2502 = vmatpush1.msra.mxu0 0.0
    %2503 = vmatprep.subr.mxu0 0.0
    %2504 = vmatpush1.msra.mxu0 0.0
    %2505 = vmatprep.subr.mxu0 0.0
    %2506 = vmatpush1.msra.mxu0 0.0
    %2507 = vmatprep.subr.mxu0 0.0
    %2508 = vmatpush1.msra.mxu0 0.0
    %2509 = vmatprep.subr.mxu0 0.0
    %2510 = vmatpush1.msra.mxu0 0.0
    %2511 = vmatprep.subr.mxu0 0.0
    %2512 = vmatpush1.msra.mxu0 0.0
    %2513 = vmatprep.subr.mxu0 0.0
    %2514 = vmatpush1.msra.mxu0 0.0
    %2515 = vmatprep.subr.mxu0 0.0
    %2516 = vmatpush1.msra.mxu0 0.0
    %2517 = vmatprep.subr.mxu0 0.0
    %2518 = vmatpush1.msra.mxu0 0.0
    %2519 = vmatprep.subr.mxu0 0.0
    %2520 = vmatpush1.msra.mxu0 0.0
    %2521 = vmatprep.subr.mxu0 0.0
    %2522 = vmatpush1.msra.mxu0 0.0
    %2523 = vmatprep.subr.mxu0 0.0
    %2524 = vmatpush1.msra.mxu0 0.0
    %2525 = vmatprep.subr.mxu0 0.0
    %2526 = vmatpush1.msra.mxu0 0.0
    %2527 = vmatprep.mubr.f32.mxu0 0.0
    %v2528 = vand.u32 %v1509, 4294901760
    %2529 = vmatmul.mubr.f32.gmra.mrb[0].mxu0 %v2528
    %v2530 = vpop.f32.mrb[0].mxu0
    %v2531 = vadd.f32 %v2450, %v2530
    %v2532 = vpop.f32.mrb[0].mxu0
    %v2533 = vadd.f32 %v2452, %v2532
    %2534 = vmatprep.mubr.f32.mxu0 0.0
    %v2535 = vand.u32 %v1512, 4294901760
    %2536 = vmatmul.mubr.f32.gmra.mrb[0].mxu0 %v2535
    %v2537 = vpop.f32.mrb[0].mxu0
    %v2538 = vadd.f32 %v2457, %v2537
    %v2539 = vpop.f32.mrb[0].mxu0
    %v2540 = vadd.f32 %v2459, %v2539
    %2541 = vdwg.mxu0
    %v2542 = vld [vmem:[%s11] sm:$0xff]
    %v2543 = vld [vmem:[%s11 + $0x8] sm:$0xff]
    %vm2544 = vcmask 130048
    %v2546 = vsel %vm2544, %v2542, 0
    %v2549 = vsel %vm2544, %v2543, 0
    %v2551 = vand.u32 %v2019, 4294901760
    %2552 = vmatprep.subr.mxu0 %v2551
    %v2553 = vand.u32 %v2017, 4294901760
    %2554 = vmatpush1.msra.mxu0 %v2553
    %v2555 = vand.u32 %v2026, 4294901760
    %2556 = vmatprep.subr.mxu0 %v2555
    %v2557 = vand.u32 %v2024, 4294901760
    %2558 = vmatpush1.msra.mxu0 %v2557
    %2559 = vmatprep.subr.mxu0 0.0
    %2560 = vmatpush1.msra.mxu0 0.0
    %2561 = vmatprep.subr.mxu0 0.0
    %2562 = vmatpush1.msra.mxu0 0.0
    %2563 = vmatprep.subr.mxu0 0.0
    %2564 = vmatpush1.msra.mxu0 0.0
    %2565 = vmatprep.subr.mxu0 0.0
    %2566 = vmatpush1.msra.mxu0 0.0
    %2567 = vmatprep.subr.mxu0 0.0
    %2568 = vmatpush1.msra.mxu0 0.0
    %2569 = vmatprep.subr.mxu0 0.0
    %2570 = vmatpush1.msra.mxu0 0.0
    %2571 = vmatprep.subr.mxu0 0.0
    %2572 = vmatpush1.msra.mxu0 0.0
    %2573 = vmatprep.subr.mxu0 0.0
    %2574 = vmatpush1.msra.mxu0 0.0
    %2575 = vmatprep.subr.mxu0 0.0
    %2576 = vmatpush1.msra.mxu0 0.0
    %2577 = vmatprep.subr.mxu0 0.0
    %2578 = vmatpush1.msra.mxu0 0.0
    %2579 = vmatprep.subr.mxu0 0.0
    %2580 = vmatpush1.msra.mxu0 0.0
    %2581 = vmatprep.subr.mxu0 0.0
    %2582 = vmatpush1.msra.mxu0 0.0
    %2583 = vmatprep.subr.mxu0 0.0
    %2584 = vmatpush1.msra.mxu0 0.0
    %2585 = vmatprep.subr.mxu0 0.0
    %2586 = vmatpush1.msra.mxu0 0.0
    %2587 = vmatprep.subr.mxu0 0.0
    %2588 = vmatpush1.msra.mxu0 0.0
    %2589 = vmatprep.subr.mxu0 0.0
    %2590 = vmatpush1.msra.mxu0 0.0
    %2591 = vmatprep.subr.mxu0 0.0
    %2592 = vmatpush1.msra.mxu0 0.0
    %2593 = vmatprep.subr.mxu0 0.0
    %2594 = vmatpush1.msra.mxu0 0.0
    %2595 = vmatprep.subr.mxu0 0.0
    %2596 = vmatpush1.msra.mxu0 0.0
    %2597 = vmatprep.subr.mxu0 0.0
    %2598 = vmatpush1.msra.mxu0 0.0
    %2599 = vmatprep.subr.mxu0 0.0
    %2600 = vmatpush1.msra.mxu0 0.0
    %2601 = vmatprep.subr.mxu0 0.0
    %2602 = vmatpush1.msra.mxu0 0.0
    %2603 = vmatprep.subr.mxu0 0.0
    %2604 = vmatpush1.msra.mxu0 0.0
    %2605 = vmatprep.subr.mxu0 0.0
    %2606 = vmatpush1.msra.mxu0 0.0
    %2607 = vmatprep.subr.mxu0 0.0
    %2608 = vmatpush1.msra.mxu0 0.0
    %2609 = vmatprep.subr.mxu0 0.0
    %2610 = vmatpush1.msra.mxu0 0.0
    %2611 = vmatprep.subr.mxu0 0.0
    %2612 = vmatpush1.msra.mxu0 0.0
    %2613 = vmatprep.subr.mxu0 0.0
    %2614 = vmatpush1.msra.mxu0 0.0
    %2615 = vmatprep.subr.mxu0 0.0
    %2616 = vmatpush1.msra.mxu0 0.0
    %2617 = vmatprep.subr.mxu0 0.0
    %2618 = vmatpush1.msra.mxu0 0.0
    %2619 = vmatprep.mubr.f32.mxu0 0.0
    %v2620 = vand.u32 %v2546, 4294901760
    %v2621 = vsub.f32 %v2546, %v2620
    %v2622 = vand.u32 %v2621, 4294901760
    %v2623 = vsub.f32 %v2621, %v2622
    %v2624 = vand.u32 %v2623, 4294901760
    %2625 = vmatmul.mubr.f32.gmra.mrb[0].mxu0 %v2624
    %v2626 = vpop.f32.mrb[0].mxu0
    %v2627 = vadd.f32 0.0, %v2626
    %v2628 = vpop.f32.mrb[0].mxu0
    %v2629 = vadd.f32 0.0, %v2628
    %2630 = vmatprep.mubr.f32.mxu0 0.0
    %v2631 = vand.u32 %v2549, 4294901760
    %v2632 = vsub.f32 %v2549, %v2631
    %v2633 = vand.u32 %v2632, 4294901760
    %v2634 = vsub.f32 %v2632, %v2633
    %v2635 = vand.u32 %v2634, 4294901760
    %2636 = vmatmul.mubr.f32.gmra.mrb[0].mxu0 %v2635
    %v2637 = vpop.f32.mrb[0].mxu0
    %v2638 = vadd.f32 0.0, %v2637
    %v2639 = vpop.f32.mrb[0].mxu0
    %v2640 = vadd.f32 0.0, %v2639
    %2641 = vdwg.mxu0
    %v2642 = vand.u32 %v2019, 4294901760
    %v2643 = vsub.f32 %v2019, %v2642
    %v2644 = vand.u32 %v2643, 4294901760
    %v2645 = vsub.f32 %v2643, %v2644
    %v2646 = vand.u32 %v2645, 4294901760
    %2647 = vmatprep.subr.mxu0 %v2646
    %v2648 = vand.u32 %v2017, 4294901760
    %v2649 = vsub.f32 %v2017, %v2648
    %v2650 = vand.u32 %v2649, 4294901760
    %v2651 = vsub.f32 %v2649, %v2650
    %v2652 = vand.u32 %v2651, 4294901760
    %2653 = vmatpush1.msra.mxu0 %v2652
    %v2654 = vand.u32 %v2026, 4294901760
    %v2655 = vsub.f32 %v2026, %v2654
    %v2656 = vand.u32 %v2655, 4294901760
    %v2657 = vsub.f32 %v2655, %v2656
    %v2658 = vand.u32 %v2657, 4294901760
    %2659 = vmatprep.subr.mxu0 %v2658
    %v2660 = vand.u32 %v2024, 4294901760
    %v2661 = vsub.f32 %v2024, %v2660
    %v2662 = vand.u32 %v2661, 4294901760
    %v2663 = vsub.f32 %v2661, %v2662
    %v2664 = vand.u32 %v2663, 4294901760
    %2665 = vmatpush1.msra.mxu0 %v2664
    %2666 = vmatprep.subr.mxu0 0.0
    %2667 = vmatpush1.msra.mxu0 0.0
    %2668 = vmatprep.subr.mxu0 0.0
    %2669 = vmatpush1.msra.mxu0 0.0
    %2670 = vmatprep.subr.mxu0 0.0
    %2671 = vmatpush1.msra.mxu0 0.0
    %2672 = vmatprep.subr.mxu0 0.0
    %2673 = vmatpush1.msra.mxu0 0.0
    %2674 = vmatprep.subr.mxu0 0.0
    %2675 = vmatpush1.msra.mxu0 0.0
    %2676 = vmatprep.subr.mxu0 0.0
    %2677 = vmatpush1.msra.mxu0 0.0
    %2678 = vmatprep.subr.mxu0 0.0
    %2679 = vmatpush1.msra.mxu0 0.0
    %2680 = vmatprep.subr.mxu0 0.0
    %2681 = vmatpush1.msra.mxu0 0.0
    %2682 = vmatprep.subr.mxu0 0.0
    %2683 = vmatpush1.msra.mxu0 0.0
    %2684 = vmatprep.subr.mxu0 0.0
    %2685 = vmatpush1.msra.mxu0 0.0
    %2686 = vmatprep.subr.mxu0 0.0
    %2687 = vmatpush1.msra.mxu0 0.0
    %2688 = vmatprep.subr.mxu0 0.0
    %2689 = vmatpush1.msra.mxu0 0.0
    %2690 = vmatprep.subr.mxu0 0.0
    %2691 = vmatpush1.msra.mxu0 0.0
    %2692 = vmatprep.subr.mxu0 0.0
    %2693 = vmatpush1.msra.mxu0 0.0
    %2694 = vmatprep.subr.mxu0 0.0
    %2695 = vmatpush1.msra.mxu0 0.0
    %2696 = vmatprep.subr.mxu0 0.0
    %2697 = vmatpush1.msra.mxu0 0.0
    %2698 = vmatprep.subr.mxu0 0.0
    %2699 = vmatpush1.msra.mxu0 0.0
    %2700 = vmatprep.subr.mxu0 0.0
    %2701 = vmatpush1.msra.mxu0 0.0
    %2702 = vmatprep.subr.mxu0 0.0
    %2703 = vmatpush1.msra.mxu0 0.0
    %2704 = vmatprep.subr.mxu0 0.0
    %2705 = vmatpush1.msra.mxu0 0.0
    %2706 = vmatprep.subr.mxu0 0.0
    %2707 = vmatpush1.msra.mxu0 0.0
    %2708 = vmatprep.subr.mxu0 0.0
    %2709 = vmatpush1.msra.mxu0 0.0
    %2710 = vmatprep.subr.mxu0 0.0
    %2711 = vmatpush1.msra.mxu0 0.0
    %2712 = vmatprep.subr.mxu0 0.0
    %2713 = vmatpush1.msra.mxu0 0.0
    %2714 = vmatprep.subr.mxu0 0.0
    %2715 = vmatpush1.msra.mxu0 0.0
    %2716 = vmatprep.subr.mxu0 0.0
    %2717 = vmatpush1.msra.mxu0 0.0
    %2718 = vmatprep.subr.mxu0 0.0
    %2719 = vmatpush1.msra.mxu0 0.0
    %2720 = vmatprep.subr.mxu0 0.0
    %2721 = vmatpush1.msra.mxu0 0.0
    %2722 = vmatprep.subr.mxu0 0.0
    %2723 = vmatpush1.msra.mxu0 0.0
    %2724 = vmatprep.subr.mxu0 0.0
    %2725 = vmatpush1.msra.mxu0 0.0
    %2726 = vmatprep.mubr.f32.mxu0 0.0
    %v2727 = vand.u32 %v2546, 4294901760
    %2728 = vmatmul.mubr.f32.gmra.mrb[0].mxu0 %v2727
    %v2729 = vpop.f32.mrb[0].mxu0
    %v2730 = vadd.f32 %v2627, %v2729
    %v2731 = vpop.f32.mrb[0].mxu0
    %v2732 = vadd.f32 %v2629, %v2731
    %2733 = vmatprep.mubr.f32.mxu0 0.0
    %v2734 = vand.u32 %v2549, 4294901760
    %2735 = vmatmul.mubr.f32.gmra.mrb[0].mxu0 %v2734
    %v2736 = vpop.f32.mrb[0].mxu0
    %v2737 = vadd.f32 %v2638, %v2736
    %v2738 = vpop.f32.mrb[0].mxu0
    %v2739 = vadd.f32 %v2640, %v2738
    %2740 = vdwg.mxu0
    %v2741 = vand.u32 %v2019, 4294901760
    %v2742 = vsub.f32 %v2019, %v2741
    %2743 = vmatprep.subr.mxu0 %v2742
    %v2744 = vand.u32 %v2017, 4294901760
    %v2745 = vsub.f32 %v2017, %v2744
    %2746 = vmatpush1.msra.mxu0 %v2745
    %v2747 = vand.u32 %v2026, 4294901760
    %v2748 = vsub.f32 %v2026, %v2747
    %2749 = vmatprep.subr.mxu0 %v2748
    %v2750 = vand.u32 %v2024, 4294901760
    %v2751 = vsub.f32 %v2024, %v2750
    %2752 = vmatpush1.msra.mxu0 %v2751
    %2753 = vmatprep.subr.mxu0 0.0
    %2754 = vmatpush1.msra.mxu0 0.0
    %2755 = vmatprep.subr.mxu0 0.0
    %2756 = vmatpush1.msra.mxu0 0.0
    %2757 = vmatprep.subr.mxu0 0.0
    %2758 = vmatpush1.msra.mxu0 0.0
    %2759 = vmatprep.subr.mxu0 0.0
    %2760 = vmatpush1.msra.mxu0 0.0
    %2761 = vmatprep.subr.mxu0 0.0
    %2762 = vmatpush1.msra.mxu0 0.0
    %2763 = vmatprep.subr.mxu0 0.0
    %2764 = vmatpush1.msra.mxu0 0.0
    %2765 = vmatprep.subr.mxu0 0.0
    %2766 = vmatpush1.msra.mxu0 0.0
    %2767 = vmatprep.subr.mxu0 0.0
    %2768 = vmatpush1.msra.mxu0 0.0
    %2769 = vmatprep.subr.mxu0 0.0
    %2770 = vmatpush1.msra.mxu0 0.0
    %2771 = vmatprep.subr.mxu0 0.0
    %2772 = vmatpush1.msra.mxu0 0.0
    %2773 = vmatprep.subr.mxu0 0.0
    %2774 = vmatpush1.msra.mxu0 0.0
    %2775 = vmatprep.subr.mxu0 0.0
    %2776 = vmatpush1.msra.mxu0 0.0
    %2777 = vmatprep.subr.mxu0 0.0
    %2778 = vmatpush1.msra.mxu0 0.0
    %2779 = vmatprep.subr.mxu0 0.0
    %2780 = vmatpush1.msra.mxu0 0.0
    %2781 = vmatprep.subr.mxu0 0.0
    %2782 = vmatpush1.msra.mxu0 0.0
    %2783 = vmatprep.subr.mxu0 0.0
    %2784 = vmatpush1.msra.mxu0 0.0
    %2785 = vmatprep.subr.mxu0 0.0
    %2786 = vmatpush1.msra.mxu0 0.0
    %2787 = vmatprep.subr.mxu0 0.0
    %2788 = vmatpush1.msra.mxu0 0.0
    %2789 = vmatprep.subr.mxu0 0.0
    %2790 = vmatpush1.msra.mxu0 0.0
    %2791 = vmatprep.subr.mxu0 0.0
    %2792 = vmatpush1.msra.mxu0 0.0
    %2793 = vmatprep.subr.mxu0 0.0
    %2794 = vmatpush1.msra.mxu0 0.0
    %2795 = vmatprep.subr.mxu0 0.0
    %2796 = vmatpush1.msra.mxu0 0.0
    %2797 = vmatprep.subr.mxu0 0.0
    %2798 = vmatpush1.msra.mxu0 0.0
    %2799 = vmatprep.subr.mxu0 0.0
    %2800 = vmatpush1.msra.mxu0 0.0
    %2801 = vmatprep.subr.mxu0 0.0
    %2802 = vmatpush1.msra.mxu0 0.0
    %2803 = vmatprep.subr.mxu0 0.0
    %2804 = vmatpush1.msra.mxu0 0.0
    %2805 = vmatprep.subr.mxu0 0.0
    %2806 = vmatpush1.msra.mxu0 0.0
    %2807 = vmatprep.subr.mxu0 0.0
    %2808 = vmatpush1.msra.mxu0 0.0
    %2809 = vmatprep.subr.mxu0 0.0
    %2810 = vmatpush1.msra.mxu0 0.0
    %2811 = vmatprep.subr.mxu0 0.0
    %2812 = vmatpush1.msra.mxu0 0.0
    %2813 = vmatprep.mubr.f32.mxu0 0.0
    %v2814 = vand.u32 %v2546, 4294901760
    %v2815 = vsub.f32 %v2546, %v2814
    %2816 = vmatmul.mubr.f32.gmra.mrb[0].mxu0 %v2815
    %v2817 = vpop.f32.mrb[0].mxu0
    %v2818 = vadd.f32 %v2730, %v2817
    %v2819 = vpop.f32.mrb[0].mxu0
    %v2820 = vadd.f32 %v2732, %v2819
    %2821 = vmatprep.mubr.f32.mxu0 0.0
    %v2822 = vand.u32 %v2549, 4294901760
    %v2823 = vsub.f32 %v2549, %v2822
    %2824 = vmatmul.mubr.f32.gmra.mrb[0].mxu0 %v2823
    %v2825 = vpop.f32.mrb[0].mxu0
    %v2826 = vadd.f32 %v2737, %v2825
    %v2827 = vpop.f32.mrb[0].mxu0
    %v2828 = vadd.f32 %v2739, %v2827
    %2829 = vdwg.mxu0
    %v2830 = vand.u32 %v2019, 4294901760
    %2831 = vmatprep.subr.mxu0 %v2830
    %v2832 = vand.u32 %v2017, 4294901760
    %2833 = vmatpush1.msra.mxu0 %v2832
    %v2834 = vand.u32 %v2026, 4294901760
    %2835 = vmatprep.subr.mxu0 %v2834
    %v2836 = vand.u32 %v2024, 4294901760
    %2837 = vmatpush1.msra.mxu0 %v2836
    %2838 = vmatprep.subr.mxu0 0.0
    %2839 = vmatpush1.msra.mxu0 0.0
    %2840 = vmatprep.subr.mxu0 0.0
    %2841 = vmatpush1.msra.mxu0 0.0
    %2842 = vmatprep.subr.mxu0 0.0
    %2843 = vmatpush1.msra.mxu0 0.0
    %2844 = vmatprep.subr.mxu0 0.0
    %2845 = vmatpush1.msra.mxu0 0.0
    %2846 = vmatprep.subr.mxu0 0.0
    %2847 = vmatpush1.msra.mxu0 0.0
    %2848 = vmatprep.subr.mxu0 0.0
    %2849 = vmatpush1.msra.mxu0 0.0
    %2850 = vmatprep.subr.mxu0 0.0
    %2851 = vmatpush1.msra.mxu0 0.0
    %2852 = vmatprep.subr.mxu0 0.0
    %2853 = vmatpush1.msra.mxu0 0.0
    %2854 = vmatprep.subr.mxu0 0.0
    %2855 = vmatpush1.msra.mxu0 0.0
    %2856 = vmatprep.subr.mxu0 0.0
    %2857 = vmatpush1.msra.mxu0 0.0
    %2858 = vmatprep.subr.mxu0 0.0
    %2859 = vmatpush1.msra.mxu0 0.0
    %2860 = vmatprep.subr.mxu0 0.0
    %2861 = vmatpush1.msra.mxu0 0.0
    %2862 = vmatprep.subr.mxu0 0.0
    %2863 = vmatpush1.msra.mxu0 0.0
    %2864 = vmatprep.subr.mxu0 0.0
    %2865 = vmatpush1.msra.mxu0 0.0
    %2866 = vmatprep.subr.mxu0 0.0
    %2867 = vmatpush1.msra.mxu0 0.0
    %2868 = vmatprep.subr.mxu0 0.0
    %2869 = vmatpush1.msra.mxu0 0.0
    %2870 = vmatprep.subr.mxu0 0.0
    %2871 = vmatpush1.msra.mxu0 0.0
    %2872 = vmatprep.subr.mxu0 0.0
    %2873 = vmatpush1.msra.mxu0 0.0
    %2874 = vmatprep.subr.mxu0 0.0
    %2875 = vmatpush1.msra.mxu0 0.0
    %2876 = vmatprep.subr.mxu0 0.0
    %2877 = vmatpush1.msra.mxu0 0.0
    %2878 = vmatprep.subr.mxu0 0.0
    %2879 = vmatpush1.msra.mxu0 0.0
    %2880 = vmatprep.subr.mxu0 0.0
    %2881 = vmatpush1.msra.mxu0 0.0
    %2882 = vmatprep.subr.mxu0 0.0
    %2883 = vmatpush1.msra.mxu0 0.0
    %2884 = vmatprep.subr.mxu0 0.0
    %2885 = vmatpush1.msra.mxu0 0.0
    %2886 = vmatprep.subr.mxu0 0.0
    %2887 = vmatpush1.msra.mxu0 0.0
    %2888 = vmatprep.subr.mxu0 0.0
    %2889 = vmatpush1.msra.mxu0 0.0
    %2890 = vmatprep.subr.mxu0 0.0
    %2891 = vmatpush1.msra.mxu0 0.0
    %2892 = vmatprep.subr.mxu0 0.0
    %2893 = vmatpush1.msra.mxu0 0.0
    %2894 = vmatprep.subr.mxu0 0.0
    %2895 = vmatpush1.msra.mxu0 0.0
    %2896 = vmatprep.subr.mxu0 0.0
    %2897 = vmatpush1.msra.mxu0 0.0
    %2898 = vmatprep.mubr.f32.mxu0 0.0
    %v2899 = vand.u32 %v2546, 4294901760
    %v2900 = vsub.f32 %v2546, %v2899
    %v2901 = vand.u32 %v2900, 4294901760
    %2902 = vmatmul.mubr.f32.gmra.mrb[0].mxu0 %v2901
    %v2903 = vpop.f32.mrb[0].mxu0
    %v2904 = vadd.f32 %v2818, %v2903
    %v2905 = vpop.f32.mrb[0].mxu0
    %v2906 = vadd.f32 %v2820, %v2905
    %2907 = vmatprep.mubr.f32.mxu0 0.0
    %v2908 = vand.u32 %v2549, 4294901760
    %v2909 = vsub.f32 %v2549, %v2908
    %v2910 = vand.u32 %v2909, 4294901760
    %2911 = vmatmul.mubr.f32.gmra.mrb[0].mxu0 %v2910
    %v2912 = vpop.f32.mrb[0].mxu0
    %v2913 = vadd.f32 %v2826, %v2912
    %v2914 = vpop.f32.mrb[0].mxu0
    %v2915 = vadd.f32 %v2828, %v2914
    %2916 = vdwg.mxu0
    %v2917 = vand.u32 %v2019, 4294901760
    %v2918 = vsub.f32 %v2019, %v2917
    %v2919 = vand.u32 %v2918, 4294901760
    %2920 = vmatprep.subr.mxu0 %v2919
    %v2921 = vand.u32 %v2017, 4294901760
    %v2922 = vsub.f32 %v2017, %v2921
    %v2923 = vand.u32 %v2922, 4294901760
    %2924 = vmatpush1.msra.mxu0 %v2923
    %v2925 = vand.u32 %v2026, 4294901760
    %v2926 = vsub.f32 %v2026, %v2925
    %v2927 = vand.u32 %v2926, 4294901760
    %2928 = vmatprep.subr.mxu0 %v2927
    %v2929 = vand.u32 %v2024, 4294901760
    %v2930 = vsub.f32 %v2024, %v2929
    %v2931 = vand.u32 %v2930, 4294901760
    %2932 = vmatpush1.msra.mxu0 %v2931
    %2933 = vmatprep.subr.mxu0 0.0
    %2934 = vmatpush1.msra.mxu0 0.0
    %2935 = vmatprep.subr.mxu0 0.0
    %2936 = vmatpush1.msra.mxu0 0.0
    %2937 = vmatprep.subr.mxu0 0.0
    %2938 = vmatpush1.msra.mxu0 0.0
    %2939 = vmatprep.subr.mxu0 0.0
    %2940 = vmatpush1.msra.mxu0 0.0
    %2941 = vmatprep.subr.mxu0 0.0
    %2942 = vmatpush1.msra.mxu0 0.0
    %2943 = vmatprep.subr.mxu0 0.0
    %2944 = vmatpush1.msra.mxu0 0.0
    %2945 = vmatprep.subr.mxu0 0.0
    %2946 = vmatpush1.msra.mxu0 0.0
    %2947 = vmatprep.subr.mxu0 0.0
    %2948 = vmatpush1.msra.mxu0 0.0
    %2949 = vmatprep.subr.mxu0 0.0
    %2950 = vmatpush1.msra.mxu0 0.0
    %2951 = vmatprep.subr.mxu0 0.0
    %2952 = vmatpush1.msra.mxu0 0.0
    %2953 = vmatprep.subr.mxu0 0.0
    %2954 = vmatpush1.msra.mxu0 0.0
    %2955 = vmatprep.subr.mxu0 0.0
    %2956 = vmatpush1.msra.mxu0 0.0
    %2957 = vmatprep.subr.mxu0 0.0
    %2958 = vmatpush1.msra.mxu0 0.0
    %2959 = vmatprep.subr.mxu0 0.0
    %2960 = vmatpush1.msra.mxu0 0.0
    %2961 = vmatprep.subr.mxu0 0.0
    %2962 = vmatpush1.msra.mxu0 0.0
    %2963 = vmatprep.subr.mxu0 0.0
    %2964 = vmatpush1.msra.mxu0 0.0
    %2965 = vmatprep.subr.mxu0 0.0
    %2966 = vmatpush1.msra.mxu0 0.0
    %2967 = vmatprep.subr.mxu0 0.0
    %2968 = vmatpush1.msra.mxu0 0.0
    %2969 = vmatprep.subr.mxu0 0.0
    %2970 = vmatpush1.msra.mxu0 0.0
    %2971 = vmatprep.subr.mxu0 0.0
    %2972 = vmatpush1.msra.mxu0 0.0
    %2973 = vmatprep.subr.mxu0 0.0
    %2974 = vmatpush1.msra.mxu0 0.0
    %2975 = vmatprep.subr.mxu0 0.0
    %2976 = vmatpush1.msra.mxu0 0.0
    %2977 = vmatprep.subr.mxu0 0.0
    %2978 = vmatpush1.msra.mxu0 0.0
    %2979 = vmatprep.subr.mxu0 0.0
    %2980 = vmatpush1.msra.mxu0 0.0
    %2981 = vmatprep.subr.mxu0 0.0
    %2982 = vmatpush1.msra.mxu0 0.0
    %2983 = vmatprep.subr.mxu0 0.0
    %2984 = vmatpush1.msra.mxu0 0.0
    %2985 = vmatprep.subr.mxu0 0.0
    %2986 = vmatpush1.msra.mxu0 0.0
    %2987 = vmatprep.subr.mxu0 0.0
    %2988 = vmatpush1.msra.mxu0 0.0
    %2989 = vmatprep.subr.mxu0 0.0
    %2990 = vmatpush1.msra.mxu0 0.0
    %2991 = vmatprep.subr.mxu0 0.0
    %2992 = vmatpush1.msra.mxu0 0.0
    %2993 = vmatprep.mubr.f32.mxu0 0.0
    %v2994 = vand.u32 %v2546, 4294901760
    %2995 = vmatmul.mubr.f32.gmra.mrb[0].mxu0 %v2994
    %v2996 = vpop.f32.mrb[0].mxu0
    %v2997 = vadd.f32 %v2904, %v2996
    %v2998 = vpop.f32.mrb[0].mxu0
    %v2999 = vadd.f32 %v2906, %v2998
    %3000 = vmatprep.mubr.f32.mxu0 0.0
    %v3001 = vand.u32 %v2549, 4294901760
    %3002 = vmatmul.mubr.f32.gmra.mrb[0].mxu0 %v3001
    %v3003 = vpop.f32.mrb[0].mxu0
    %v3004 = vadd.f32 %v2913, %v3003
    %v3005 = vpop.f32.mrb[0].mxu0
    %v3006 = vadd.f32 %v2915, %v3005
    %3007 = vdwg.mxu0
    %v3008 = vand.u32 %v2019, 4294901760
    %3009 = vmatprep.subr.mxu0 %v3008
    %v3010 = vand.u32 %v2017, 4294901760
    %3011 = vmatpush1.msra.mxu0 %v3010
    %v3012 = vand.u32 %v2026, 4294901760
    %3013 = vmatprep.subr.mxu0 %v3012
    %v3014 = vand.u32 %v2024, 4294901760
    %3015 = vmatpush1.msra.mxu0 %v3014
    %3016 = vmatprep.subr.mxu0 0.0
    %3017 = vmatpush1.msra.mxu0 0.0
    %3018 = vmatprep.subr.mxu0 0.0
    %3019 = vmatpush1.msra.mxu0 0.0
    %3020 = vmatprep.subr.mxu0 0.0
    %3021 = vmatpush1.msra.mxu0 0.0
    %3022 = vmatprep.subr.mxu0 0.0
    %3023 = vmatpush1.msra.mxu0 0.0
    %3024 = vmatprep.subr.mxu0 0.0
    %3025 = vmatpush1.msra.mxu0 0.0
    %3026 = vmatprep.subr.mxu0 0.0
    %3027 = vmatpush1.msra.mxu0 0.0
    %3028 = vmatprep.subr.mxu0 0.0
    %3029 = vmatpush1.msra.mxu0 0.0
    %3030 = vmatprep.subr.mxu0 0.0
    %3031 = vmatpush1.msra.mxu0 0.0
    %3032 = vmatprep.subr.mxu0 0.0
    %3033 = vmatpush1.msra.mxu0 0.0
    %3034 = vmatprep.subr.mxu0 0.0
    %3035 = vmatpush1.msra.mxu0 0.0
    %3036 = vmatprep.subr.mxu0 0.0
    %3037 = vmatpush1.msra.mxu0 0.0
    %3038 = vmatprep.subr.mxu0 0.0
    %3039 = vmatpush1.msra.mxu0 0.0
    %3040 = vmatprep.subr.mxu0 0.0
    %3041 = vmatpush1.msra.mxu0 0.0
    %3042 = vmatprep.subr.mxu0 0.0
    %3043 = vmatpush1.msra.mxu0 0.0
    %3044 = vmatprep.subr.mxu0 0.0
    %3045 = vmatpush1.msra.mxu0 0.0
    %3046 = vmatprep.subr.mxu0 0.0
    %3047 = vmatpush1.msra.mxu0 0.0
    %3048 = vmatprep.subr.mxu0 0.0
    %3049 = vmatpush1.msra.mxu0 0.0
    %3050 = vmatprep.subr.mxu0 0.0
    %3051 = vmatpush1.msra.mxu0 0.0
    %3052 = vmatprep.subr.mxu0 0.0
    %3053 = vmatpush1.msra.mxu0 0.0
    %3054 = vmatprep.subr.mxu0 0.0
    %3055 = vmatpush1.msra.mxu0 0.0
    %3056 = vmatprep.subr.mxu0 0.0
    %3057 = vmatpush1.msra.mxu0 0.0
    %3058 = vmatprep.subr.mxu0 0.0
    %3059 = vmatpush1.msra.mxu0 0.0
    %3060 = vmatprep.subr.mxu0 0.0
    %3061 = vmatpush1.msra.mxu0 0.0
    %3062 = vmatprep.subr.mxu0 0.0
    %3063 = vmatpush1.msra.mxu0 0.0
    %3064 = vmatprep.subr.mxu0 0.0
    %3065 = vmatpush1.msra.mxu0 0.0
    %3066 = vmatprep.subr.mxu0 0.0
    %3067 = vmatpush1.msra.mxu0 0.0
    %3068 = vmatprep.subr.mxu0 0.0
    %3069 = vmatpush1.msra.mxu0 0.0
    %3070 = vmatprep.subr.mxu0 0.0
    %3071 = vmatpush1.msra.mxu0 0.0
    %3072 = vmatprep.subr.mxu0 0.0
    %3073 = vmatpush1.msra.mxu0 0.0
    %3074 = vmatprep.subr.mxu0 0.0
    %3075 = vmatpush1.msra.mxu0 0.0
    %3076 = vmatprep.mubr.f32.mxu0 0.0
    %v3077 = vand.u32 %v2546, 4294901760
    %3078 = vmatmul.mubr.f32.gmra.mrb[0].mxu0 %v3077
    %v3079 = vpop.f32.mrb[0].mxu0
    %v3080 = vadd.f32 %v2997, %v3079
    %v3081 = vpop.f32.mrb[0].mxu0
    %v3082 = vadd.f32 %v2999, %v3081
    %3083 = vmatprep.mubr.f32.mxu0 0.0
    %v3084 = vand.u32 %v2549, 4294901760
    %3085 = vmatmul.mubr.f32.gmra.mrb[0].mxu0 %v3084
    %v3086 = vpop.f32.mrb[0].mxu0
    %v3087 = vadd.f32 %v3004, %v3086
    %v3088 = vpop.f32.mrb[0].mxu0
    %v3089 = vadd.f32 %v3006, %v3088
    %3090 = vdwg.mxu0
    %v3091 = vand.u32 %v2533, 4294901760
    %3092 = vmatprep.subr.mxu0 %v3091
    %v3093 = vand.u32 %v2531, 4294901760
    %3094 = vmatpush1.msra.mxu0 %v3093
    %v3095 = vand.u32 %v2540, 4294901760
    %3096 = vmatprep.subr.mxu0 %v3095
    %v3097 = vand.u32 %v2538, 4294901760
    %3098 = vmatpush1.msra.mxu0 %v3097
    %3099 = vmatprep.subr.mxu0 0.0
    %3100 = vmatpush1.msra.mxu0 0.0
    %3101 = vmatprep.subr.mxu0 0.0
    %3102 = vmatpush1.msra.mxu0 0.0
    %3103 = vmatprep.subr.mxu0 0.0
    %3104 = vmatpush1.msra.mxu0 0.0
    %3105 = vmatprep.subr.mxu0 0.0
    %3106 = vmatpush1.msra.mxu0 0.0
    %3107 = vmatprep.subr.mxu0 0.0
    %3108 = vmatpush1.msra.mxu0 0.0
    %3109 = vmatprep.subr.mxu0 0.0
    %3110 = vmatpush1.msra.mxu0 0.0
    %3111 = vmatprep.subr.mxu0 0.0
    %3112 = vmatpush1.msra.mxu0 0.0
    %3113 = vmatprep.subr.mxu0 0.0
    %3114 = vmatpush1.msra.mxu0 0.0
    %3115 = vmatprep.subr.mxu0 0.0
    %3116 = vmatpush1.msra.mxu0 0.0
    %3117 = vmatprep.subr.mxu0 0.0
    %3118 = vmatpush1.msra.mxu0 0.0
    %3119 = vmatprep.subr.mxu0 0.0
    %3120 = vmatpush1.msra.mxu0 0.0
    %3121 = vmatprep.subr.mxu0 0.0
    %3122 = vmatpush1.msra.mxu0 0.0
    %3123 = vmatprep.subr.mxu0 0.0
    %3124 = vmatpush1.msra.mxu0 0.0
    %3125 = vmatprep.subr.mxu0 0.0
    %3126 = vmatpush1.msra.mxu0 0.0
    %3127 = vmatprep.subr.mxu0 0.0
    %3128 = vmatpush1.msra.mxu0 0.0
    %3129 = vmatprep.subr.mxu0 0.0
    %3130 = vmatpush1.msra.mxu0 0.0
    %3131 = vmatprep.subr.mxu0 0.0
    %3132 = vmatpush1.msra.mxu0 0.0
    %3133 = vmatprep.subr.mxu0 0.0
    %3134 = vmatpush1.msra.mxu0 0.0
    %3135 = vmatprep.subr.mxu0 0.0
    %3136 = vmatpush1.msra.mxu0 0.0
    %3137 = vmatprep.subr.mxu0 0.0
    %3138 = vmatpush1.msra.mxu0 0.0
    %3139 = vmatprep.subr.mxu0 0.0
    %3140 = vmatpush1.msra.mxu0 0.0
    %3141 = vmatprep.subr.mxu0 0.0
    %3142 = vmatpush1.msra.mxu0 0.0
    %3143 = vmatprep.subr.mxu0 0.0
    %3144 = vmatpush1.msra.mxu0 0.0
    %3145 = vmatprep.subr.mxu0 0.0
    %3146 = vmatpush1.msra.mxu0 0.0
    %3147 = vmatprep.subr.mxu0 0.0
    %3148 = vmatpush1.msra.mxu0 0.0
    %3149 = vmatprep.subr.mxu0 0.0
    %3150 = vmatpush1.msra.mxu0 0.0
    %3151 = vmatprep.subr.mxu0 0.0
    %3152 = vmatpush1.msra.mxu0 0.0
    %3153 = vmatprep.subr.mxu0 0.0
    %3154 = vmatpush1.msra.mxu0 0.0
    %3155 = vmatprep.subr.mxu0 0.0
    %3156 = vmatpush1.msra.mxu0 0.0
    %3157 = vmatprep.subr.mxu0 0.0
    %3158 = vmatpush1.msra.mxu0 0.0
    %3159 = vmatprep.mubr.f32.mxu0 0.0
    %v3160 = vand.u32 %v2546, 4294901760
    %v3161 = vsub.f32 %v2546, %v3160
    %v3162 = vand.u32 %v3161, 4294901760
    %v3163 = vsub.f32 %v3161, %v3162
    %v3164 = vand.u32 %v3163, 4294901760
    %3165 = vmatmul.mubr.f32.gmra.mrb[0].mxu0 %v3164
    %v3166 = vpop.f32.mrb[0].mxu0
    %v3167 = vadd.f32 0.0, %v3166
    %v3168 = vpop.f32.mrb[0].mxu0
    %v3169 = vadd.f32 0.0, %v3168
    %3170 = vmatprep.mubr.f32.mxu0 0.0
    %v3171 = vand.u32 %v2549, 4294901760
    %v3172 = vsub.f32 %v2549, %v3171
    %v3173 = vand.u32 %v3172, 4294901760
    %v3174 = vsub.f32 %v3172, %v3173
    %v3175 = vand.u32 %v3174, 4294901760
    %3176 = vmatmul.mubr.f32.gmra.mrb[0].mxu0 %v3175
    %v3177 = vpop.f32.mrb[0].mxu0
    %v3178 = vadd.f32 0.0, %v3177
    %v3179 = vpop.f32.mrb[0].mxu0
    %v3180 = vadd.f32 0.0, %v3179
    %3181 = vdwg.mxu0
    %v3182 = vand.u32 %v2533, 4294901760
    %v3183 = vsub.f32 %v2533, %v3182
    %v3184 = vand.u32 %v3183, 4294901760
    %v3185 = vsub.f32 %v3183, %v3184
    %v3186 = vand.u32 %v3185, 4294901760
    %3187 = vmatprep.subr.mxu0 %v3186
    %v3188 = vand.u32 %v2531, 4294901760
    %v3189 = vsub.f32 %v2531, %v3188
    %v3190 = vand.u32 %v3189, 4294901760
    %v3191 = vsub.f32 %v3189, %v3190
    %v3192 = vand.u32 %v3191, 4294901760
    %3193 = vmatpush1.msra.mxu0 %v3192
    %v3194 = vand.u32 %v2540, 4294901760
    %v3195 = vsub.f32 %v2540, %v3194
    %v3196 = vand.u32 %v3195, 4294901760
    %v3197 = vsub.f32 %v3195, %v3196
    %v3198 = vand.u32 %v3197, 4294901760
    %3199 = vmatprep.subr.mxu0 %v3198
    %v3200 = vand.u32 %v2538, 4294901760
    %v3201 = vsub.f32 %v2538, %v3200
    %v3202 = vand.u32 %v3201, 4294901760
    %v3203 = vsub.f32 %v3201, %v3202
    %v3204 = vand.u32 %v3203, 4294901760
    %3205 = vmatpush1.msra.mxu0 %v3204
    %3206 = vmatprep.subr.mxu0 0.0
    %3207 = vmatpush1.msra.mxu0 0.0
    %3208 = vmatprep.subr.mxu0 0.0
    %3209 = vmatpush1.msra.mxu0 0.0
    %3210 = vmatprep.subr.mxu0 0.0
    %3211 = vmatpush1.msra.mxu0 0.0
    %3212 = vmatprep.subr.mxu0 0.0
    %3213 = vmatpush1.msra.mxu0 0.0
    %3214 = vmatprep.subr.mxu0 0.0
    %3215 = vmatpush1.msra.mxu0 0.0
    %3216 = vmatprep.subr.mxu0 0.0
    %3217 = vmatpush1.msra.mxu0 0.0
    %3218 = vmatprep.subr.mxu0 0.0
    %3219 = vmatpush1.msra.mxu0 0.0
    %3220 = vmatprep.subr.mxu0 0.0
    %3221 = vmatpush1.msra.mxu0 0.0
    %3222 = vmatprep.subr.mxu0 0.0
    %3223 = vmatpush1.msra.mxu0 0.0
    %3224 = vmatprep.subr.mxu0 0.0
    %3225 = vmatpush1.msra.mxu0 0.0
    %3226 = vmatprep.subr.mxu0 0.0
    %3227 = vmatpush1.msra.mxu0 0.0
    %3228 = vmatprep.subr.mxu0 0.0
    %3229 = vmatpush1.msra.mxu0 0.0
    %3230 = vmatprep.subr.mxu0 0.0
    %3231 = vmatpush1.msra.mxu0 0.0
    %3232 = vmatprep.subr.mxu0 0.0
    %3233 = vmatpush1.msra.mxu0 0.0
    %3234 = vmatprep.subr.mxu0 0.0
    %3235 = vmatpush1.msra.mxu0 0.0
    %3236 = vmatprep.subr.mxu0 0.0
    %3237 = vmatpush1.msra.mxu0 0.0
    %3238 = vmatprep.subr.mxu0 0.0
    %3239 = vmatpush1.msra.mxu0 0.0
    %3240 = vmatprep.subr.mxu0 0.0
    %3241 = vmatpush1.msra.mxu0 0.0
    %3242 = vmatprep.subr.mxu0 0.0
    %3243 = vmatpush1.msra.mxu0 0.0
    %3244 = vmatprep.subr.mxu0 0.0
    %3245 = vmatpush1.msra.mxu0 0.0
    %3246 = vmatprep.subr.mxu0 0.0
    %3247 = vmatpush1.msra.mxu0 0.0
    %3248 = vmatprep.subr.mxu0 0.0
    %3249 = vmatpush1.msra.mxu0 0.0
    %3250 = vmatprep.subr.mxu0 0.0
    %3251 = vmatpush1.msra.mxu0 0.0
    %3252 = vmatprep.subr.mxu0 0.0
    %3253 = vmatpush1.msra.mxu0 0.0
    %3254 = vmatprep.subr.mxu0 0.0
    %3255 = vmatpush1.msra.mxu0 0.0
    %3256 = vmatprep.subr.mxu0 0.0
    %3257 = vmatpush1.msra.mxu0 0.0
    %3258 = vmatprep.subr.mxu0 0.0
    %3259 = vmatpush1.msra.mxu0 0.0
    %3260 = vmatprep.subr.mxu0 0.0
    %3261 = vmatpush1.msra.mxu0 0.0
    %3262 = vmatprep.subr.mxu0 0.0
    %3263 = vmatpush1.msra.mxu0 0.0
    %3264 = vmatprep.subr.mxu0 0.0
    %3265 = vmatpush1.msra.mxu0 0.0
    %3266 = vmatprep.mubr.f32.mxu0 0.0
    %v3267 = vand.u32 %v2546, 4294901760
    %3268 = vmatmul.mubr.f32.gmra.mrb[0].mxu0 %v3267
    %v3269 = vpop.f32.mrb[0].mxu0
    %v3270 = vadd.f32 %v3167, %v3269
    %v3271 = vpop.f32.mrb[0].mxu0
    %v3272 = vadd.f32 %v3169, %v3271
    %3273 = vmatprep.mubr.f32.mxu0 0.0
    %v3274 = vand.u32 %v2549, 4294901760
    %3275 = vmatmul.mubr.f32.gmra.mrb[0].mxu0 %v3274
    %v3276 = vpop.f32.mrb[0].mxu0
    %v3277 = vadd.f32 %v3178, %v3276
    %v3278 = vpop.f32.mrb[0].mxu0
    %v3279 = vadd.f32 %v3180, %v3278
    %3280 = vdwg.mxu0
    %v3281 = vand.u32 %v2533, 4294901760
    %v3282 = vsub.f32 %v2533, %v3281
    %3283 = vmatprep.subr.mxu0 %v3282
    %v3284 = vand.u32 %v2531, 4294901760
    %v3285 = vsub.f32 %v2531, %v3284
    %3286 = vmatpush1.msra.mxu0 %v3285
    %v3287 = vand.u32 %v2540, 4294901760
    %v3288 = vsub.f32 %v2540, %v3287
    %3289 = vmatprep.subr.mxu0 %v3288
    %v3290 = vand.u32 %v2538, 4294901760
    %v3291 = vsub.f32 %v2538, %v3290
    %3292 = vmatpush1.msra.mxu0 %v3291
    %3293 = vmatprep.subr.mxu0 0.0
    %3294 = vmatpush1.msra.mxu0 0.0
    %3295 = vmatprep.subr.mxu0 0.0
    %3296 = vmatpush1.msra.mxu0 0.0
    %3297 = vmatprep.subr.mxu0 0.0
    %3298 = vmatpush1.msra.mxu0 0.0
    %3299 = vmatprep.subr.mxu0 0.0
    %3300 = vmatpush1.msra.mxu0 0.0
    %3301 = vmatprep.subr.mxu0 0.0
    %3302 = vmatpush1.msra.mxu0 0.0
    %3303 = vmatprep.subr.mxu0 0.0
    %3304 = vmatpush1.msra.mxu0 0.0
    %3305 = vmatprep.subr.mxu0 0.0
    %3306 = vmatpush1.msra.mxu0 0.0
    %3307 = vmatprep.subr.mxu0 0.0
    %3308 = vmatpush1.msra.mxu0 0.0
    %3309 = vmatprep.subr.mxu0 0.0
    %3310 = vmatpush1.msra.mxu0 0.0
    %3311 = vmatprep.subr.mxu0 0.0
    %3312 = vmatpush1.msra.mxu0 0.0
    %3313 = vmatprep.subr.mxu0 0.0
    %3314 = vmatpush1.msra.mxu0 0.0
    %3315 = vmatprep.subr.mxu0 0.0
    %3316 = vmatpush1.msra.mxu0 0.0
    %3317 = vmatprep.subr.mxu0 0.0
    %3318 = vmatpush1.msra.mxu0 0.0
    %3319 = vmatprep.subr.mxu0 0.0
    %3320 = vmatpush1.msra.mxu0 0.0
    %3321 = vmatprep.subr.mxu0 0.0
    %3322 = vmatpush1.msra.mxu0 0.0
    %3323 = vmatprep.subr.mxu0 0.0
    %3324 = vmatpush1.msra.mxu0 0.0
    %3325 = vmatprep.subr.mxu0 0.0
    %3326 = vmatpush1.msra.mxu0 0.0
    %3327 = vmatprep.subr.mxu0 0.0
    %3328 = vmatpush1.msra.mxu0 0.0
    %3329 = vmatprep.subr.mxu0 0.0
    %3330 = vmatpush1.msra.mxu0 0.0
    %3331 = vmatprep.subr.mxu0 0.0
    %3332 = vmatpush1.msra.mxu0 0.0
    %3333 = vmatprep.subr.mxu0 0.0
    %3334 = vmatpush1.msra.mxu0 0.0
    %3335 = vmatprep.subr.mxu0 0.0
    %3336 = vmatpush1.msra.mxu0 0.0
    %3337 = vmatprep.subr.mxu0 0.0
    %3338 = vmatpush1.msra.mxu0 0.0
    %3339 = vmatprep.subr.mxu0 0.0
    %3340 = vmatpush1.msra.mxu0 0.0
    %3341 = vmatprep.subr.mxu0 0.0
    %3342 = vmatpush1.msra.mxu0 0.0
    %3343 = vmatprep.subr.mxu0 0.0
    %3344 = vmatpush1.msra.mxu0 0.0
    %3345 = vmatprep.subr.mxu0 0.0
    %3346 = vmatpush1.msra.mxu0 0.0
    %3347 = vmatprep.subr.mxu0 0.0
    %3348 = vmatpush1.msra.mxu0 0.0
    %3349 = vmatprep.subr.mxu0 0.0
    %3350 = vmatpush1.msra.mxu0 0.0
    %3351 = vmatprep.subr.mxu0 0.0
    %3352 = vmatpush1.msra.mxu0 0.0
    %3353 = vmatprep.mubr.f32.mxu0 0.0
    %v3354 = vand.u32 %v2546, 4294901760
    %v3355 = vsub.f32 %v2546, %v3354
    %3356 = vmatmul.mubr.f32.gmra.mrb[0].mxu0 %v3355
    %v3357 = vpop.f32.mrb[0].mxu0
    %v3358 = vadd.f32 %v3270, %v3357
    %v3359 = vpop.f32.mrb[0].mxu0
    %v3360 = vadd.f32 %v3272, %v3359
    %3361 = vmatprep.mubr.f32.mxu0 0.0
    %v3362 = vand.u32 %v2549, 4294901760
    %v3363 = vsub.f32 %v2549, %v3362
    %3364 = vmatmul.mubr.f32.gmra.mrb[0].mxu0 %v3363
    %v3365 = vpop.f32.mrb[0].mxu0
    %v3366 = vadd.f32 %v3277, %v3365
    %v3367 = vpop.f32.mrb[0].mxu0
    %v3368 = vadd.f32 %v3279, %v3367
    %3369 = vdwg.mxu0
    %v3370 = vand.u32 %v2533, 4294901760
    %3371 = vmatprep.subr.mxu0 %v3370
    %v3372 = vand.u32 %v2531, 4294901760
    %3373 = vmatpush1.msra.mxu0 %v3372
    %v3374 = vand.u32 %v2540, 4294901760
    %3375 = vmatprep.subr.mxu0 %v3374
    %v3376 = vand.u32 %v2538, 4294901760
    %3377 = vmatpush1.msra.mxu0 %v3376
    %3378 = vmatprep.subr.mxu0 0.0
    %3379 = vmatpush1.msra.mxu0 0.0
    %3380 = vmatprep.subr.mxu0 0.0
    %3381 = vmatpush1.msra.mxu0 0.0
    %3382 = vmatprep.subr.mxu0 0.0
    %3383 = vmatpush1.msra.mxu0 0.0
    %3384 = vmatprep.subr.mxu0 0.0
    %3385 = vmatpush1.msra.mxu0 0.0
    %3386 = vmatprep.subr.mxu0 0.0
    %3387 = vmatpush1.msra.mxu0 0.0
    %3388 = vmatprep.subr.mxu0 0.0
    %3389 = vmatpush1.msra.mxu0 0.0
    %3390 = vmatprep.subr.mxu0 0.0
    %3391 = vmatpush1.msra.mxu0 0.0
    %3392 = vmatprep.subr.mxu0 0.0
    %3393 = vmatpush1.msra.mxu0 0.0
    %3394 = vmatprep.subr.mxu0 0.0
    %3395 = vmatpush1.msra.mxu0 0.0
    %3396 = vmatprep.subr.mxu0 0.0
    %3397 = vmatpush1.msra.mxu0 0.0
    %3398 = vmatprep.subr.mxu0 0.0
    %3399 = vmatpush1.msra.mxu0 0.0
    %3400 = vmatprep.subr.mxu0 0.0
    %3401 = vmatpush1.msra.mxu0 0.0
    %3402 = vmatprep.subr.mxu0 0.0
    %3403 = vmatpush1.msra.mxu0 0.0
    %3404 = vmatprep.subr.mxu0 0.0
    %3405 = vmatpush1.msra.mxu0 0.0
    %3406 = vmatprep.subr.mxu0 0.0
    %3407 = vmatpush1.msra.mxu0 0.0
    %3408 = vmatprep.subr.mxu0 0.0
    %3409 = vmatpush1.msra.mxu0 0.0
    %3410 = vmatprep.subr.mxu0 0.0
    %3411 = vmatpush1.msra.mxu0 0.0
    %3412 = vmatprep.subr.mxu0 0.0
    %3413 = vmatpush1.msra.mxu0 0.0
    %3414 = vmatprep.subr.mxu0 0.0
    %3415 = vmatpush1.msra.mxu0 0.0
    %3416 = vmatprep.subr.mxu0 0.0
    %3417 = vmatpush1.msra.mxu0 0.0
    %3418 = vmatprep.subr.mxu0 0.0
    %3419 = vmatpush1.msra.mxu0 0.0
    %3420 = vmatprep.subr.mxu0 0.0
    %3421 = vmatpush1.msra.mxu0 0.0
    %3422 = vmatprep.subr.mxu0 0.0
    %3423 = vmatpush1.msra.mxu0 0.0
    %3424 = vmatprep.subr.mxu0 0.0
    %3425 = vmatpush1.msra.mxu0 0.0
    %3426 = vmatprep.subr.mxu0 0.0
    %3427 = vmatpush1.msra.mxu0 0.0
    %3428 = vmatprep.subr.mxu0 0.0
    %3429 = vmatpush1.msra.mxu0 0.0
    %3430 = vmatprep.subr.mxu0 0.0
    %3431 = vmatpush1.msra.mxu0 0.0
    %3432 = vmatprep.subr.mxu0 0.0
    %3433 = vmatpush1.msra.mxu0 0.0
    %3434 = vmatprep.subr.mxu0 0.0
    %3435 = vmatpush1.msra.mxu0 0.0
    %3436 = vmatprep.subr.mxu0 0.0
    %3437 = vmatpush1.msra.mxu0 0.0
    %3438 = vmatprep.mubr.f32.mxu0 0.0
    %v3439 = vand.u32 %v2546, 4294901760
    %v3440 = vsub.f32 %v2546, %v3439
    %v3441 = vand.u32 %v3440, 4294901760
    %3442 = vmatmul.mubr.f32.gmra.mrb[0].mxu0 %v3441
    %v3443 = vpop.f32.mrb[0].mxu0
    %v3444 = vadd.f32 %v3358, %v3443
    %v3445 = vpop.f32.mrb[0].mxu0
    %v3446 = vadd.f32 %v3360, %v3445
    %3447 = vmatprep.mubr.f32.mxu0 0.0
    %v3448 = vand.u32 %v2549, 4294901760
    %v3449 = vsub.f32 %v2549, %v3448
    %v3450 = vand.u32 %v3449, 4294901760
    %3451 = vmatmul.mubr.f32.gmra.mrb[0].mxu0 %v3450
    %v3452 = vpop.f32.mrb[0].mxu0
    %v3453 = vadd.f32 %v3366, %v3452
    %v3454 = vpop.f32.mrb[0].mxu0
    %v3455 = vadd.f32 %v3368, %v3454
    %3456 = vdwg.mxu0
    %v3457 = vand.u32 %v2533, 4294901760
    %v3458 = vsub.f32 %v2533, %v3457
    %v3459 = vand.u32 %v3458, 4294901760
    %3460 = vmatprep.subr.mxu0 %v3459
    %v3461 = vand.u32 %v2531, 4294901760
    %v3462 = vsub.f32 %v2531, %v3461
    %v3463 = vand.u32 %v3462, 4294901760
    %3464 = vmatpush1.msra.mxu0 %v3463
    %v3465 = vand.u32 %v2540, 4294901760
    %v3466 = vsub.f32 %v2540, %v3465
    %v3467 = vand.u32 %v3466, 4294901760
    %3468 = vmatprep.subr.mxu0 %v3467
    %v3469 = vand.u32 %v2538, 4294901760
    %v3470 = vsub.f32 %v2538, %v3469
    %v3471 = vand.u32 %v3470, 4294901760
    %3472 = vmatpush1.msra.mxu0 %v3471
    %3473 = vmatprep.subr.mxu0 0.0
    %3474 = vmatpush1.msra.mxu0 0.0
    %3475 = vmatprep.subr.mxu0 0.0
    %3476 = vmatpush1.msra.mxu0 0.0
    %3477 = vmatprep.subr.mxu0 0.0
    %3478 = vmatpush1.msra.mxu0 0.0
    %3479 = vmatprep.subr.mxu0 0.0
    %3480 = vmatpush1.msra.mxu0 0.0
    %3481 = vmatprep.subr.mxu0 0.0
    %3482 = vmatpush1.msra.mxu0 0.0
    %3483 = vmatprep.subr.mxu0 0.0
    %3484 = vmatpush1.msra.mxu0 0.0
    %3485 = vmatprep.subr.mxu0 0.0
    %3486 = vmatpush1.msra.mxu0 0.0
    %3487 = vmatprep.subr.mxu0 0.0
    %3488 = vmatpush1.msra.mxu0 0.0
    %3489 = vmatprep.subr.mxu0 0.0
    %3490 = vmatpush1.msra.mxu0 0.0
    %3491 = vmatprep.subr.mxu0 0.0
    %3492 = vmatpush1.msra.mxu0 0.0
    %3493 = vmatprep.subr.mxu0 0.0
    %3494 = vmatpush1.msra.mxu0 0.0
    %3495 = vmatprep.subr.mxu0 0.0
    %3496 = vmatpush1.msra.mxu0 0.0
    %3497 = vmatprep.subr.mxu0 0.0
    %3498 = vmatpush1.msra.mxu0 0.0
    %3499 = vmatprep.subr.mxu0 0.0
    %3500 = vmatpush1.msra.mxu0 0.0
    %3501 = vmatprep.subr.mxu0 0.0
    %3502 = vmatpush1.msra.mxu0 0.0
    %3503 = vmatprep.subr.mxu0 0.0
    %3504 = vmatpush1.msra.mxu0 0.0
    %3505 = vmatprep.subr.mxu0 0.0
    %3506 = vmatpush1.msra.mxu0 0.0
    %3507 = vmatprep.subr.mxu0 0.0
    %3508 = vmatpush1.msra.mxu0 0.0
    %3509 = vmatprep.subr.mxu0 0.0
    %3510 = vmatpush1.msra.mxu0 0.0
    %3511 = vmatprep.subr.mxu0 0.0
    %3512 = vmatpush1.msra.mxu0 0.0
    %3513 = vmatprep.subr.mxu0 0.0
    %3514 = vmatpush1.msra.mxu0 0.0
    %3515 = vmatprep.subr.mxu0 0.0
    %3516 = vmatpush1.msra.mxu0 0.0
    %3517 = vmatprep.subr.mxu0 0.0
    %3518 = vmatpush1.msra.mxu0 0.0
    %3519 = vmatprep.subr.mxu0 0.0
    %3520 = vmatpush1.msra.mxu0 0.0
    %3521 = vmatprep.subr.mxu0 0.0
    %3522 = vmatpush1.msra.mxu0 0.0
    %3523 = vmatprep.subr.mxu0 0.0
    %3524 = vmatpush1.msra.mxu0 0.0
    %3525 = vmatprep.subr.mxu0 0.0
    %3526 = vmatpush1.msra.mxu0 0.0
    %3527 = vmatprep.subr.mxu0 0.0
    %3528 = vmatpush1.msra.mxu0 0.0
    %3529 = vmatprep.subr.mxu0 0.0
    %3530 = vmatpush1.msra.mxu0 0.0
    %3531 = vmatprep.subr.mxu0 0.0
    %3532 = vmatpush1.msra.mxu0 0.0
    %3533 = vmatprep.mubr.f32.mxu0 0.0
    %v3534 = vand.u32 %v2546, 4294901760
    %3535 = vmatmul.mubr.f32.gmra.mrb[0].mxu0 %v3534
    %v3536 = vpop.f32.mrb[0].mxu0
    %v3537 = vadd.f32 %v3444, %v3536
    %v3538 = vpop.f32.mrb[0].mxu0
    %v3539 = vadd.f32 %v3446, %v3538
    %3540 = vmatprep.mubr.f32.mxu0 0.0
    %v3541 = vand.u32 %v2549, 4294901760
    %3542 = vmatmul.mubr.f32.gmra.mrb[0].mxu0 %v3541
    %v3543 = vpop.f32.mrb[0].mxu0
    %v3544 = vadd.f32 %v3453, %v3543
    %v3545 = vpop.f32.mrb[0].mxu0
    %v3546 = vadd.f32 %v3455, %v3545
    %3547 = vdwg.mxu0
    %v3548 = vand.u32 %v2533, 4294901760
    %3549 = vmatprep.subr.mxu0 %v3548
    %v3550 = vand.u32 %v2531, 4294901760
    %3551 = vmatpush1.msra.mxu0 %v3550
    %v3552 = vand.u32 %v2540, 4294901760
    %3553 = vmatprep.subr.mxu0 %v3552
    %v3554 = vand.u32 %v2538, 4294901760
    %3555 = vmatpush1.msra.mxu0 %v3554
    %3556 = vmatprep.subr.mxu0 0.0
    %3557 = vmatpush1.msra.mxu0 0.0
    %3558 = vmatprep.subr.mxu0 0.0
    %3559 = vmatpush1.msra.mxu0 0.0
    %3560 = vmatprep.subr.mxu0 0.0
    %3561 = vmatpush1.msra.mxu0 0.0
    %3562 = vmatprep.subr.mxu0 0.0
    %3563 = vmatpush1.msra.mxu0 0.0
    %3564 = vmatprep.subr.mxu0 0.0
    %3565 = vmatpush1.msra.mxu0 0.0
    %3566 = vmatprep.subr.mxu0 0.0
    %3567 = vmatpush1.msra.mxu0 0.0
    %3568 = vmatprep.subr.mxu0 0.0
    %3569 = vmatpush1.msra.mxu0 0.0
    %3570 = vmatprep.subr.mxu0 0.0
    %3571 = vmatpush1.msra.mxu0 0.0
    %3572 = vmatprep.subr.mxu0 0.0
    %3573 = vmatpush1.msra.mxu0 0.0
    %3574 = vmatprep.subr.mxu0 0.0
    %3575 = vmatpush1.msra.mxu0 0.0
    %3576 = vmatprep.subr.mxu0 0.0
    %3577 = vmatpush1.msra.mxu0 0.0
    %3578 = vmatprep.subr.mxu0 0.0
    %3579 = vmatpush1.msra.mxu0 0.0
    %3580 = vmatprep.subr.mxu0 0.0
    %3581 = vmatpush1.msra.mxu0 0.0
    %3582 = vmatprep.subr.mxu0 0.0
    %3583 = vmatpush1.msra.mxu0 0.0
    %3584 = vmatprep.subr.mxu0 0.0
    %3585 = vmatpush1.msra.mxu0 0.0
    %3586 = vmatprep.subr.mxu0 0.0
    %3587 = vmatpush1.msra.mxu0 0.0
    %3588 = vmatprep.subr.mxu0 0.0
    %3589 = vmatpush1.msra.mxu0 0.0
    %3590 = vmatprep.subr.mxu0 0.0
    %3591 = vmatpush1.msra.mxu0 0.0
    %3592 = vmatprep.subr.mxu0 0.0
    %3593 = vmatpush1.msra.mxu0 0.0
    %3594 = vmatprep.subr.mxu0 0.0
    %3595 = vmatpush1.msra.mxu0 0.0
    %3596 = vmatprep.subr.mxu0 0.0
    %3597 = vmatpush1.msra.mxu0 0.0
    %3598 = vmatprep.subr.mxu0 0.0
    %3599 = vmatpush1.msra.mxu0 0.0
    %3600 = vmatprep.subr.mxu0 0.0
    %3601 = vmatpush1.msra.mxu0 0.0
    %3602 = vmatprep.subr.mxu0 0.0
    %3603 = vmatpush1.msra.mxu0 0.0
    %3604 = vmatprep.subr.mxu0 0.0
    %3605 = vmatpush1.msra.mxu0 0.0
    %3606 = vmatprep.subr.mxu0 0.0
    %3607 = vmatpush1.msra.mxu0 0.0
    %3608 = vmatprep.subr.mxu0 0.0
    %3609 = vmatpush1.msra.mxu0 0.0
    %3610 = vmatprep.subr.mxu0 0.0
    %3611 = vmatpush1.msra.mxu0 0.0
    %3612 = vmatprep.subr.mxu0 0.0
    %3613 = vmatpush1.msra.mxu0 0.0
    %3614 = vmatprep.subr.mxu0 0.0
    %3615 = vmatpush1.msra.mxu0 0.0
    %3616 = vmatprep.mubr.f32.mxu0 0.0
    %v3617 = vand.u32 %v2546, 4294901760
    %3618 = vmatmul.mubr.f32.gmra.mrb[0].mxu0 %v3617
    %v3619 = vpop.f32.mrb[0].mxu0
    %v3620 = vadd.f32 %v3537, %v3619
    %v3621 = vpop.f32.mrb[0].mxu0
    %v3622 = vadd.f32 %v3539, %v3621
    %3623 = vmatprep.mubr.f32.mxu0 0.0
    %v3624 = vand.u32 %v2549, 4294901760
    %3625 = vmatmul.mubr.f32.gmra.mrb[0].mxu0 %v3624
    %v3626 = vpop.f32.mrb[0].mxu0
    %v3627 = vadd.f32 %v3544, %v3626
    %v3628 = vpop.f32.mrb[0].mxu0
    %v3629 = vadd.f32 %v3546, %v3628
    %3630 = vdwg.mxu0
    %v3631 = vadd.f32 %v3080, %v3082
    %v3632 = vadd.f32 %v3631, %v3620
    %v3633 = vadd.f32 %v3632, %v3622
    %3634 = vadd.xlane.f32.xlu0 %v3633
    %v3635 = vpop.xlane.xlu0 %3634
    %v3636 = vadd.f32 %v3087, %v3089
    %v3637 = vadd.f32 %v3636, %v3627
    %v3638 = vadd.f32 %v3637, %v3629
    %3639 = vadd.xlane.f32.xlu0 %v3638
    %v3640 = vpop.xlane.xlu0 %3639
    %v3641 = vmul.f32 %v3635, %v1454
    %v3642 = vmul.f32 %v3640, %v1454
    %v3643 = vsub.f32 %v2017, %v3641
    %v3644 = vsub.f32 %v2019, %v3641
    %v3645 = vsub.f32 %v2531, %v3641
    %v3646 = vsub.f32 %v2533, %v3641
    %v3647 = vsub.f32 %v2024, %v3642
    %v3648 = vsub.f32 %v2026, %v3642
    %v3649 = vsub.f32 %v2538, %v3642
    %v3650 = vsub.f32 %v2540, %v3642
    %v3651 = vmul.f32 %v3643, %v3643
    %v3652 = vmul.f32 %v3644, %v3644
    %v3653 = vmul.f32 %v3645, %v3645
    %v3654 = vmul.f32 %v3646, %v3646
    %v3655 = vmul.f32 %v3647, %v3647
    %v3656 = vmul.f32 %v3648, %v3648
    %v3657 = vmul.f32 %v3649, %v3649
    %v3658 = vmul.f32 %v3650, %v3650
    %v3659 = vand.u32 %v3652, 4294901760
    %3660 = vmatprep.subr.mxu0 %v3659
    %v3661 = vand.u32 %v3651, 4294901760
    %3662 = vmatpush1.msra.mxu0 %v3661
    %v3663 = vand.u32 %v3656, 4294901760
    %3664 = vmatprep.subr.mxu0 %v3663
    %v3665 = vand.u32 %v3655, 4294901760
    %3666 = vmatpush1.msra.mxu0 %v3665
    %3667 = vmatprep.subr.mxu0 0.0
    %3668 = vmatpush1.msra.mxu0 0.0
    %3669 = vmatprep.subr.mxu0 0.0
    %3670 = vmatpush1.msra.mxu0 0.0
    %3671 = vmatprep.subr.mxu0 0.0
    %3672 = vmatpush1.msra.mxu0 0.0
    %3673 = vmatprep.subr.mxu0 0.0
    %3674 = vmatpush1.msra.mxu0 0.0
    %3675 = vmatprep.subr.mxu0 0.0
    %3676 = vmatpush1.msra.mxu0 0.0
    %3677 = vmatprep.subr.mxu0 0.0
    %3678 = vmatpush1.msra.mxu0 0.0
    %3679 = vmatprep.subr.mxu0 0.0
    %3680 = vmatpush1.msra.mxu0 0.0
    %3681 = vmatprep.subr.mxu0 0.0
    %3682 = vmatpush1.msra.mxu0 0.0
    %3683 = vmatprep.subr.mxu0 0.0
    %3684 = vmatpush1.msra.mxu0 0.0
    %3685 = vmatprep.subr.mxu0 0.0
    %3686 = vmatpush1.msra.mxu0 0.0
    %3687 = vmatprep.subr.mxu0 0.0
    %3688 = vmatpush1.msra.mxu0 0.0
    %3689 = vmatprep.subr.mxu0 0.0
    %3690 = vmatpush1.msra.mxu0 0.0
    %3691 = vmatprep.subr.mxu0 0.0
    %3692 = vmatpush1.msra.mxu0 0.0
    %3693 = vmatprep.subr.mxu0 0.0
    %3694 = vmatpush1.msra.mxu0 0.0
    %3695 = vmatprep.subr.mxu0 0.0
    %3696 = vmatpush1.msra.mxu0 0.0
    %3697 = vmatprep.subr.mxu0 0.0
    %3698 = vmatpush1.msra.mxu0 0.0
    %3699 = vmatprep.subr.mxu0 0.0
    %3700 = vmatpush1.msra.mxu0 0.0
    %3701 = vmatprep.subr.mxu0 0.0
    %3702 = vmatpush1.msra.mxu0 0.0
    %3703 = vmatprep.subr.mxu0 0.0
    %3704 = vmatpush1.msra.mxu0 0.0
    %3705 = vmatprep.subr.mxu0 0.0
    %3706 = vmatpush1.msra.mxu0 0.0
    %3707 = vmatprep.subr.mxu0 0.0
    %3708 = vmatpush1.msra.mxu0 0.0
    %3709 = vmatprep.subr.mxu0 0.0
    %3710 = vmatpush1.msra.mxu0 0.0
    %3711 = vmatprep.subr.mxu0 0.0
    %3712 = vmatpush1.msra.mxu0 0.0
    %3713 = vmatprep.subr.mxu0 0.0
    %3714 = vmatpush1.msra.mxu0 0.0
    %3715 = vmatprep.subr.mxu0 0.0
    %3716 = vmatpush1.msra.mxu0 0.0
    %3717 = vmatprep.subr.mxu0 0.0
    %3718 = vmatpush1.msra.mxu0 0.0
    %3719 = vmatprep.subr.mxu0 0.0
    %3720 = vmatpush1.msra.mxu0 0.0
    %3721 = vmatprep.subr.mxu0 0.0
    %3722 = vmatpush1.msra.mxu0 0.0
    %3723 = vmatprep.subr.mxu0 0.0
    %3724 = vmatpush1.msra.mxu0 0.0
    %3725 = vmatprep.subr.mxu0 0.0
    %3726 = vmatpush1.msra.mxu0 0.0
    %3727 = vmatprep.mubr.f32.mxu0 0.0
    %v3728 = vand.u32 %v2546, 4294901760
    %v3729 = vsub.f32 %v2546, %v3728
    %v3730 = vand.u32 %v3729, 4294901760
    %v3731 = vsub.f32 %v3729, %v3730
    %v3732 = vand.u32 %v3731, 4294901760
    %3733 = vmatmul.mubr.f32.gmra.mrb[0].mxu0 %v3732
    %v3734 = vpop.f32.mrb[0].mxu0
    %v3735 = vadd.f32 0.0, %v3734
    %v3736 = vpop.f32.mrb[0].mxu0
    %v3737 = vadd.f32 0.0, %v3736
    %3738 = vmatprep.mubr.f32.mxu0 0.0
    %v3739 = vand.u32 %v2549, 4294901760
    %v3740 = vsub.f32 %v2549, %v3739
    %v3741 = vand.u32 %v3740, 4294901760
    %v3742 = vsub.f32 %v3740, %v3741
    %v3743 = vand.u32 %v3742, 4294901760
    %3744 = vmatmul.mubr.f32.gmra.mrb[0].mxu0 %v3743
    %v3745 = vpop.f32.mrb[0].mxu0
    %v3746 = vadd.f32 0.0, %v3745
    %v3747 = vpop.f32.mrb[0].mxu0
    %v3748 = vadd.f32 0.0, %v3747
    %3749 = vdwg.mxu0
    %v3750 = vand.u32 %v3652, 4294901760
    %v3751 = vsub.f32 %v3652, %v3750
    %v3752 = vand.u32 %v3751, 4294901760
    %v3753 = vsub.f32 %v3751, %v3752
    %v3754 = vand.u32 %v3753, 4294901760
    %3755 = vmatprep.subr.mxu0 %v3754
    %v3756 = vand.u32 %v3651, 4294901760
    %v3757 = vsub.f32 %v3651, %v3756
    %v3758 = vand.u32 %v3757, 4294901760
    %v3759 = vsub.f32 %v3757, %v3758
    %v3760 = vand.u32 %v3759, 4294901760
    %3761 = vmatpush1.msra.mxu0 %v3760
    %v3762 = vand.u32 %v3656, 4294901760
    %v3763 = vsub.f32 %v3656, %v3762
    %v3764 = vand.u32 %v3763, 4294901760
    %v3765 = vsub.f32 %v3763, %v3764
    %v3766 = vand.u32 %v3765, 4294901760
    %3767 = vmatprep.subr.mxu0 %v3766
    %v3768 = vand.u32 %v3655, 4294901760
    %v3769 = vsub.f32 %v3655, %v3768
    %v3770 = vand.u32 %v3769, 4294901760
    %v3771 = vsub.f32 %v3769, %v3770
    %v3772 = vand.u32 %v3771, 4294901760
    %3773 = vmatpush1.msra.mxu0 %v3772
    %3774 = vmatprep.subr.mxu0 0.0
    %3775 = vmatpush1.msra.mxu0 0.0
    %3776 = vmatprep.subr.mxu0 0.0
    %3777 = vmatpush1.msra.mxu0 0.0
    %3778 = vmatprep.subr.mxu0 0.0
    %3779 = vmatpush1.msra.mxu0 0.0
    %3780 = vmatprep.subr.mxu0 0.0
    %3781 = vmatpush1.msra.mxu0 0.0
    %3782 = vmatprep.subr.mxu0 0.0
    %3783 = vmatpush1.msra.mxu0 0.0
    %3784 = vmatprep.subr.mxu0 0.0
    %3785 = vmatpush1.msra.mxu0 0.0
    %3786 = vmatprep.subr.mxu0 0.0
    %3787 = vmatpush1.msra.mxu0 0.0
    %3788 = vmatprep.subr.mxu0 0.0
    %3789 = vmatpush1.msra.mxu0 0.0
    %3790 = vmatprep.subr.mxu0 0.0
    %3791 = vmatpush1.msra.mxu0 0.0
    %3792 = vmatprep.subr.mxu0 0.0
    %3793 = vmatpush1.msra.mxu0 0.0
    %3794 = vmatprep.subr.mxu0 0.0
    %3795 = vmatpush1.msra.mxu0 0.0
    %3796 = vmatprep.subr.mxu0 0.0
    %3797 = vmatpush1.msra.mxu0 0.0
    %3798 = vmatprep.subr.mxu0 0.0
    %3799 = vmatpush1.msra.mxu0 0.0
    %3800 = vmatprep.subr.mxu0 0.0
    %3801 = vmatpush1.msra.mxu0 0.0
    %3802 = vmatprep.subr.mxu0 0.0
    %3803 = vmatpush1.msra.mxu0 0.0
    %3804 = vmatprep.subr.mxu0 0.0
    %3805 = vmatpush1.msra.mxu0 0.0
    %3806 = vmatprep.subr.mxu0 0.0
    %3807 = vmatpush1.msra.mxu0 0.0
    %3808 = vmatprep.subr.mxu0 0.0
    %3809 = vmatpush1.msra.mxu0 0.0
    %3810 = vmatprep.subr.mxu0 0.0
    %3811 = vmatpush1.msra.mxu0 0.0
    %3812 = vmatprep.subr.mxu0 0.0
    %3813 = vmatpush1.msra.mxu0 0.0
    %3814 = vmatprep.subr.mxu0 0.0
    %3815 = vmatpush1.msra.mxu0 0.0
    %3816 = vmatprep.subr.mxu0 0.0
    %3817 = vmatpush1.msra.mxu0 0.0
    %3818 = vmatprep.subr.mxu0 0.0
    %3819 = vmatpush1.msra.mxu0 0.0
    %3820 = vmatprep.subr.mxu0 0.0
    %3821 = vmatpush1.msra.mxu0 0.0
    %3822 = vmatprep.subr.mxu0 0.0
    %3823 = vmatpush1.msra.mxu0 0.0
    %3824 = vmatprep.subr.mxu0 0.0
    %3825 = vmatpush1.msra.mxu0 0.0
    %3826 = vmatprep.subr.mxu0 0.0
    %3827 = vmatpush1.msra.mxu0 0.0
    %3828 = vmatprep.subr.mxu0 0.0
    %3829 = vmatpush1.msra.mxu0 0.0
    %3830 = vmatprep.subr.mxu0 0.0
    %3831 = vmatpush1.msra.mxu0 0.0
    %3832 = vmatprep.subr.mxu0 0.0
    %3833 = vmatpush1.msra.mxu0 0.0
    %3834 = vmatprep.mubr.f32.mxu0 0.0
    %v3835 = vand.u32 %v2546, 4294901760
    %3836 = vmatmul.mubr.f32.gmra.mrb[0].mxu0 %v3835
    %v3837 = vpop.f32.mrb[0].mxu0
    %v3838 = vadd.f32 %v3735, %v3837
    %v3839 = vpop.f32.mrb[0].mxu0
    %v3840 = vadd.f32 %v3737, %v3839
    %3841 = vmatprep.mubr.f32.mxu0 0.0
    %v3842 = vand.u32 %v2549, 4294901760
    %3843 = vmatmul.mubr.f32.gmra.mrb[0].mxu0 %v3842
    %v3844 = vpop.f32.mrb[0].mxu0
    %v3845 = vadd.f32 %v3746, %v3844
    %v3846 = vpop.f32.mrb[0].mxu0
    %v3847 = vadd.f32 %v3748, %v3846
    %3848 = vdwg.mxu0
    %v3849 = vand.u32 %v3652, 4294901760
    %v3850 = vsub.f32 %v3652, %v3849
    %3851 = vmatprep.subr.mxu0 %v3850
    %v3852 = vand.u32 %v3651, 4294901760
    %v3853 = vsub.f32 %v3651, %v3852
    %3854 = vmatpush1.msra.mxu0 %v3853
    %v3855 = vand.u32 %v3656, 4294901760
    %v3856 = vsub.f32 %v3656, %v3855
    %3857 = vmatprep.subr.mxu0 %v3856
    %v3858 = vand.u32 %v3655, 4294901760
    %v3859 = vsub.f32 %v3655, %v3858
    %3860 = vmatpush1.msra.mxu0 %v3859
    %3861 = vmatprep.subr.mxu0 0.0
    %3862 = vmatpush1.msra.mxu0 0.0
    %3863 = vmatprep.subr.mxu0 0.0
    %3864 = vmatpush1.msra.mxu0 0.0
    %3865 = vmatprep.subr.mxu0 0.0
    %3866 = vmatpush1.msra.mxu0 0.0
    %3867 = vmatprep.subr.mxu0 0.0
    %3868 = vmatpush1.msra.mxu0 0.0
    %3869 = vmatprep.subr.mxu0 0.0
    %3870 = vmatpush1.msra.mxu0 0.0
    %3871 = vmatprep.subr.mxu0 0.0
    %3872 = vmatpush1.msra.mxu0 0.0
    %3873 = vmatprep.subr.mxu0 0.0
    %3874 = vmatpush1.msra.mxu0 0.0
    %3875 = vmatprep.subr.mxu0 0.0
    %3876 = vmatpush1.msra.mxu0 0.0
    %3877 = vmatprep.subr.mxu0 0.0
    %3878 = vmatpush1.msra.mxu0 0.0
    %3879 = vmatprep.subr.mxu0 0.0
    %3880 = vmatpush1.msra.mxu0 0.0
    %3881 = vmatprep.subr.mxu0 0.0
    %3882 = vmatpush1.msra.mxu0 0.0
    %3883 = vmatprep.subr.mxu0 0.0
    %3884 = vmatpush1.msra.mxu0 0.0
    %3885 = vmatprep.subr.mxu0 0.0
    %3886 = vmatpush1.msra.mxu0 0.0
    %3887 = vmatprep.subr.mxu0 0.0
    %3888 = vmatpush1.msra.mxu0 0.0
    %3889 = vmatprep.subr.mxu0 0.0
    %3890 = vmatpush1.msra.mxu0 0.0
    %3891 = vmatprep.subr.mxu0 0.0
    %3892 = vmatpush1.msra.mxu0 0.0
    %3893 = vmatprep.subr.mxu0 0.0
    %3894 = vmatpush1.msra.mxu0 0.0
    %3895 = vmatprep.subr.mxu0 0.0
    %3896 = vmatpush1.msra.mxu0 0.0
    %3897 = vmatprep.subr.mxu0 0.0
    %3898 = vmatpush1.msra.mxu0 0.0
    %3899 = vmatprep.subr.mxu0 0.0
    %3900 = vmatpush1.msra.mxu0 0.0
    %3901 = vmatprep.subr.mxu0 0.0
    %3902 = vmatpush1.msra.mxu0 0.0
    %3903 = vmatprep.subr.mxu0 0.0
    %3904 = vmatpush1.msra.mxu0 0.0
    %3905 = vmatprep.subr.mxu0 0.0
    %3906 = vmatpush1.msra.mxu0 0.0
    %3907 = vmatprep.subr.mxu0 0.0
    %3908 = vmatpush1.msra.mxu0 0.0
    %3909 = vmatprep.subr.mxu0 0.0
    %3910 = vmatpush1.msra.mxu0 0.0
    %3911 = vmatprep.subr.mxu0 0.0
    %3912 = vmatpush1.msra.mxu0 0.0
    %3913 = vmatprep.subr.mxu0 0.0
    %3914 = vmatpush1.msra.mxu0 0.0
    %3915 = vmatprep.subr.mxu0 0.0
    %3916 = vmatpush1.msra.mxu0 0.0
    %3917 = vmatprep.subr.mxu0 0.0
    %3918 = vmatpush1.msra.mxu0 0.0
    %3919 = vmatprep.subr.mxu0 0.0
    %3920 = vmatpush1.msra.mxu0 0.0
    %3921 = vmatprep.mubr.f32.mxu0 0.0
    %v3922 = vand.u32 %v2546, 4294901760
    %v3923 = vsub.f32 %v2546, %v3922
    %3924 = vmatmul.mubr.f32.gmra.mrb[0].mxu0 %v3923
    %v3925 = vpop.f32.mrb[0].mxu0
    %v3926 = vadd.f32 %v3838, %v3925
    %v3927 = vpop.f32.mrb[0].mxu0
    %v3928 = vadd.f32 %v3840, %v3927
    %3929 = vmatprep.mubr.f32.mxu0 0.0
    %v3930 = vand.u32 %v2549, 4294901760
    %v3931 = vsub.f32 %v2549, %v3930
    %3932 = vmatmul.mubr.f32.gmra.mrb[0].mxu0 %v3931
    %v3933 = vpop.f32.mrb[0].mxu0
    %v3934 = vadd.f32 %v3845, %v3933
    %v3935 = vpop.f32.mrb[0].mxu0
    %v3936 = vadd.f32 %v3847, %v3935
    %3937 = vdwg.mxu0
    %v3938 = vand.u32 %v3652, 4294901760
    %3939 = vmatprep.subr.mxu0 %v3938
    %v3940 = vand.u32 %v3651, 4294901760
    %3941 = vmatpush1.msra.mxu0 %v3940
    %v3942 = vand.u32 %v3656, 4294901760
    %3943 = vmatprep.subr.mxu0 %v3942
    %v3944 = vand.u32 %v3655, 4294901760
    %3945 = vmatpush1.msra.mxu0 %v3944
    %3946 = vmatprep.subr.mxu0 0.0
    %3947 = vmatpush1.msra.mxu0 0.0
    %3948 = vmatprep.subr.mxu0 0.0
    %3949 = vmatpush1.msra.mxu0 0.0
    %3950 = vmatprep.subr.mxu0 0.0
    %3951 = vmatpush1.msra.mxu0 0.0
    %3952 = vmatprep.subr.mxu0 0.0
    %3953 = vmatpush1.msra.mxu0 0.0
    %3954 = vmatprep.subr.mxu0 0.0
    %3955 = vmatpush1.msra.mxu0 0.0
    %3956 = vmatprep.subr.mxu0 0.0
    %3957 = vmatpush1.msra.mxu0 0.0
    %3958 = vmatprep.subr.mxu0 0.0
    %3959 = vmatpush1.msra.mxu0 0.0
    %3960 = vmatprep.subr.mxu0 0.0
    %3961 = vmatpush1.msra.mxu0 0.0
    %3962 = vmatprep.subr.mxu0 0.0
    %3963 = vmatpush1.msra.mxu0 0.0
    %3964 = vmatprep.subr.mxu0 0.0
    %3965 = vmatpush1.msra.mxu0 0.0
    %3966 = vmatprep.subr.mxu0 0.0
    %3967 = vmatpush1.msra.mxu0 0.0
    %3968 = vmatprep.subr.mxu0 0.0
    %3969 = vmatpush1.msra.mxu0 0.0
    %3970 = vmatprep.subr.mxu0 0.0
    %3971 = vmatpush1.msra.mxu0 0.0
    %3972 = vmatprep.subr.mxu0 0.0
    %3973 = vmatpush1.msra.mxu0 0.0
    %3974 = vmatprep.subr.mxu0 0.0
    %3975 = vmatpush1.msra.mxu0 0.0
    %3976 = vmatprep.subr.mxu0 0.0
    %3977 = vmatpush1.msra.mxu0 0.0
    %3978 = vmatprep.subr.mxu0 0.0
    %3979 = vmatpush1.msra.mxu0 0.0
    %3980 = vmatprep.subr.mxu0 0.0
    %3981 = vmatpush1.msra.mxu0 0.0
    %3982 = vmatprep.subr.mxu0 0.0
    %3983 = vmatpush1.msra.mxu0 0.0
    %3984 = vmatprep.subr.mxu0 0.0
    %3985 = vmatpush1.msra.mxu0 0.0
    %3986 = vmatprep.subr.mxu0 0.0
    %3987 = vmatpush1.msra.mxu0 0.0
    %3988 = vmatprep.subr.mxu0 0.0
    %3989 = vmatpush1.msra.mxu0 0.0
    %3990 = vmatprep.subr.mxu0 0.0
    %3991 = vmatpush1.msra.mxu0 0.0
    %3992 = vmatprep.subr.mxu0 0.0
    %3993 = vmatpush1.msra.mxu0 0.0
    %3994 = vmatprep.subr.mxu0 0.0
    %3995 = vmatpush1.msra.mxu0 0.0
    %3996 = vmatprep.subr.mxu0 0.0
    %3997 = vmatpush1.msra.mxu0 0.0
    %3998 = vmatprep.subr.mxu0 0.0
    %3999 = vmatpush1.msra.mxu0 0.0
    %4000 = vmatprep.subr.mxu0 0.0
    %4001 = vmatpush1.msra.mxu0 0.0
    %4002 = vmatprep.subr.mxu0 0.0
    %4003 = vmatpush1.msra.mxu0 0.0
    %4004 = vmatprep.subr.mxu0 0.0
    %4005 = vmatpush1.msra.mxu0 0.0
    %4006 = vmatprep.mubr.f32.mxu0 0.0
    %v4007 = vand.u32 %v2546, 4294901760
    %v4008 = vsub.f32 %v2546, %v4007
    %v4009 = vand.u32 %v4008, 4294901760
    %4010 = vmatmul.mubr.f32.gmra.mrb[0].mxu0 %v4009
    %v4011 = vpop.f32.mrb[0].mxu0
    %v4012 = vadd.f32 %v3926, %v4011
    %v4013 = vpop.f32.mrb[0].mxu0
    %v4014 = vadd.f32 %v3928, %v4013
    %4015 = vmatprep.mubr.f32.mxu0 0.0
    %v4016 = vand.u32 %v2549, 4294901760
    %v4017 = vsub.f32 %v2549, %v4016
    %v4018 = vand.u32 %v4017, 4294901760
    %4019 = vmatmul.mubr.f32.gmra.mrb[0].mxu0 %v4018
    %v4020 = vpop.f32.mrb[0].mxu0
    %v4021 = vadd.f32 %v3934, %v4020
    %v4022 = vpop.f32.mrb[0].mxu0
    %v4023 = vadd.f32 %v3936, %v4022
    %4024 = vdwg.mxu0
    %v4025 = vand.u32 %v3652, 4294901760
    %v4026 = vsub.f32 %v3652, %v4025
    %v4027 = vand.u32 %v4026, 4294901760
    %4028 = vmatprep.subr.mxu0 %v4027
    %v4029 = vand.u32 %v3651, 4294901760
    %v4030 = vsub.f32 %v3651, %v4029
    %v4031 = vand.u32 %v4030, 4294901760
    %4032 = vmatpush1.msra.mxu0 %v4031
    %v4033 = vand.u32 %v3656, 4294901760
    %v4034 = vsub.f32 %v3656, %v4033
    %v4035 = vand.u32 %v4034, 4294901760
    %4036 = vmatprep.subr.mxu0 %v4035
    %v4037 = vand.u32 %v3655, 4294901760
    %v4038 = vsub.f32 %v3655, %v4037
    %v4039 = vand.u32 %v4038, 4294901760
    %4040 = vmatpush1.msra.mxu0 %v4039
    %4041 = vmatprep.subr.mxu0 0.0
    %4042 = vmatpush1.msra.mxu0 0.0
    %4043 = vmatprep.subr.mxu0 0.0
    %4044 = vmatpush1.msra.mxu0 0.0
    %4045 = vmatprep.subr.mxu0 0.0
    %4046 = vmatpush1.msra.mxu0 0.0
    %4047 = vmatprep.subr.mxu0 0.0
    %4048 = vmatpush1.msra.mxu0 0.0
    %4049 = vmatprep.subr.mxu0 0.0
    %4050 = vmatpush1.msra.mxu0 0.0
    %4051 = vmatprep.subr.mxu0 0.0
    %4052 = vmatpush1.msra.mxu0 0.0
    %4053 = vmatprep.subr.mxu0 0.0
    %4054 = vmatpush1.msra.mxu0 0.0
    %4055 = vmatprep.subr.mxu0 0.0
    %4056 = vmatpush1.msra.mxu0 0.0
    %4057 = vmatprep.subr.mxu0 0.0
    %4058 = vmatpush1.msra.mxu0 0.0
    %4059 = vmatprep.subr.mxu0 0.0
    %4060 = vmatpush1.msra.mxu0 0.0
    %4061 = vmatprep.subr.mxu0 0.0
    %4062 = vmatpush1.msra.mxu0 0.0
    %4063 = vmatprep.subr.mxu0 0.0
    %4064 = vmatpush1.msra.mxu0 0.0
    %4065 = vmatprep.subr.mxu0 0.0
    %4066 = vmatpush1.msra.mxu0 0.0
    %4067 = vmatprep.subr.mxu0 0.0
    %4068 = vmatpush1.msra.mxu0 0.0
    %4069 = vmatprep.subr.mxu0 0.0
    %4070 = vmatpush1.msra.mxu0 0.0
    %4071 = vmatprep.subr.mxu0 0.0
    %4072 = vmatpush1.msra.mxu0 0.0
    %4073 = vmatprep.subr.mxu0 0.0
    %4074 = vmatpush1.msra.mxu0 0.0
    %4075 = vmatprep.subr.mxu0 0.0
    %4076 = vmatpush1.msra.mxu0 0.0
    %4077 = vmatprep.subr.mxu0 0.0
    %4078 = vmatpush1.msra.mxu0 0.0
    %4079 = vmatprep.subr.mxu0 0.0
    %4080 = vmatpush1.msra.mxu0 0.0
    %4081 = vmatprep.subr.mxu0 0.0
    %4082 = vmatpush1.msra.mxu0 0.0
    %4083 = vmatprep.subr.mxu0 0.0
    %4084 = vmatpush1.msra.mxu0 0.0
    %4085 = vmatprep.subr.mxu0 0.0
    %4086 = vmatpush1.msra.mxu0 0.0
    %4087 = vmatprep.subr.mxu0 0.0
    %4088 = vmatpush1.msra.mxu0 0.0
    %4089 = vmatprep.subr.mxu0 0.0
    %4090 = vmatpush1.msra.mxu0 0.0
    %4091 = vmatprep.subr.mxu0 0.0
    %4092 = vmatpush1.msra.mxu0 0.0
    %4093 = vmatprep.subr.mxu0 0.0
    %4094 = vmatpush1.msra.mxu0 0.0
    %4095 = vmatprep.subr.mxu0 0.0
    %4096 = vmatpush1.msra.mxu0 0.0
    %4097 = vmatprep.subr.mxu0 0.0
    %4098 = vmatpush1.msra.mxu0 0.0
    %4099 = vmatprep.subr.mxu0 0.0
    %4100 = vmatpush1.msra.mxu0 0.0
    %4101 = vmatprep.mubr.f32.mxu0 0.0
    %v4102 = vand.u32 %v2546, 4294901760
    %4103 = vmatmul.mubr.f32.gmra.mrb[0].mxu0 %v4102
    %v4104 = vpop.f32.mrb[0].mxu0
    %v4105 = vadd.f32 %v4012, %v4104
    %v4106 = vpop.f32.mrb[0].mxu0
    %v4107 = vadd.f32 %v4014, %v4106
    %4108 = vmatprep.mubr.f32.mxu0 0.0
    %v4109 = vand.u32 %v2549, 4294901760
    %4110 = vmatmul.mubr.f32.gmra.mrb[0].mxu0 %v4109
    %v4111 = vpop.f32.mrb[0].mxu0
    %v4112 = vadd.f32 %v4021, %v4111
    %v4113 = vpop.f32.mrb[0].mxu0
    %v4114 = vadd.f32 %v4023, %v4113
    %4115 = vdwg.mxu0
    %v4116 = vand.u32 %v3652, 4294901760
    %4117 = vmatprep.subr.mxu0 %v4116
    %v4118 = vand.u32 %v3651, 4294901760
    %4119 = vmatpush1.msra.mxu0 %v4118
    %v4120 = vand.u32 %v3656, 4294901760
    %4121 = vmatprep.subr.mxu0 %v4120
    %v4122 = vand.u32 %v3655, 4294901760
    %4123 = vmatpush1.msra.mxu0 %v4122
    %4124 = vmatprep.subr.mxu0 0.0
    %4125 = vmatpush1.msra.mxu0 0.0
    %4126 = vmatprep.subr.mxu0 0.0
    %4127 = vmatpush1.msra.mxu0 0.0
    %4128 = vmatprep.subr.mxu0 0.0
    %4129 = vmatpush1.msra.mxu0 0.0
    %4130 = vmatprep.subr.mxu0 0.0
    %4131 = vmatpush1.msra.mxu0 0.0
    %4132 = vmatprep.subr.mxu0 0.0
    %4133 = vmatpush1.msra.mxu0 0.0
    %4134 = vmatprep.subr.mxu0 0.0
    %4135 = vmatpush1.msra.mxu0 0.0
    %4136 = vmatprep.subr.mxu0 0.0
    %4137 = vmatpush1.msra.mxu0 0.0
    %4138 = vmatprep.subr.mxu0 0.0
    %4139 = vmatpush1.msra.mxu0 0.0
    %4140 = vmatprep.subr.mxu0 0.0
    %4141 = vmatpush1.msra.mxu0 0.0
    %4142 = vmatprep.subr.mxu0 0.0
    %4143 = vmatpush1.msra.mxu0 0.0
    %4144 = vmatprep.subr.mxu0 0.0
    %4145 = vmatpush1.msra.mxu0 0.0
    %4146 = vmatprep.subr.mxu0 0.0
    %4147 = vmatpush1.msra.mxu0 0.0
    %4148 = vmatprep.subr.mxu0 0.0
    %4149 = vmatpush1.msra.mxu0 0.0
    %4150 = vmatprep.subr.mxu0 0.0
    %4151 = vmatpush1.msra.mxu0 0.0
    %4152 = vmatprep.subr.mxu0 0.0
    %4153 = vmatpush1.msra.mxu0 0.0
    %4154 = vmatprep.subr.mxu0 0.0
    %4155 = vmatpush1.msra.mxu0 0.0
    %4156 = vmatprep.subr.mxu0 0.0
    %4157 = vmatpush1.msra.mxu0 0.0
    %4158 = vmatprep.subr.mxu0 0.0
    %4159 = vmatpush1.msra.mxu0 0.0
    %4160 = vmatprep.subr.mxu0 0.0
    %4161 = vmatpush1.msra.mxu0 0.0
    %4162 = vmatprep.subr.mxu0 0.0
    %4163 = vmatpush1.msra.mxu0 0.0
    %4164 = vmatprep.subr.mxu0 0.0
    %4165 = vmatpush1.msra.mxu0 0.0
    %4166 = vmatprep.subr.mxu0 0.0
    %4167 = vmatpush1.msra.mxu0 0.0
    %4168 = vmatprep.subr.mxu0 0.0
    %4169 = vmatpush1.msra.mxu0 0.0
    %4170 = vmatprep.subr.mxu0 0.0
    %4171 = vmatpush1.msra.mxu0 0.0
    %4172 = vmatprep.subr.mxu0 0.0
    %4173 = vmatpush1.msra.mxu0 0.0
    %4174 = vmatprep.subr.mxu0 0.0
    %4175 = vmatpush1.msra.mxu0 0.0
    %4176 = vmatprep.subr.mxu0 0.0
    %4177 = vmatpush1.msra.mxu0 0.0
    %4178 = vmatprep.subr.mxu0 0.0
    %4179 = vmatpush1.msra.mxu0 0.0
    %4180 = vmatprep.subr.mxu0 0.0
    %4181 = vmatpush1.msra.mxu0 0.0
    %4182 = vmatprep.subr.mxu0 0.0
    %4183 = vmatpush1.msra.mxu0 0.0
    %4184 = vmatprep.mubr.f32.mxu0 0.0
    %v4185 = vand.u32 %v2546, 4294901760
    %4186 = vmatmul.mubr.f32.gmra.mrb[0].mxu0 %v4185
    %v4187 = vpop.f32.mrb[0].mxu0
    %v4188 = vadd.f32 %v4105, %v4187
    %v4189 = vpop.f32.mrb[0].mxu0
    %v4190 = vadd.f32 %v4107, %v4189
    %4191 = vmatprep.mubr.f32.mxu0 0.0
    %v4192 = vand.u32 %v2549, 4294901760
    %4193 = vmatmul.mubr.f32.gmra.mrb[0].mxu0 %v4192
    %v4194 = vpop.f32.mrb[0].mxu0
    %v4195 = vadd.f32 %v4112, %v4194
    %v4196 = vpop.f32.mrb[0].mxu0
    %v4197 = vadd.f32 %v4114, %v4196
    %4198 = vdwg.mxu0
    %v4199 = vand.u32 %v3654, 4294901760
    %4200 = vmatprep.subr.mxu0 %v4199
    %v4201 = vand.u32 %v3653, 4294901760
    %4202 = vmatpush1.msra.mxu0 %v4201
    %v4203 = vand.u32 %v3658, 4294901760
    %4204 = vmatprep.subr.mxu0 %v4203
    %v4205 = vand.u32 %v3657, 4294901760
    %4206 = vmatpush1.msra.mxu0 %v4205
    %4207 = vmatprep.subr.mxu0 0.0
    %4208 = vmatpush1.msra.mxu0 0.0
    %4209 = vmatprep.subr.mxu0 0.0
    %4210 = vmatpush1.msra.mxu0 0.0
    %4211 = vmatprep.subr.mxu0 0.0
    %4212 = vmatpush1.msra.mxu0 0.0
    %4213 = vmatprep.subr.mxu0 0.0
    %4214 = vmatpush1.msra.mxu0 0.0
    %4215 = vmatprep.subr.mxu0 0.0
    %4216 = vmatpush1.msra.mxu0 0.0
    %4217 = vmatprep.subr.mxu0 0.0
    %4218 = vmatpush1.msra.mxu0 0.0
    %4219 = vmatprep.subr.mxu0 0.0
    %4220 = vmatpush1.msra.mxu0 0.0
    %4221 = vmatprep.subr.mxu0 0.0
    %4222 = vmatpush1.msra.mxu0 0.0
    %4223 = vmatprep.subr.mxu0 0.0
    %4224 = vmatpush1.msra.mxu0 0.0
    %4225 = vmatprep.subr.mxu0 0.0
    %4226 = vmatpush1.msra.mxu0 0.0
    %4227 = vmatprep.subr.mxu0 0.0
    %4228 = vmatpush1.msra.mxu0 0.0
    %4229 = vmatprep.subr.mxu0 0.0
    %4230 = vmatpush1.msra.mxu0 0.0
    %4231 = vmatprep.subr.mxu0 0.0
    %4232 = vmatpush1.msra.mxu0 0.0
    %4233 = vmatprep.subr.mxu0 0.0
    %4234 = vmatpush1.msra.mxu0 0.0
    %4235 = vmatprep.subr.mxu0 0.0
    %4236 = vmatpush1.msra.mxu0 0.0
    %4237 = vmatprep.subr.mxu0 0.0
    %4238 = vmatpush1.msra.mxu0 0.0
    %4239 = vmatprep.subr.mxu0 0.0
    %4240 = vmatpush1.msra.mxu0 0.0
    %4241 = vmatprep.subr.mxu0 0.0
    %4242 = vmatpush1.msra.mxu0 0.0
    %4243 = vmatprep.subr.mxu0 0.0
    %4244 = vmatpush1.msra.mxu0 0.0
    %4245 = vmatprep.subr.mxu0 0.0
    %4246 = vmatpush1.msra.mxu0 0.0
    %4247 = vmatprep.subr.mxu0 0.0
    %4248 = vmatpush1.msra.mxu0 0.0
    %4249 = vmatprep.subr.mxu0 0.0
    %4250 = vmatpush1.msra.mxu0 0.0
    %4251 = vmatprep.subr.mxu0 0.0
    %4252 = vmatpush1.msra.mxu0 0.0
    %4253 = vmatprep.subr.mxu0 0.0
    %4254 = vmatpush1.msra.mxu0 0.0
    %4255 = vmatprep.subr.mxu0 0.0
    %4256 = vmatpush1.msra.mxu0 0.0
    %4257 = vmatprep.subr.mxu0 0.0
    %4258 = vmatpush1.msra.mxu0 0.0
    %4259 = vmatprep.subr.mxu0 0.0
    %4260 = vmatpush1.msra.mxu0 0.0
    %4261 = vmatprep.subr.mxu0 0.0
    %4262 = vmatpush1.msra.mxu0 0.0
    %4263 = vmatprep.subr.mxu0 0.0
    %4264 = vmatpush1.msra.mxu0 0.0
    %4265 = vmatprep.subr.mxu0 0.0
    %4266 = vmatpush1.msra.mxu0 0.0
    %4267 = vmatprep.mubr.f32.mxu0 0.0
    %v4268 = vand.u32 %v2546, 4294901760
    %v4269 = vsub.f32 %v2546, %v4268
    %v4270 = vand.u32 %v4269, 4294901760
    %v4271 = vsub.f32 %v4269, %v4270
    %v4272 = vand.u32 %v4271, 4294901760
    %4273 = vmatmul.mubr.f32.gmra.mrb[0].mxu0 %v4272
    %v4274 = vpop.f32.mrb[0].mxu0
    %v4275 = vadd.f32 0.0, %v4274
    %v4276 = vpop.f32.mrb[0].mxu0
    %v4277 = vadd.f32 0.0, %v4276
    %4278 = vmatprep.mubr.f32.mxu0 0.0
    %v4279 = vand.u32 %v2549, 4294901760
    %v4280 = vsub.f32 %v2549, %v4279
    %v4281 = vand.u32 %v4280, 4294901760
    %v4282 = vsub.f32 %v4280, %v4281
    %v4283 = vand.u32 %v4282, 4294901760
    %4284 = vmatmul.mubr.f32.gmra.mrb[0].mxu0 %v4283
    %v4285 = vpop.f32.mrb[0].mxu0
    %v4286 = vadd.f32 0.0, %v4285
    %v4287 = vpop.f32.mrb[0].mxu0
    %v4288 = vadd.f32 0.0, %v4287
    %4289 = vdwg.mxu0
    %v4290 = vand.u32 %v3654, 4294901760
    %v4291 = vsub.f32 %v3654, %v4290
    %v4292 = vand.u32 %v4291, 4294901760
    %v4293 = vsub.f32 %v4291, %v4292
    %v4294 = vand.u32 %v4293, 4294901760
    %4295 = vmatprep.subr.mxu0 %v4294
    %v4296 = vand.u32 %v3653, 4294901760
    %v4297 = vsub.f32 %v3653, %v4296
    %v4298 = vand.u32 %v4297, 4294901760
    %v4299 = vsub.f32 %v4297, %v4298
    %v4300 = vand.u32 %v4299, 4294901760
    %4301 = vmatpush1.msra.mxu0 %v4300
    %v4302 = vand.u32 %v3658, 4294901760
    %v4303 = vsub.f32 %v3658, %v4302
    %v4304 = vand.u32 %v4303, 4294901760
    %v4305 = vsub.f32 %v4303, %v4304
    %v4306 = vand.u32 %v4305, 4294901760
    %4307 = vmatprep.subr.mxu0 %v4306
    %v4308 = vand.u32 %v3657, 4294901760
    %v4309 = vsub.f32 %v3657, %v4308
    %v4310 = vand.u32 %v4309, 4294901760
    %v4311 = vsub.f32 %v4309, %v4310
    %v4312 = vand.u32 %v4311, 4294901760
    %4313 = vmatpush1.msra.mxu0 %v4312
    %4314 = vmatprep.subr.mxu0 0.0
    %4315 = vmatpush1.msra.mxu0 0.0
    %4316 = vmatprep.subr.mxu0 0.0
    %4317 = vmatpush1.msra.mxu0 0.0
    %4318 = vmatprep.subr.mxu0 0.0
    %4319 = vmatpush1.msra.mxu0 0.0
    %4320 = vmatprep.subr.mxu0 0.0
    %4321 = vmatpush1.msra.mxu0 0.0
    %4322 = vmatprep.subr.mxu0 0.0
    %4323 = vmatpush1.msra.mxu0 0.0
    %4324 = vmatprep.subr.mxu0 0.0
    %4325 = vmatpush1.msra.mxu0 0.0
    %4326 = vmatprep.subr.mxu0 0.0
    %4327 = vmatpush1.msra.mxu0 0.0
    %4328 = vmatprep.subr.mxu0 0.0
    %4329 = vmatpush1.msra.mxu0 0.0
    %4330 = vmatprep.subr.mxu0 0.0
    %4331 = vmatpush1.msra.mxu0 0.0
    %4332 = vmatprep.subr.mxu0 0.0
    %4333 = vmatpush1.msra.mxu0 0.0
    %4334 = vmatprep.subr.mxu0 0.0
    %4335 = vmatpush1.msra.mxu0 0.0
    %4336 = vmatprep.subr.mxu0 0.0
    %4337 = vmatpush1.msra.mxu0 0.0
    %4338 = vmatprep.subr.mxu0 0.0
    %4339 = vmatpush1.msra.mxu0 0.0
    %4340 = vmatprep.subr.mxu0 0.0
    %4341 = vmatpush1.msra.mxu0 0.0
    %4342 = vmatprep.subr.mxu0 0.0
    %4343 = vmatpush1.msra.mxu0 0.0
    %4344 = vmatprep.subr.mxu0 0.0
    %4345 = vmatpush1.msra.mxu0 0.0
    %4346 = vmatprep.subr.mxu0 0.0
    %4347 = vmatpush1.msra.mxu0 0.0
    %4348 = vmatprep.subr.mxu0 0.0
    %4349 = vmatpush1.msra.mxu0 0.0
    %4350 = vmatprep.subr.mxu0 0.0
    %4351 = vmatpush1.msra.mxu0 0.0
    %4352 = vmatprep.subr.mxu0 0.0
    %4353 = vmatpush1.msra.mxu0 0.0
    %4354 = vmatprep.subr.mxu0 0.0
    %4355 = vmatpush1.msra.mxu0 0.0
    %4356 = vmatprep.subr.mxu0 0.0
    %4357 = vmatpush1.msra.mxu0 0.0
    %4358 = vmatprep.subr.mxu0 0.0
    %4359 = vmatpush1.msra.mxu0 0.0
    %4360 = vmatprep.subr.mxu0 0.0
    %4361 = vmatpush1.msra.mxu0 0.0
    %4362 = vmatprep.subr.mxu0 0.0
    %4363 = vmatpush1.msra.mxu0 0.0
    %4364 = vmatprep.subr.mxu0 0.0
    %4365 = vmatpush1.msra.mxu0 0.0
    %4366 = vmatprep.subr.mxu0 0.0
    %4367 = vmatpush1.msra.mxu0 0.0
    %4368 = vmatprep.subr.mxu0 0.0
    %4369 = vmatpush1.msra.mxu0 0.0
    %4370 = vmatprep.subr.mxu0 0.0
    %4371 = vmatpush1.msra.mxu0 0.0
    %4372 = vmatprep.subr.mxu0 0.0
    %4373 = vmatpush1.msra.mxu0 0.0
    %4374 = vmatprep.mubr.f32.mxu0 0.0
    %v4375 = vand.u32 %v2546, 4294901760
    %4376 = vmatmul.mubr.f32.gmra.mrb[0].mxu0 %v4375
    %v4377 = vpop.f32.mrb[0].mxu0
    %v4378 = vadd.f32 %v4275, %v4377
    %v4379 = vpop.f32.mrb[0].mxu0
    %v4380 = vadd.f32 %v4277, %v4379
    %4381 = vmatprep.mubr.f32.mxu0 0.0
    %v4382 = vand.u32 %v2549, 4294901760
    %4383 = vmatmul.mubr.f32.gmra.mrb[0].mxu0 %v4382
    %v4384 = vpop.f32.mrb[0].mxu0
    %v4385 = vadd.f32 %v4286, %v4384
    %v4386 = vpop.f32.mrb[0].mxu0
    %v4387 = vadd.f32 %v4288, %v4386
    %4388 = vdwg.mxu0
    %v4389 = vand.u32 %v3654, 4294901760
    %v4390 = vsub.f32 %v3654, %v4389
    %4391 = vmatprep.subr.mxu0 %v4390
    %v4392 = vand.u32 %v3653, 4294901760
    %v4393 = vsub.f32 %v3653, %v4392
    %4394 = vmatpush1.msra.mxu0 %v4393
    %v4395 = vand.u32 %v3658, 4294901760
    %v4396 = vsub.f32 %v3658, %v4395
    %4397 = vmatprep.subr.mxu0 %v4396
    %v4398 = vand.u32 %v3657, 4294901760
    %v4399 = vsub.f32 %v3657, %v4398
    %4400 = vmatpush1.msra.mxu0 %v4399
    %4401 = vmatprep.subr.mxu0 0.0
    %4402 = vmatpush1.msra.mxu0 0.0
    %4403 = vmatprep.subr.mxu0 0.0
    %4404 = vmatpush1.msra.mxu0 0.0
    %4405 = vmatprep.subr.mxu0 0.0
    %4406 = vmatpush1.msra.mxu0 0.0
    %4407 = vmatprep.subr.mxu0 0.0
    %4408 = vmatpush1.msra.mxu0 0.0
    %4409 = vmatprep.subr.mxu0 0.0
    %4410 = vmatpush1.msra.mxu0 0.0
    %4411 = vmatprep.subr.mxu0 0.0
    %4412 = vmatpush1.msra.mxu0 0.0
    %4413 = vmatprep.subr.mxu0 0.0
    %4414 = vmatpush1.msra.mxu0 0.0
    %4415 = vmatprep.subr.mxu0 0.0
    %4416 = vmatpush1.msra.mxu0 0.0
    %4417 = vmatprep.subr.mxu0 0.0
    %4418 = vmatpush1.msra.mxu0 0.0
    %4419 = vmatprep.subr.mxu0 0.0
    %4420 = vmatpush1.msra.mxu0 0.0
    %4421 = vmatprep.subr.mxu0 0.0
    %4422 = vmatpush1.msra.mxu0 0.0
    %4423 = vmatprep.subr.mxu0 0.0
    %4424 = vmatpush1.msra.mxu0 0.0
    %4425 = vmatprep.subr.mxu0 0.0
    %4426 = vmatpush1.msra.mxu0 0.0
    %4427 = vmatprep.subr.mxu0 0.0
    %4428 = vmatpush1.msra.mxu0 0.0
    %4429 = vmatprep.subr.mxu0 0.0
    %4430 = vmatpush1.msra.mxu0 0.0
    %4431 = vmatprep.subr.mxu0 0.0
    %4432 = vmatpush1.msra.mxu0 0.0
    %4433 = vmatprep.subr.mxu0 0.0
    %4434 = vmatpush1.msra.mxu0 0.0
    %4435 = vmatprep.subr.mxu0 0.0
    %4436 = vmatpush1.msra.mxu0 0.0
    %4437 = vmatprep.subr.mxu0 0.0
    %4438 = vmatpush1.msra.mxu0 0.0
    %4439 = vmatprep.subr.mxu0 0.0
    %4440 = vmatpush1.msra.mxu0 0.0
    %4441 = vmatprep.subr.mxu0 0.0
    %4442 = vmatpush1.msra.mxu0 0.0
    %4443 = vmatprep.subr.mxu0 0.0
    %4444 = vmatpush1.msra.mxu0 0.0
    %4445 = vmatprep.subr.mxu0 0.0
    %4446 = vmatpush1.msra.mxu0 0.0
    %4447 = vmatprep.subr.mxu0 0.0
    %4448 = vmatpush1.msra.mxu0 0.0
    %4449 = vmatprep.subr.mxu0 0.0
    %4450 = vmatpush1.msra.mxu0 0.0
    %4451 = vmatprep.subr.mxu0 0.0
    %4452 = vmatpush1.msra.mxu0 0.0
    %4453 = vmatprep.subr.mxu0 0.0
    %4454 = vmatpush1.msra.mxu0 0.0
    %4455 = vmatprep.subr.mxu0 0.0
    %4456 = vmatpush1.msra.mxu0 0.0
    %4457 = vmatprep.subr.mxu0 0.0
    %4458 = vmatpush1.msra.mxu0 0.0
    %4459 = vmatprep.subr.mxu0 0.0
    %4460 = vmatpush1.msra.mxu0 0.0
    %4461 = vmatprep.mubr.f32.mxu0 0.0
    %v4462 = vand.u32 %v2546, 4294901760
    %v4463 = vsub.f32 %v2546, %v4462
    %4464 = vmatmul.mubr.f32.gmra.mrb[0].mxu0 %v4463
    %v4465 = vpop.f32.mrb[0].mxu0
    %v4466 = vadd.f32 %v4378, %v4465
    %v4467 = vpop.f32.mrb[0].mxu0
    %v4468 = vadd.f32 %v4380, %v4467
    %4469 = vmatprep.mubr.f32.mxu0 0.0
    %v4470 = vand.u32 %v2549, 4294901760
    %v4471 = vsub.f32 %v2549, %v4470
    %4472 = vmatmul.mubr.f32.gmra.mrb[0].mxu0 %v4471
    %v4473 = vpop.f32.mrb[0].mxu0
    %v4474 = vadd.f32 %v4385, %v4473
    %v4475 = vpop.f32.mrb[0].mxu0
    %v4476 = vadd.f32 %v4387, %v4475
    %4477 = vdwg.mxu0
    %v4478 = vand.u32 %v3654, 4294901760
    %4479 = vmatprep.subr.mxu0 %v4478
    %v4480 = vand.u32 %v3653, 4294901760
    %4481 = vmatpush1.msra.mxu0 %v4480
    %v4482 = vand.u32 %v3658, 4294901760
    %4483 = vmatprep.subr.mxu0 %v4482
    %v4484 = vand.u32 %v3657, 4294901760
    %4485 = vmatpush1.msra.mxu0 %v4484
    %4486 = vmatprep.subr.mxu0 0.0
    %4487 = vmatpush1.msra.mxu0 0.0
    %4488 = vmatprep.subr.mxu0 0.0
    %4489 = vmatpush1.msra.mxu0 0.0
    %4490 = vmatprep.subr.mxu0 0.0
    %4491 = vmatpush1.msra.mxu0 0.0
    %4492 = vmatprep.subr.mxu0 0.0
    %4493 = vmatpush1.msra.mxu0 0.0
    %4494 = vmatprep.subr.mxu0 0.0
    %4495 = vmatpush1.msra.mxu0 0.0
    %4496 = vmatprep.subr.mxu0 0.0
    %4497 = vmatpush1.msra.mxu0 0.0
    %4498 = vmatprep.subr.mxu0 0.0
    %4499 = vmatpush1.msra.mxu0 0.0
    %4500 = vmatprep.subr.mxu0 0.0
    %4501 = vmatpush1.msra.mxu0 0.0
    %4502 = vmatprep.subr.mxu0 0.0
    %4503 = vmatpush1.msra.mxu0 0.0
    %4504 = vmatprep.subr.mxu0 0.0
    %4505 = vmatpush1.msra.mxu0 0.0
    %4506 = vmatprep.subr.mxu0 0.0
    %4507 = vmatpush1.msra.mxu0 0.0
    %4508 = vmatprep.subr.mxu0 0.0
    %4509 = vmatpush1.msra.mxu0 0.0
    %4510 = vmatprep.subr.mxu0 0.0
    %4511 = vmatpush1.msra.mxu0 0.0
    %4512 = vmatprep.subr.mxu0 0.0
    %4513 = vmatpush1.msra.mxu0 0.0
    %4514 = vmatprep.subr.mxu0 0.0
    %4515 = vmatpush1.msra.mxu0 0.0
    %4516 = vmatprep.subr.mxu0 0.0
    %4517 = vmatpush1.msra.mxu0 0.0
    %4518 = vmatprep.subr.mxu0 0.0
    %4519 = vmatpush1.msra.mxu0 0.0
    %4520 = vmatprep.subr.mxu0 0.0
    %4521 = vmatpush1.msra.mxu0 0.0
    %4522 = vmatprep.subr.mxu0 0.0
    %4523 = vmatpush1.msra.mxu0 0.0
    %4524 = vmatprep.subr.mxu0 0.0
    %4525 = vmatpush1.msra.mxu0 0.0
    %4526 = vmatprep.subr.mxu0 0.0
    %4527 = vmatpush1.msra.mxu0 0.0
    %4528 = vmatprep.subr.mxu0 0.0
    %4529 = vmatpush1.msra.mxu0 0.0
    %4530 = vmatprep.subr.mxu0 0.0
    %4531 = vmatpush1.msra.mxu0 0.0
    %4532 = vmatprep.subr.mxu0 0.0
    %4533 = vmatpush1.msra.mxu0 0.0
    %4534 = vmatprep.subr.mxu0 0.0
    %4535 = vmatpush1.msra.mxu0 0.0
    %4536 = vmatprep.subr.mxu0 0.0
    %4537 = vmatpush1.msra.mxu0 0.0
    %4538 = vmatprep.subr.mxu0 0.0
    %4539 = vmatpush1.msra.mxu0 0.0
    %4540 = vmatprep.subr.mxu0 0.0
    %4541 = vmatpush1.msra.mxu0 0.0
    %4542 = vmatprep.subr.mxu0 0.0
    %4543 = vmatpush1.msra.mxu0 0.0
    %4544 = vmatprep.subr.mxu0 0.0
    %4545 = vmatpush1.msra.mxu0 0.0
    %4546 = vmatprep.mubr.f32.mxu0 0.0
    %v4547 = vand.u32 %v2546, 4294901760
    %v4548 = vsub.f32 %v2546, %v4547
    %v4549 = vand.u32 %v4548, 4294901760
    %4550 = vmatmul.mubr.f32.gmra.mrb[0].mxu0 %v4549
    %v4551 = vpop.f32.mrb[0].mxu0
    %v4552 = vadd.f32 %v4466, %v4551
    %v4553 = vpop.f32.mrb[0].mxu0
    %v4554 = vadd.f32 %v4468, %v4553
    %4555 = vmatprep.mubr.f32.mxu0 0.0
    %v4556 = vand.u32 %v2549, 4294901760
    %v4557 = vsub.f32 %v2549, %v4556
    %v4558 = vand.u32 %v4557, 4294901760
    %4559 = vmatmul.mubr.f32.gmra.mrb[0].mxu0 %v4558
    %v4560 = vpop.f32.mrb[0].mxu0
    %v4561 = vadd.f32 %v4474, %v4560
    %v4562 = vpop.f32.mrb[0].mxu0
    %v4563 = vadd.f32 %v4476, %v4562
    %4564 = vdwg.mxu0
    %v4565 = vand.u32 %v3654, 4294901760
    %v4566 = vsub.f32 %v3654, %v4565
    %v4567 = vand.u32 %v4566, 4294901760
    %4568 = vmatprep.subr.mxu0 %v4567
    %v4569 = vand.u32 %v3653, 4294901760
    %v4570 = vsub.f32 %v3653, %v4569
    %v4571 = vand.u32 %v4570, 4294901760
    %4572 = vmatpush1.msra.mxu0 %v4571
    %v4573 = vand.u32 %v3658, 4294901760
    %v4574 = vsub.f32 %v3658, %v4573
    %v4575 = vand.u32 %v4574, 4294901760
    %4576 = vmatprep.subr.mxu0 %v4575
    %v4577 = vand.u32 %v3657, 4294901760
    %v4578 = vsub.f32 %v3657, %v4577
    %v4579 = vand.u32 %v4578, 4294901760
    %4580 = vmatpush1.msra.mxu0 %v4579
    %4581 = vmatprep.subr.mxu0 0.0
    %4582 = vmatpush1.msra.mxu0 0.0
    %4583 = vmatprep.subr.mxu0 0.0
    %4584 = vmatpush1.msra.mxu0 0.0
    %4585 = vmatprep.subr.mxu0 0.0
    %4586 = vmatpush1.msra.mxu0 0.0
    %4587 = vmatprep.subr.mxu0 0.0
    %4588 = vmatpush1.msra.mxu0 0.0
    %4589 = vmatprep.subr.mxu0 0.0
    %4590 = vmatpush1.msra.mxu0 0.0
    %4591 = vmatprep.subr.mxu0 0.0
    %4592 = vmatpush1.msra.mxu0 0.0
    %4593 = vmatprep.subr.mxu0 0.0
    %4594 = vmatpush1.msra.mxu0 0.0
    %4595 = vmatprep.subr.mxu0 0.0
    %4596 = vmatpush1.msra.mxu0 0.0
    %4597 = vmatprep.subr.mxu0 0.0
    %4598 = vmatpush1.msra.mxu0 0.0
    %4599 = vmatprep.subr.mxu0 0.0
    %4600 = vmatpush1.msra.mxu0 0.0
    %4601 = vmatprep.subr.mxu0 0.0
    %4602 = vmatpush1.msra.mxu0 0.0
    %4603 = vmatprep.subr.mxu0 0.0
    %4604 = vmatpush1.msra.mxu0 0.0
    %4605 = vmatprep.subr.mxu0 0.0
    %4606 = vmatpush1.msra.mxu0 0.0
    %4607 = vmatprep.subr.mxu0 0.0
    %4608 = vmatpush1.msra.mxu0 0.0
    %4609 = vmatprep.subr.mxu0 0.0
    %4610 = vmatpush1.msra.mxu0 0.0
    %4611 = vmatprep.subr.mxu0 0.0
    %4612 = vmatpush1.msra.mxu0 0.0
    %4613 = vmatprep.subr.mxu0 0.0
    %4614 = vmatpush1.msra.mxu0 0.0
    %4615 = vmatprep.subr.mxu0 0.0
    %4616 = vmatpush1.msra.mxu0 0.0
    %4617 = vmatprep.subr.mxu0 0.0
    %4618 = vmatpush1.msra.mxu0 0.0
    %4619 = vmatprep.subr.mxu0 0.0
    %4620 = vmatpush1.msra.mxu0 0.0
    %4621 = vmatprep.subr.mxu0 0.0
    %4622 = vmatpush1.msra.mxu0 0.0
    %4623 = vmatprep.subr.mxu0 0.0
    %4624 = vmatpush1.msra.mxu0 0.0
    %4625 = vmatprep.subr.mxu0 0.0
    %4626 = vmatpush1.msra.mxu0 0.0
    %4627 = vmatprep.subr.mxu0 0.0
    %4628 = vmatpush1.msra.mxu0 0.0
    %4629 = vmatprep.subr.mxu0 0.0
    %4630 = vmatpush1.msra.mxu0 0.0
    %4631 = vmatprep.subr.mxu0 0.0
    %4632 = vmatpush1.msra.mxu0 0.0
    %4633 = vmatprep.subr.mxu0 0.0
    %4634 = vmatpush1.msra.mxu0 0.0
    %4635 = vmatprep.subr.mxu0 0.0
    %4636 = vmatpush1.msra.mxu0 0.0
    %4637 = vmatprep.subr.mxu0 0.0
    %4638 = vmatpush1.msra.mxu0 0.0
    %4639 = vmatprep.subr.mxu0 0.0
    %4640 = vmatpush1.msra.mxu0 0.0
    %4641 = vmatprep.mubr.f32.mxu0 0.0
    %v4642 = vand.u32 %v2546, 4294901760
    %4643 = vmatmul.mubr.f32.gmra.mrb[0].mxu0 %v4642
    %v4644 = vpop.f32.mrb[0].mxu0
    %v4645 = vadd.f32 %v4552, %v4644
    %v4646 = vpop.f32.mrb[0].mxu0
    %v4647 = vadd.f32 %v4554, %v4646
    %4648 = vmatprep.mubr.f32.mxu0 0.0
    %v4649 = vand.u32 %v2549, 4294901760
    %4650 = vmatmul.mubr.f32.gmra.mrb[0].mxu0 %v4649
    %v4651 = vpop.f32.mrb[0].mxu0
    %v4652 = vadd.f32 %v4561, %v4651
    %v4653 = vpop.f32.mrb[0].mxu0
    %v4654 = vadd.f32 %v4563, %v4653
    %4655 = vdwg.mxu0
    %v4656 = vand.u32 %v3654, 4294901760
    %4657 = vmatprep.subr.mxu0 %v4656
    %v4658 = vand.u32 %v3653, 4294901760
    %4659 = vmatpush1.msra.mxu0 %v4658
    %v4660 = vand.u32 %v3658, 4294901760
    %4661 = vmatprep.subr.mxu0 %v4660
    %v4662 = vand.u32 %v3657, 4294901760
    %4663 = vmatpush1.msra.mxu0 %v4662
    %4664 = vmatprep.subr.mxu0 0.0
    %4665 = vmatpush1.msra.mxu0 0.0
    %4666 = vmatprep.subr.mxu0 0.0
    %4667 = vmatpush1.msra.mxu0 0.0
    %4668 = vmatprep.subr.mxu0 0.0
    %4669 = vmatpush1.msra.mxu0 0.0
    %4670 = vmatprep.subr.mxu0 0.0
    %4671 = vmatpush1.msra.mxu0 0.0
    %4672 = vmatprep.subr.mxu0 0.0
    %4673 = vmatpush1.msra.mxu0 0.0
    %4674 = vmatprep.subr.mxu0 0.0
    %4675 = vmatpush1.msra.mxu0 0.0
    %4676 = vmatprep.subr.mxu0 0.0
    %4677 = vmatpush1.msra.mxu0 0.0
    %4678 = vmatprep.subr.mxu0 0.0
    %4679 = vmatpush1.msra.mxu0 0.0
    %4680 = vmatprep.subr.mxu0 0.0
    %4681 = vmatpush1.msra.mxu0 0.0
    %4682 = vmatprep.subr.mxu0 0.0
    %4683 = vmatpush1.msra.mxu0 0.0
    %4684 = vmatprep.subr.mxu0 0.0
    %4685 = vmatpush1.msra.mxu0 0.0
    %4686 = vmatprep.subr.mxu0 0.0
    %4687 = vmatpush1.msra.mxu0 0.0
    %4688 = vmatprep.subr.mxu0 0.0
    %4689 = vmatpush1.msra.mxu0 0.0
    %4690 = vmatprep.subr.mxu0 0.0
    %4691 = vmatpush1.msra.mxu0 0.0
    %4692 = vmatprep.subr.mxu0 0.0
    %4693 = vmatpush1.msra.mxu0 0.0
    %4694 = vmatprep.subr.mxu0 0.0
    %4695 = vmatpush1.msra.mxu0 0.0
    %4696 = vmatprep.subr.mxu0 0.0
    %4697 = vmatpush1.msra.mxu0 0.0
    %4698 = vmatprep.subr.mxu0 0.0
    %4699 = vmatpush1.msra.mxu0 0.0
    %4700 = vmatprep.subr.mxu0 0.0
    %4701 = vmatpush1.msra.mxu0 0.0
    %4702 = vmatprep.subr.mxu0 0.0
    %4703 = vmatpush1.msra.mxu0 0.0
    %4704 = vmatprep.subr.mxu0 0.0
    %4705 = vmatpush1.msra.mxu0 0.0
    %4706 = vmatprep.subr.mxu0 0.0
    %4707 = vmatpush1.msra.mxu0 0.0
    %4708 = vmatprep.subr.mxu0 0.0
    %4709 = vmatpush1.msra.mxu0 0.0
    %4710 = vmatprep.subr.mxu0 0.0
    %4711 = vmatpush1.msra.mxu0 0.0
    %4712 = vmatprep.subr.mxu0 0.0
    %4713 = vmatpush1.msra.mxu0 0.0
    %4714 = vmatprep.subr.mxu0 0.0
    %4715 = vmatpush1.msra.mxu0 0.0
    %4716 = vmatprep.subr.mxu0 0.0
    %4717 = vmatpush1.msra.mxu0 0.0
    %4718 = vmatprep.subr.mxu0 0.0
    %4719 = vmatpush1.msra.mxu0 0.0
    %4720 = vmatprep.subr.mxu0 0.0
    %4721 = vmatpush1.msra.mxu0 0.0
    %4722 = vmatprep.subr.mxu0 0.0
    %4723 = vmatpush1.msra.mxu0 0.0
    %4724 = vmatprep.mubr.f32.mxu0 0.0
    %v4725 = vand.u32 %v2546, 4294901760
    %4726 = vmatmul.mubr.f32.gmra.mrb[0].mxu0 %v4725
    %v4727 = vpop.f32.mrb[0].mxu0
    %v4728 = vadd.f32 %v4645, %v4727
    %v4729 = vpop.f32.mrb[0].mxu0
    %v4730 = vadd.f32 %v4647, %v4729
    %4731 = vmatprep.mubr.f32.mxu0 0.0
    %v4732 = vand.u32 %v2549, 4294901760
    %4733 = vmatmul.mubr.f32.gmra.mrb[0].mxu0 %v4732
    %v4734 = vpop.f32.mrb[0].mxu0
    %v4735 = vadd.f32 %v4652, %v4734
    %v4736 = vpop.f32.mrb[0].mxu0
    %v4737 = vadd.f32 %v4654, %v4736
    %4738 = vdwg.mxu0
    %v4739 = vadd.f32 %v4188, %v4190
    %v4740 = vadd.f32 %v4739, %v4728
    %v4741 = vadd.f32 %v4740, %v4730
    %4742 = vadd.xlane.f32.xlu0 %v4741
    %v4743 = vpop.xlane.xlu0 %4742
    %v4744 = vadd.f32 %v4195, %v4197
    %v4745 = vadd.f32 %v4744, %v4735
    %v4746 = vadd.f32 %v4745, %v4737
    %4747 = vadd.xlane.f32.xlu0 %v4746
    %v4748 = vpop.xlane.xlu0 %4747
    %v4749 = vmul.f32 %v4743, %v1454
    %v4750 = vmul.f32 %v4748, %v1454
    %v4751 = vld [vmem:[%s7] sm:$0xff]
    %v4752 = vld [vmem:[%s7 + $0x8] sm:$0xff]
    %v4753 = vadd.f32 %v4749, 1e-05
    %v4754 = vadd.f32 %v4750, 1e-05
    %v4755 = vrsqrt.pop %v4753
    %v4756 = vrsqrt.pop %v4754
    %v4757 = vmul.f32 %v4751, %v4755
    %v4758 = vmul.f32 %v4752, %v4756
    %4760 = vset.pattern.permute.xlu0 0
    %4761 = vperm.xlu0 %4760, %v4757
    %v4762 = vpop.permute.xlu0 %4761
    %4765 = vset.pattern.permute.xlu0 0
    %4766 = vperm.xlu0 %4765, %v4758
    %v4767 = vpop.permute.xlu0 %4766
    %v4769 = vmul.f32 %v3643, %v4762
    %v4770 = vmul.f32 %v3644, %v4762
    %v4771 = vmul.f32 %v3645, %v4762
    %v4772 = vmul.f32 %v3646, %v4762
    %v4773 = vmul.f32 %v3647, %v4767
    %v4774 = vmul.f32 %v3648, %v4767
    %v4775 = vmul.f32 %v3649, %v4767
    %v4776 = vmul.f32 %v3650, %v4767
    %v4777 = vld [vmem:[%s8] sm:$0xff]
    %v4778 = vld [vmem:[%s8 + $0x8] sm:$0xff]
    %4780 = vset.pattern.permute.xlu0 0
    %4781 = vperm.xlu0 %4780, %v4777
    %v4782 = vpop.permute.xlu0 %4781
    %4785 = vset.pattern.permute.xlu0 0
    %4786 = vperm.xlu0 %4785, %v4778
    %v4787 = vpop.permute.xlu0 %4786
    %v4789 = vadd.f32 %v4769, %v4782
    %v4790 = vadd.f32 %v4770, %v4782
    %v4791 = vadd.f32 %v4771, %v4782
    %v4792 = vadd.f32 %v4772, %v4782
    %v4793 = vadd.f32 %v4773, %v4787
    %v4794 = vadd.f32 %v4774, %v4787
    %v4795 = vadd.f32 %v4775, %v4787
    %v4796 = vadd.f32 %v4776, %v4787
    %v4797 = vld [vmem:[%s9] sm:$0xff]
    %v4798 = vld [vmem:[%s9 + $0x8] sm:$0xff]
    %v4799 = vld [vmem:[%s9 + $0x10] sm:$0xff]
    %v4800 = vld [vmem:[%s9 + $0x18] sm:$0xff]
    %v4801 = vld [vmem:[%s10] sm:$0xff]
    %v4802 = vld [vmem:[%s10 + $0x8] sm:$0xff]
    %v4803 = vld [vmem:[%s10 + $0x10] sm:$0xff]
    %v4804 = vld [vmem:[%s10 + $0x18] sm:$0xff]
    %4806 = vset.pattern.permute.xlu0 0
    %4807 = vperm.xlu0 %4806, %v4801
    %v4808 = vpop.permute.xlu0 %4807
    %4811 = vset.pattern.permute.xlu0 0
    %4812 = vperm.xlu0 %4811, %v4802
    %v4813 = vpop.permute.xlu0 %4812
    %4816 = vset.pattern.permute.xlu0 0
    %4817 = vperm.xlu0 %4816, %v4803
    %v4818 = vpop.permute.xlu0 %4817
    %4821 = vset.pattern.permute.xlu0 0
    %4822 = vperm.xlu0 %4821, %v4804
    %v4823 = vpop.permute.xlu0 %4822
    %v4826 = vsel %vm2544, %v4797, 0
    %v4829 = vsel %vm2544, %v4798, 0
    %v4832 = vsel %vm2544, %v4799, 0
    %v4835 = vsel %vm2544, %v4800, 0
    %v4837 = vand.u32 %v4790, 4294901760
    %4838 = vmatprep.subr.mxu0 %v4837
    %v4839 = vand.u32 %v4789, 4294901760
    %4840 = vmatpush1.msra.mxu0 %v4839
    %v4841 = vand.u32 %v4794, 4294901760
    %4842 = vmatprep.subr.mxu0 %v4841
    %v4843 = vand.u32 %v4793, 4294901760
    %4844 = vmatpush1.msra.mxu0 %v4843
    %4845 = vmatprep.subr.mxu0 0.0
    %4846 = vmatpush1.msra.mxu0 0.0
    %4847 = vmatprep.subr.mxu0 0.0
    %4848 = vmatpush1.msra.mxu0 0.0
    %4849 = vmatprep.subr.mxu0 0.0
    %4850 = vmatpush1.msra.mxu0 0.0
    %4851 = vmatprep.subr.mxu0 0.0
    %4852 = vmatpush1.msra.mxu0 0.0
    %4853 = vmatprep.subr.mxu0 0.0
    %4854 = vmatpush1.msra.mxu0 0.0
    %4855 = vmatprep.subr.mxu0 0.0
    %4856 = vmatpush1.msra.mxu0 0.0
    %4857 = vmatprep.subr.mxu0 0.0
    %4858 = vmatpush1.msra.mxu0 0.0
    %4859 = vmatprep.subr.mxu0 0.0
    %4860 = vmatpush1.msra.mxu0 0.0
    %4861 = vmatprep.subr.mxu0 0.0
    %4862 = vmatpush1.msra.mxu0 0.0
    %4863 = vmatprep.subr.mxu0 0.0
    %4864 = vmatpush1.msra.mxu0 0.0
    %4865 = vmatprep.subr.mxu0 0.0
    %4866 = vmatpush1.msra.mxu0 0.0
    %4867 = vmatprep.subr.mxu0 0.0
    %4868 = vmatpush1.msra.mxu0 0.0
    %4869 = vmatprep.subr.mxu0 0.0
    %4870 = vmatpush1.msra.mxu0 0.0
    %4871 = vmatprep.subr.mxu0 0.0
    %4872 = vmatpush1.msra.mxu0 0.0
    %4873 = vmatprep.subr.mxu0 0.0
    %4874 = vmatpush1.msra.mxu0 0.0
    %4875 = vmatprep.subr.mxu0 0.0
    %4876 = vmatpush1.msra.mxu0 0.0
    %4877 = vmatprep.subr.mxu0 0.0
    %4878 = vmatpush1.msra.mxu0 0.0
    %4879 = vmatprep.subr.mxu0 0.0
    %4880 = vmatpush1.msra.mxu0 0.0
    %4881 = vmatprep.subr.mxu0 0.0
    %4882 = vmatpush1.msra.mxu0 0.0
    %4883 = vmatprep.subr.mxu0 0.0
    %4884 = vmatpush1.msra.mxu0 0.0
    %4885 = vmatprep.subr.mxu0 0.0
    %4886 = vmatpush1.msra.mxu0 0.0
    %4887 = vmatprep.subr.mxu0 0.0
    %4888 = vmatpush1.msra.mxu0 0.0
    %4889 = vmatprep.subr.mxu0 0.0
    %4890 = vmatpush1.msra.mxu0 0.0
    %4891 = vmatprep.subr.mxu0 0.0
    %4892 = vmatpush1.msra.mxu0 0.0
    %4893 = vmatprep.subr.mxu0 0.0
    %4894 = vmatpush1.msra.mxu0 0.0
    %4895 = vmatprep.subr.mxu0 0.0
    %4896 = vmatpush1.msra.mxu0 0.0
    %4897 = vmatprep.subr.mxu0 0.0
    %4898 = vmatpush1.msra.mxu0 0.0
    %4899 = vmatprep.subr.mxu0 0.0
    %4900 = vmatpush1.msra.mxu0 0.0
    %4901 = vmatprep.subr.mxu0 0.0
    %4902 = vmatpush1.msra.mxu0 0.0
    %4903 = vmatprep.subr.mxu0 0.0
    %4904 = vmatpush1.msra.mxu0 0.0
    %4905 = vmatprep.mubr.f32.mxu0 0.0
    %v4906 = vand.u32 %v4826, 4294901760
    %v4907 = vsub.f32 %v4826, %v4906
    %v4908 = vand.u32 %v4907, 4294901760
    %v4909 = vsub.f32 %v4907, %v4908
    %v4910 = vand.u32 %v4909, 4294901760
    %4911 = vmatmul.mubr.f32.gmra.mrb[0].mxu0 %v4910
    %v4912 = vpop.f32.mrb[0].mxu0
    %v4913 = vadd.f32 %v4808, %v4912
    %v4914 = vpop.f32.mrb[0].mxu0
    %v4915 = vadd.f32 %v4808, %v4914
    %4916 = vmatprep.mubr.f32.mxu0 0.0
    %v4917 = vand.u32 %v4829, 4294901760
    %v4918 = vsub.f32 %v4829, %v4917
    %v4919 = vand.u32 %v4918, 4294901760
    %v4920 = vsub.f32 %v4918, %v4919
    %v4921 = vand.u32 %v4920, 4294901760
    %4922 = vmatmul.mubr.f32.gmra.mrb[0].mxu0 %v4921
    %v4923 = vpop.f32.mrb[0].mxu0
    %v4924 = vadd.f32 %v4813, %v4923
    %v4925 = vpop.f32.mrb[0].mxu0
    %v4926 = vadd.f32 %v4813, %v4925
    %4927 = vmatprep.mubr.f32.mxu0 0.0
    %v4928 = vand.u32 %v4832, 4294901760
    %v4929 = vsub.f32 %v4832, %v4928
    %v4930 = vand.u32 %v4929, 4294901760
    %v4931 = vsub.f32 %v4929, %v4930
    %v4932 = vand.u32 %v4931, 4294901760
    %4933 = vmatmul.mubr.f32.gmra.mrb[0].mxu0 %v4932
    %v4934 = vpop.f32.mrb[0].mxu0
    %v4935 = vadd.f32 %v4818, %v4934
    %v4936 = vpop.f32.mrb[0].mxu0
    %v4937 = vadd.f32 %v4818, %v4936
    %4938 = vmatprep.mubr.f32.mxu0 0.0
    %v4939 = vand.u32 %v4835, 4294901760
    %v4940 = vsub.f32 %v4835, %v4939
    %v4941 = vand.u32 %v4940, 4294901760
    %v4942 = vsub.f32 %v4940, %v4941
    %v4943 = vand.u32 %v4942, 4294901760
    %4944 = vmatmul.mubr.f32.gmra.mrb[0].mxu0 %v4943
    %v4945 = vpop.f32.mrb[0].mxu0
    %v4946 = vadd.f32 %v4823, %v4945
    %v4947 = vpop.f32.mrb[0].mxu0
    %v4948 = vadd.f32 %v4823, %v4947
    %4949 = vdwg.mxu0
    %v4950 = vand.u32 %v4790, 4294901760
    %v4951 = vsub.f32 %v4790, %v4950
    %v4952 = vand.u32 %v4951, 4294901760
    %v4953 = vsub.f32 %v4951, %v4952
    %v4954 = vand.u32 %v4953, 4294901760
    %4955 = vmatprep.subr.mxu0 %v4954
    %v4956 = vand.u32 %v4789, 4294901760
    %v4957 = vsub.f32 %v4789, %v4956
    %v4958 = vand.u32 %v4957, 4294901760
    %v4959 = vsub.f32 %v4957, %v4958
    %v4960 = vand.u32 %v4959, 4294901760
    %4961 = vmatpush1.msra.mxu0 %v4960
    %v4962 = vand.u32 %v4794, 4294901760
    %v4963 = vsub.f32 %v4794, %v4962
    %v4964 = vand.u32 %v4963, 4294901760
    %v4965 = vsub.f32 %v4963, %v4964
    %v4966 = vand.u32 %v4965, 4294901760
    %4967 = vmatprep.subr.mxu0 %v4966
    %v4968 = vand.u32 %v4793, 4294901760
    %v4969 = vsub.f32 %v4793, %v4968
    %v4970 = vand.u32 %v4969, 4294901760
    %v4971 = vsub.f32 %v4969, %v4970
    %v4972 = vand.u32 %v4971, 4294901760
    %4973 = vmatpush1.msra.mxu0 %v4972
    %4974 = vmatprep.subr.mxu0 0.0
    %4975 = vmatpush1.msra.mxu0 0.0
    %4976 = vmatprep.subr.mxu0 0.0
    %4977 = vmatpush1.msra.mxu0 0.0
    %4978 = vmatprep.subr.mxu0 0.0
    %4979 = vmatpush1.msra.mxu0 0.0
    %4980 = vmatprep.subr.mxu0 0.0
    %4981 = vmatpush1.msra.mxu0 0.0
    %4982 = vmatprep.subr.mxu0 0.0
    %4983 = vmatpush1.msra.mxu0 0.0
    %4984 = vmatprep.subr.mxu0 0.0
    %4985 = vmatpush1.msra.mxu0 0.0
    %4986 = vmatprep.subr.mxu0 0.0
    %4987 = vmatpush1.msra.mxu0 0.0
    %4988 = vmatprep.subr.mxu0 0.0
    %4989 = vmatpush1.msra.mxu0 0.0
    %4990 = vmatprep.subr.mxu0 0.0
    %4991 = vmatpush1.msra.mxu0 0.0
    %4992 = vmatprep.subr.mxu0 0.0
    %4993 = vmatpush1.msra.mxu0 0.0
    %4994 = vmatprep.subr.mxu0 0.0
    %4995 = vmatpush1.msra.mxu0 0.0
    %4996 = vmatprep.subr.mxu0 0.0
    %4997 = vmatpush1.msra.mxu0 0.0
    %4998 = vmatprep.subr.mxu0 0.0
    %4999 = vmatpush1.msra.mxu0 0.0
    %5000 = vmatprep.subr.mxu0 0.0
    %5001 = vmatpush1.msra.mxu0 0.0
    %5002 = vmatprep.subr.mxu0 0.0
    %5003 = vmatpush1.msra.mxu0 0.0
    %5004 = vmatprep.subr.mxu0 0.0
    %5005 = vmatpush1.msra.mxu0 0.0
    %5006 = vmatprep.subr.mxu0 0.0
    %5007 = vmatpush1.msra.mxu0 0.0
    %5008 = vmatprep.subr.mxu0 0.0
    %5009 = vmatpush1.msra.mxu0 0.0
    %5010 = vmatprep.subr.mxu0 0.0
    %5011 = vmatpush1.msra.mxu0 0.0
    %5012 = vmatprep.subr.mxu0 0.0
    %5013 = vmatpush1.msra.mxu0 0.0
    %5014 = vmatprep.subr.mxu0 0.0
    %5015 = vmatpush1.msra.mxu0 0.0
    %5016 = vmatprep.subr.mxu0 0.0
    %5017 = vmatpush1.msra.mxu0 0.0
    %5018 = vmatprep.subr.mxu0 0.0
    %5019 = vmatpush1.msra.mxu0 0.0
    %5020 = vmatprep.subr.mxu0 0.0
    %5021 = vmatpush1.msra.mxu0 0.0
    %5022 = vmatprep.subr.mxu0 0.0
    %5023 = vmatpush1.msra.mxu0 0.0
    %5024 = vmatprep.subr.mxu0 0.0
    %5025 = vmatpush1.msra.mxu0 0.0
    %5026 = vmatprep.subr.mxu0 0.0
    %5027 = vmatpush1.msra.mxu0 0.0
    %5028 = vmatprep.subr.mxu0 0.0
    %5029 = vmatpush1.msra.mxu0 0.0
    %5030 = vmatprep.subr.mxu0 0.0
    %5031 = vmatpush1.msra.mxu0 0.0
    %5032 = vmatprep.subr.mxu0 0.0
    %5033 = vmatpush1.msra.mxu0 0.0
    %5034 = vmatprep.mubr.f32.mxu0 0.0
    %v5035 = vand.u32 %v4826, 4294901760
    %5036 = vmatmul.mubr.f32.gmra.mrb[0].mxu0 %v5035
    %v5037 = vpop.f32.mrb[0].mxu0
    %v5038 = vadd.f32 %v4913, %v5037
    %v5039 = vpop.f32.mrb[0].mxu0
    %v5040 = vadd.f32 %v4915, %v5039
    %5041 = vmatprep.mubr.f32.mxu0 0.0
    %v5042 = vand.u32 %v4829, 4294901760
    %5043 = vmatmul.mubr.f32.gmra.mrb[0].mxu0 %v5042
    %v5044 = vpop.f32.mrb[0].mxu0
    %v5045 = vadd.f32 %v4924, %v5044
    %v5046 = vpop.f32.mrb[0].mxu0
    %v5047 = vadd.f32 %v4926, %v5046
    %5048 = vmatprep.mubr.f32.mxu0 0.0
    %v5049 = vand.u32 %v4832, 4294901760
    %5050 = vmatmul.mubr.f32.gmra.mrb[0].mxu0 %v5049
    %v5051 = vpop.f32.mrb[0].mxu0
    %v5052 = vadd.f32 %v4935, %v5051
    %v5053 = vpop.f32.mrb[0].mxu0
    %v5054 = vadd.f32 %v4937, %v5053
    %5055 = vmatprep.mubr.f32.mxu0 0.0
    %v5056 = vand.u32 %v4835, 4294901760
    %5057 = vmatmul.mubr.f32.gmra.mrb[0].mxu0 %v5056
    %v5058 = vpop.f32.mrb[0].mxu0
    %v5059 = vadd.f32 %v4946, %v5058
    %v5060 = vpop.f32.mrb[0].mxu0
    %v5061 = vadd.f32 %v4948, %v5060
    %5062 = vdwg.mxu0
    %v5063 = vand.u32 %v4790, 4294901760
    %v5064 = vsub.f32 %v4790, %v5063
    %5065 = vmatprep.subr.mxu0 %v5064
    %v5066 = vand.u32 %v4789, 4294901760
    %v5067 = vsub.f32 %v4789, %v5066
    %5068 = vmatpush1.msra.mxu0 %v5067
    %v5069 = vand.u32 %v4794, 4294901760
    %v5070 = vsub.f32 %v4794, %v5069
    %5071 = vmatprep.subr.mxu0 %v5070
    %v5072 = vand.u32 %v4793, 4294901760
    %v5073 = vsub.f32 %v4793, %v5072
    %5074 = vmatpush1.msra.mxu0 %v5073
    %5075 = vmatprep.subr.mxu0 0.0
    %5076 = vmatpush1.msra.mxu0 0.0
    %5077 = vmatprep.subr.mxu0 0.0
    %5078 = vmatpush1.msra.mxu0 0.0
    %5079 = vmatprep.subr.mxu0 0.0
    %5080 = vmatpush1.msra.mxu0 0.0
    %5081 = vmatprep.subr.mxu0 0.0
    %5082 = vmatpush1.msra.mxu0 0.0
    %5083 = vmatprep.subr.mxu0 0.0
    %5084 = vmatpush1.msra.mxu0 0.0
    %5085 = vmatprep.subr.mxu0 0.0
    %5086 = vmatpush1.msra.mxu0 0.0
    %5087 = vmatprep.subr.mxu0 0.0
    %5088 = vmatpush1.msra.mxu0 0.0
    %5089 = vmatprep.subr.mxu0 0.0
    %5090 = vmatpush1.msra.mxu0 0.0
    %5091 = vmatprep.subr.mxu0 0.0
    %5092 = vmatpush1.msra.mxu0 0.0
    %5093 = vmatprep.subr.mxu0 0.0
    %5094 = vmatpush1.msra.mxu0 0.0
    %5095 = vmatprep.subr.mxu0 0.0
    %5096 = vmatpush1.msra.mxu0 0.0
    %5097 = vmatprep.subr.mxu0 0.0
    %5098 = vmatpush1.msra.mxu0 0.0
    %5099 = vmatprep.subr.mxu0 0.0
    %5100 = vmatpush1.msra.mxu0 0.0
    %5101 = vmatprep.subr.mxu0 0.0
    %5102 = vmatpush1.msra.mxu0 0.0
    %5103 = vmatprep.subr.mxu0 0.0
    %5104 = vmatpush1.msra.mxu0 0.0
    %5105 = vmatprep.subr.mxu0 0.0
    %5106 = vmatpush1.msra.mxu0 0.0
    %5107 = vmatprep.subr.mxu0 0.0
    %5108 = vmatpush1.msra.mxu0 0.0
    %5109 = vmatprep.subr.mxu0 0.0
    %5110 = vmatpush1.msra.mxu0 0.0
    %5111 = vmatprep.subr.mxu0 0.0
    %5112 = vmatpush1.msra.mxu0 0.0
    %5113 = vmatprep.subr.mxu0 0.0
    %5114 = vmatpush1.msra.mxu0 0.0
    %5115 = vmatprep.subr.mxu0 0.0
    %5116 = vmatpush1.msra.mxu0 0.0
    %5117 = vmatprep.subr.mxu0 0.0
    %5118 = vmatpush1.msra.mxu0 0.0
    %5119 = vmatprep.subr.mxu0 0.0
    %5120 = vmatpush1.msra.mxu0 0.0
    %5121 = vmatprep.subr.mxu0 0.0
    %5122 = vmatpush1.msra.mxu0 0.0
    %5123 = vmatprep.subr.mxu0 0.0
    %5124 = vmatpush1.msra.mxu0 0.0
    %5125 = vmatprep.subr.mxu0 0.0
    %5126 = vmatpush1.msra.mxu0 0.0
    %5127 = vmatprep.subr.mxu0 0.0
    %5128 = vmatpush1.msra.mxu0 0.0
    %5129 = vmatprep.subr.mxu0 0.0
    %5130 = vmatpush1.msra.mxu0 0.0
    %5131 = vmatprep.subr.mxu0 0.0
    %5132 = vmatpush1.msra.mxu0 0.0
    %5133 = vmatprep.subr.mxu0 0.0
    %5134 = vmatpush1.msra.mxu0 0.0
    %5135 = vmatprep.mubr.f32.mxu0 0.0
    %v5136 = vand.u32 %v4826, 4294901760
    %v5137 = vsub.f32 %v4826, %v5136
    %5138 = vmatmul.mubr.f32.gmra.mrb[0].mxu0 %v5137
    %v5139 = vpop.f32.mrb[0].mxu0
    %v5140 = vadd.f32 %v5038, %v5139
    %v5141 = vpop.f32.mrb[0].mxu0
    %v5142 = vadd.f32 %v5040, %v5141
    %5143 = vmatprep.mubr.f32.mxu0 0.0
    %v5144 = vand.u32 %v4829, 4294901760
    %v5145 = vsub.f32 %v4829, %v5144
    %5146 = vmatmul.mubr.f32.gmra.mrb[0].mxu0 %v5145
    %v5147 = vpop.f32.mrb[0].mxu0
    %v5148 = vadd.f32 %v5045, %v5147
    %v5149 = vpop.f32.mrb[0].mxu0
    %v5150 = vadd.f32 %v5047, %v5149
    %5151 = vmatprep.mubr.f32.mxu0 0.0
    %v5152 = vand.u32 %v4832, 4294901760
    %v5153 = vsub.f32 %v4832, %v5152
    %5154 = vmatmul.mubr.f32.gmra.mrb[0].mxu0 %v5153
    %v5155 = vpop.f32.mrb[0].mxu0
    %v5156 = vadd.f32 %v5052, %v5155
    %v5157 = vpop.f32.mrb[0].mxu0
    %v5158 = vadd.f32 %v5054, %v5157
    %5159 = vmatprep.mubr.f32.mxu0 0.0
    %v5160 = vand.u32 %v4835, 4294901760
    %v5161 = vsub.f32 %v4835, %v5160
    %5162 = vmatmul.mubr.f32.gmra.mrb[0].mxu0 %v5161
    %v5163 = vpop.f32.mrb[0].mxu0
    %v5164 = vadd.f32 %v5059, %v5163
    %v5165 = vpop.f32.mrb[0].mxu0
    %v5166 = vadd.f32 %v5061, %v5165
    %5167 = vdwg.mxu0
    %v5168 = vand.u32 %v4790, 4294901760
    %5169 = vmatprep.subr.mxu0 %v5168
    %v5170 = vand.u32 %v4789, 4294901760
    %5171 = vmatpush1.msra.mxu0 %v5170
    %v5172 = vand.u32 %v4794, 4294901760
    %5173 = vmatprep.subr.mxu0 %v5172
    %v5174 = vand.u32 %v4793, 4294901760
    %5175 = vmatpush1.msra.mxu0 %v5174
    %5176 = vmatprep.subr.mxu0 0.0
    %5177 = vmatpush1.msra.mxu0 0.0
    %5178 = vmatprep.subr.mxu0 0.0
    %5179 = vmatpush1.msra.mxu0 0.0
    %5180 = vmatprep.subr.mxu0 0.0
    %5181 = vmatpush1.msra.mxu0 0.0
    %5182 = vmatprep.subr.mxu0 0.0
    %5183 = vmatpush1.msra.mxu0 0.0
    %5184 = vmatprep.subr.mxu0 0.0
    %5185 = vmatpush1.msra.mxu0 0.0
    %5186 = vmatprep.subr.mxu0 0.0
    %5187 = vmatpush1.msra.mxu0 0.0
    %5188 = vmatprep.subr.mxu0 0.0
    %5189 = vmatpush1.msra.mxu0 0.0
    %5190 = vmatprep.subr.mxu0 0.0
    %5191 = vmatpush1.msra.mxu0 0.0
    %5192 = vmatprep.subr.mxu0 0.0
    %5193 = vmatpush1.msra.mxu0 0.0
    %5194 = vmatprep.subr.mxu0 0.0
    %5195 = vmatpush1.msra.mxu0 0.0
    %5196 = vmatprep.subr.mxu0 0.0
    %5197 = vmatpush1.msra.mxu0 0.0
    %5198 = vmatprep.subr.mxu0 0.0
    %5199 = vmatpush1.msra.mxu0 0.0
    %5200 = vmatprep.subr.mxu0 0.0
    %5201 = vmatpush1.msra.mxu0 0.0
    %5202 = vmatprep.subr.mxu0 0.0
    %5203 = vmatpush1.msra.mxu0 0.0
    %5204 = vmatprep.subr.mxu0 0.0
    %5205 = vmatpush1.msra.mxu0 0.0
    %5206 = vmatprep.subr.mxu0 0.0
    %5207 = vmatpush1.msra.mxu0 0.0
    %5208 = vmatprep.subr.mxu0 0.0
    %5209 = vmatpush1.msra.mxu0 0.0
    %5210 = vmatprep.subr.mxu0 0.0
    %5211 = vmatpush1.msra.mxu0 0.0
    %5212 = vmatprep.subr.mxu0 0.0
    %5213 = vmatpush1.msra.mxu0 0.0
    %5214 = vmatprep.subr.mxu0 0.0
    %5215 = vmatpush1.msra.mxu0 0.0
    %5216 = vmatprep.subr.mxu0 0.0
    %5217 = vmatpush1.msra.mxu0 0.0
    %5218 = vmatprep.subr.mxu0 0.0
    %5219 = vmatpush1.msra.mxu0 0.0
    %5220 = vmatprep.subr.mxu0 0.0
    %5221 = vmatpush1.msra.mxu0 0.0
    %5222 = vmatprep.subr.mxu0 0.0
    %5223 = vmatpush1.msra.mxu0 0.0
    %5224 = vmatprep.subr.mxu0 0.0
    %5225 = vmatpush1.msra.mxu0 0.0
    %5226 = vmatprep.subr.mxu0 0.0
    %5227 = vmatpush1.msra.mxu0 0.0
    %5228 = vmatprep.subr.mxu0 0.0
    %5229 = vmatpush1.msra.mxu0 0.0
    %5230 = vmatprep.subr.mxu0 0.0
    %5231 = vmatpush1.msra.mxu0 0.0
    %5232 = vmatprep.subr.mxu0 0.0
    %5233 = vmatpush1.msra.mxu0 0.0
    %5234 = vmatprep.subr.mxu0 0.0
    %5235 = vmatpush1.msra.mxu0 0.0
    %5236 = vmatprep.mubr.f32.mxu0 0.0
    %v5237 = vand.u32 %v4826, 4294901760
    %v5238 = vsub.f32 %v4826, %v5237
    %v5239 = vand.u32 %v5238, 4294901760
    %5240 = vmatmul.mubr.f32.gmra.mrb[0].mxu0 %v5239
    %v5241 = vpop.f32.mrb[0].mxu0
    %v5242 = vadd.f32 %v5140, %v5241
    %v5243 = vpop.f32.mrb[0].mxu0
    %v5244 = vadd.f32 %v5142, %v5243
    %5245 = vmatprep.mubr.f32.mxu0 0.0
    %v5246 = vand.u32 %v4829, 4294901760
    %v5247 = vsub.f32 %v4829, %v5246
    %v5248 = vand.u32 %v5247, 4294901760
    %5249 = vmatmul.mubr.f32.gmra.mrb[0].mxu0 %v5248
    %v5250 = vpop.f32.mrb[0].mxu0
    %v5251 = vadd.f32 %v5148, %v5250
    %v5252 = vpop.f32.mrb[0].mxu0
    %v5253 = vadd.f32 %v5150, %v5252
    %5254 = vmatprep.mubr.f32.mxu0 0.0
    %v5255 = vand.u32 %v4832, 4294901760
    %v5256 = vsub.f32 %v4832, %v5255
    %v5257 = vand.u32 %v5256, 4294901760
    %5258 = vmatmul.mubr.f32.gmra.mrb[0].mxu0 %v5257
    %v5259 = vpop.f32.mrb[0].mxu0
    %v5260 = vadd.f32 %v5156, %v5259
    %v5261 = vpop.f32.mrb[0].mxu0
    %v5262 = vadd.f32 %v5158, %v5261
    %5263 = vmatprep.mubr.f32.mxu0 0.0
    %v5264 = vand.u32 %v4835, 4294901760
    %v5265 = vsub.f32 %v4835, %v5264
    %v5266 = vand.u32 %v5265, 4294901760
    %5267 = vmatmul.mubr.f32.gmra.mrb[0].mxu0 %v5266
    %v5268 = vpop.f32.mrb[0].mxu0
    %v5269 = vadd.f32 %v5164, %v5268
    %v5270 = vpop.f32.mrb[0].mxu0
    %v5271 = vadd.f32 %v5166, %v5270
    %5272 = vdwg.mxu0
    %v5273 = vand.u32 %v4790, 4294901760
    %v5274 = vsub.f32 %v4790, %v5273
    %v5275 = vand.u32 %v5274, 4294901760
    %5276 = vmatprep.subr.mxu0 %v5275
    %v5277 = vand.u32 %v4789, 4294901760
    %v5278 = vsub.f32 %v4789, %v5277
    %v5279 = vand.u32 %v5278, 4294901760
    %5280 = vmatpush1.msra.mxu0 %v5279
    %v5281 = vand.u32 %v4794, 4294901760
    %v5282 = vsub.f32 %v4794, %v5281
    %v5283 = vand.u32 %v5282, 4294901760
    %5284 = vmatprep.subr.mxu0 %v5283
    %v5285 = vand.u32 %v4793, 4294901760
    %v5286 = vsub.f32 %v4793, %v5285
    %v5287 = vand.u32 %v5286, 4294901760
    %5288 = vmatpush1.msra.mxu0 %v5287
    %5289 = vmatprep.subr.mxu0 0.0
    %5290 = vmatpush1.msra.mxu0 0.0
    %5291 = vmatprep.subr.mxu0 0.0
    %5292 = vmatpush1.msra.mxu0 0.0
    %5293 = vmatprep.subr.mxu0 0.0
    %5294 = vmatpush1.msra.mxu0 0.0
    %5295 = vmatprep.subr.mxu0 0.0
    %5296 = vmatpush1.msra.mxu0 0.0
    %5297 = vmatprep.subr.mxu0 0.0
    %5298 = vmatpush1.msra.mxu0 0.0
    %5299 = vmatprep.subr.mxu0 0.0
    %5300 = vmatpush1.msra.mxu0 0.0
    %5301 = vmatprep.subr.mxu0 0.0
    %5302 = vmatpush1.msra.mxu0 0.0
    %5303 = vmatprep.subr.mxu0 0.0
    %5304 = vmatpush1.msra.mxu0 0.0
    %5305 = vmatprep.subr.mxu0 0.0
    %5306 = vmatpush1.msra.mxu0 0.0
    %5307 = vmatprep.subr.mxu0 0.0
    %5308 = vmatpush1.msra.mxu0 0.0
    %5309 = vmatprep.subr.mxu0 0.0
    %5310 = vmatpush1.msra.mxu0 0.0
    %5311 = vmatprep.subr.mxu0 0.0
    %5312 = vmatpush1.msra.mxu0 0.0
    %5313 = vmatprep.subr.mxu0 0.0
    %5314 = vmatpush1.msra.mxu0 0.0
    %5315 = vmatprep.subr.mxu0 0.0
    %5316 = vmatpush1.msra.mxu0 0.0
    %5317 = vmatprep.subr.mxu0 0.0
    %5318 = vmatpush1.msra.mxu0 0.0
    %5319 = vmatprep.subr.mxu0 0.0
    %5320 = vmatpush1.msra.mxu0 0.0
    %5321 = vmatprep.subr.mxu0 0.0
    %5322 = vmatpush1.msra.mxu0 0.0
    %5323 = vmatprep.subr.mxu0 0.0
    %5324 = vmatpush1.msra.mxu0 0.0
    %5325 = vmatprep.subr.mxu0 0.0
    %5326 = vmatpush1.msra.mxu0 0.0
    %5327 = vmatprep.subr.mxu0 0.0
    %5328 = vmatpush1.msra.mxu0 0.0
    %5329 = vmatprep.subr.mxu0 0.0
    %5330 = vmatpush1.msra.mxu0 0.0
    %5331 = vmatprep.subr.mxu0 0.0
    %5332 = vmatpush1.msra.mxu0 0.0
    %5333 = vmatprep.subr.mxu0 0.0
    %5334 = vmatpush1.msra.mxu0 0.0
    %5335 = vmatprep.subr.mxu0 0.0
    %5336 = vmatpush1.msra.mxu0 0.0
    %5337 = vmatprep.subr.mxu0 0.0
    %5338 = vmatpush1.msra.mxu0 0.0
    %5339 = vmatprep.subr.mxu0 0.0
    %5340 = vmatpush1.msra.mxu0 0.0
    %5341 = vmatprep.subr.mxu0 0.0
    %5342 = vmatpush1.msra.mxu0 0.0
    %5343 = vmatprep.subr.mxu0 0.0
    %5344 = vmatpush1.msra.mxu0 0.0
    %5345 = vmatprep.subr.mxu0 0.0
    %5346 = vmatpush1.msra.mxu0 0.0
    %5347 = vmatprep.subr.mxu0 0.0
    %5348 = vmatpush1.msra.mxu0 0.0
    %5349 = vmatprep.mubr.f32.mxu0 0.0
    %v5350 = vand.u32 %v4826, 4294901760
    %5351 = vmatmul.mubr.f32.gmra.mrb[0].mxu0 %v5350
    %v5352 = vpop.f32.mrb[0].mxu0
    %v5353 = vadd.f32 %v5242, %v5352
    %v5354 = vpop.f32.mrb[0].mxu0
    %v5355 = vadd.f32 %v5244, %v5354
    %5356 = vmatprep.mubr.f32.mxu0 0.0
    %v5357 = vand.u32 %v4829, 4294901760
    %5358 = vmatmul.mubr.f32.gmra.mrb[0].mxu0 %v5357
    %v5359 = vpop.f32.mrb[0].mxu0
    %v5360 = vadd.f32 %v5251, %v5359
    %v5361 = vpop.f32.mrb[0].mxu0
    %v5362 = vadd.f32 %v5253, %v5361
    %5363 = vmatprep.mubr.f32.mxu0 0.0
    %v5364 = vand.u32 %v4832, 4294901760
    %5365 = vmatmul.mubr.f32.gmra.mrb[0].mxu0 %v5364
    %v5366 = vpop.f32.mrb[0].mxu0
    %v5367 = vadd.f32 %v5260, %v5366
    %v5368 = vpop.f32.mrb[0].mxu0
    %v5369 = vadd.f32 %v5262, %v5368
    %5370 = vmatprep.mubr.f32.mxu0 0.0
    %v5371 = vand.u32 %v4835, 4294901760
    %5372 = vmatmul.mubr.f32.gmra.mrb[0].mxu0 %v5371
    %v5373 = vpop.f32.mrb[0].mxu0
    %v5374 = vadd.f32 %v5269, %v5373
    %v5375 = vpop.f32.mrb[0].mxu0
    %v5376 = vadd.f32 %v5271, %v5375
    %5377 = vdwg.mxu0
    %v5378 = vand.u32 %v4790, 4294901760
    %5379 = vmatprep.subr.mxu0 %v5378
    %v5380 = vand.u32 %v4789, 4294901760
    %5381 = vmatpush1.msra.mxu0 %v5380
    %v5382 = vand.u32 %v4794, 4294901760
    %5383 = vmatprep.subr.mxu0 %v5382
    %v5384 = vand.u32 %v4793, 4294901760
    %5385 = vmatpush1.msra.mxu0 %v5384
    %5386 = vmatprep.subr.mxu0 0.0
    %5387 = vmatpush1.msra.mxu0 0.0
    %5388 = vmatprep.subr.mxu0 0.0
    %5389 = vmatpush1.msra.mxu0 0.0
    %5390 = vmatprep.subr.mxu0 0.0
    %5391 = vmatpush1.msra.mxu0 0.0
    %5392 = vmatprep.subr.mxu0 0.0
    %5393 = vmatpush1.msra.mxu0 0.0
    %5394 = vmatprep.subr.mxu0 0.0
    %5395 = vmatpush1.msra.mxu0 0.0
    %5396 = vmatprep.subr.mxu0 0.0
    %5397 = vmatpush1.msra.mxu0 0.0
    %5398 = vmatprep.subr.mxu0 0.0
    %5399 = vmatpush1.msra.mxu0 0.0
    %5400 = vmatprep.subr.mxu0 0.0
    %5401 = vmatpush1.msra.mxu0 0.0
    %5402 = vmatprep.subr.mxu0 0.0
    %5403 = vmatpush1.msra.mxu0 0.0
    %5404 = vmatprep.subr.mxu0 0.0
    %5405 = vmatpush1.msra.mxu0 0.0
    %5406 = vmatprep.subr.mxu0 0.0
    %5407 = vmatpush1.msra.mxu0 0.0
    %5408 = vmatprep.subr.mxu0 0.0
    %5409 = vmatpush1.msra.mxu0 0.0
    %5410 = vmatprep.subr.mxu0 0.0
    %5411 = vmatpush1.msra.mxu0 0.0
    %5412 = vmatprep.subr.mxu0 0.0
    %5413 = vmatpush1.msra.mxu0 0.0
    %5414 = vmatprep.subr.mxu0 0.0
    %5415 = vmatpush1.msra.mxu0 0.0
    %5416 = vmatprep.subr.mxu0 0.0
    %5417 = vmatpush1.msra.mxu0 0.0
    %5418 = vmatprep.subr.mxu0 0.0
    %5419 = vmatpush1.msra.mxu0 0.0
    %5420 = vmatprep.subr.mxu0 0.0
    %5421 = vmatpush1.msra.mxu0 0.0
    %5422 = vmatprep.subr.mxu0 0.0
    %5423 = vmatpush1.msra.mxu0 0.0
    %5424 = vmatprep.subr.mxu0 0.0
    %5425 = vmatpush1.msra.mxu0 0.0
    %5426 = vmatprep.subr.mxu0 0.0
    %5427 = vmatpush1.msra.mxu0 0.0
    %5428 = vmatprep.subr.mxu0 0.0
    %5429 = vmatpush1.msra.mxu0 0.0
    %5430 = vmatprep.subr.mxu0 0.0
    %5431 = vmatpush1.msra.mxu0 0.0
    %5432 = vmatprep.subr.mxu0 0.0
    %5433 = vmatpush1.msra.mxu0 0.0
    %5434 = vmatprep.subr.mxu0 0.0
    %5435 = vmatpush1.msra.mxu0 0.0
    %5436 = vmatprep.subr.mxu0 0.0
    %5437 = vmatpush1.msra.mxu0 0.0
    %5438 = vmatprep.subr.mxu0 0.0
    %5439 = vmatpush1.msra.mxu0 0.0
    %5440 = vmatprep.subr.mxu0 0.0
    %5441 = vmatpush1.msra.mxu0 0.0
    %5442 = vmatprep.subr.mxu0 0.0
    %5443 = vmatpush1.msra.mxu0 0.0
    %5444 = vmatprep.subr.mxu0 0.0
    %5445 = vmatpush1.msra.mxu0 0.0
    %5446 = vmatprep.mubr.f32.mxu0 0.0
    %v5447 = vand.u32 %v4826, 4294901760
    %5448 = vmatmul.mubr.f32.gmra.mrb[0].mxu0 %v5447
    %v5449 = vpop.f32.mrb[0].mxu0
    %v5450 = vadd.f32 %v5353, %v5449
    %v5451 = vpop.f32.mrb[0].mxu0
    %v5452 = vadd.f32 %v5355, %v5451
    %5453 = vmatprep.mubr.f32.mxu0 0.0
    %v5454 = vand.u32 %v4829, 4294901760
    %5455 = vmatmul.mubr.f32.gmra.mrb[0].mxu0 %v5454
    %v5456 = vpop.f32.mrb[0].mxu0
    %v5457 = vadd.f32 %v5360, %v5456
    %v5458 = vpop.f32.mrb[0].mxu0
    %v5459 = vadd.f32 %v5362, %v5458
    %5460 = vmatprep.mubr.f32.mxu0 0.0
    %v5461 = vand.u32 %v4832, 4294901760
    %5462 = vmatmul.mubr.f32.gmra.mrb[0].mxu0 %v5461
    %v5463 = vpop.f32.mrb[0].mxu0
    %v5464 = vadd.f32 %v5367, %v5463
    %v5465 = vpop.f32.mrb[0].mxu0
    %v5466 = vadd.f32 %v5369, %v5465
    %5467 = vmatprep.mubr.f32.mxu0 0.0
    %v5468 = vand.u32 %v4835, 4294901760
    %5469 = vmatmul.mubr.f32.gmra.mrb[0].mxu0 %v5468
    %v5470 = vpop.f32.mrb[0].mxu0
    %v5471 = vadd.f32 %v5374, %v5470
    %v5472 = vpop.f32.mrb[0].mxu0
    %v5473 = vadd.f32 %v5376, %v5472
    %5474 = vdwg.mxu0
    %v5475 = vand.u32 %v4792, 4294901760
    %5476 = vmatprep.subr.mxu0 %v5475
    %v5477 = vand.u32 %v4791, 4294901760
    %5478 = vmatpush1.msra.mxu0 %v5477
    %v5479 = vand.u32 %v4796, 4294901760
    %5480 = vmatprep.subr.mxu0 %v5479
    %v5481 = vand.u32 %v4795, 4294901760
    %5482 = vmatpush1.msra.mxu0 %v5481
    %5483 = vmatprep.subr.mxu0 0.0
    %5484 = vmatpush1.msra.mxu0 0.0
    %5485 = vmatprep.subr.mxu0 0.0
    %5486 = vmatpush1.msra.mxu0 0.0
    %5487 = vmatprep.subr.mxu0 0.0
    %5488 = vmatpush1.msra.mxu0 0.0
    %5489 = vmatprep.subr.mxu0 0.0
    %5490 = vmatpush1.msra.mxu0 0.0
    %5491 = vmatprep.subr.mxu0 0.0
    %5492 = vmatpush1.msra.mxu0 0.0
    %5493 = vmatprep.subr.mxu0 0.0
    %5494 = vmatpush1.msra.mxu0 0.0
    %5495 = vmatprep.subr.mxu0 0.0
    %5496 = vmatpush1.msra.mxu0 0.0
    %5497 = vmatprep.subr.mxu0 0.0
    %5498 = vmatpush1.msra.mxu0 0.0
    %5499 = vmatprep.subr.mxu0 0.0
    %5500 = vmatpush1.msra.mxu0 0.0
    %5501 = vmatprep.subr.mxu0 0.0
    %5502 = vmatpush1.msra.mxu0 0.0
    %5503 = vmatprep.subr.mxu0 0.0
    %5504 = vmatpush1.msra.mxu0 0.0
    %5505 = vmatprep.subr.mxu0 0.0
    %5506 = vmatpush1.msra.mxu0 0.0
    %5507 = vmatprep.subr.mxu0 0.0
    %5508 = vmatpush1.msra.mxu0 0.0
    %5509 = vmatprep.subr.mxu0 0.0
    %5510 = vmatpush1.msra.mxu0 0.0
    %5511 = vmatprep.subr.mxu0 0.0
    %5512 = vmatpush1.msra.mxu0 0.0
    %5513 = vmatprep.subr.mxu0 0.0
    %5514 = vmatpush1.msra.mxu0 0.0
    %5515 = vmatprep.subr.mxu0 0.0
    %5516 = vmatpush1.msra.mxu0 0.0
    %5517 = vmatprep.subr.mxu0 0.0
    %5518 = vmatpush1.msra.mxu0 0.0
    %5519 = vmatprep.subr.mxu0 0.0
    %5520 = vmatpush1.msra.mxu0 0.0
    %5521 = vmatprep.subr.mxu0 0.0
    %5522 = vmatpush1.msra.mxu0 0.0
    %5523 = vmatprep.subr.mxu0 0.0
    %5524 = vmatpush1.msra.mxu0 0.0
    %5525 = vmatprep.subr.mxu0 0.0
    %5526 = vmatpush1.msra.mxu0 0.0
    %5527 = vmatprep.subr.mxu0 0.0
    %5528 = vmatpush1.msra.mxu0 0.0
    %5529 = vmatprep.subr.mxu0 0.0
    %5530 = vmatpush1.msra.mxu0 0.0
    %5531 = vmatprep.subr.mxu0 0.0
    %5532 = vmatpush1.msra.mxu0 0.0
    %5533 = vmatprep.subr.mxu0 0.0
    %5534 = vmatpush1.msra.mxu0 0.0
    %5535 = vmatprep.subr.mxu0 0.0
    %5536 = vmatpush1.msra.mxu0 0.0
    %5537 = vmatprep.subr.mxu0 0.0
    %5538 = vmatpush1.msra.mxu0 0.0
    %5539 = vmatprep.subr.mxu0 0.0
    %5540 = vmatpush1.msra.mxu0 0.0
    %5541 = vmatprep.subr.mxu0 0.0
    %5542 = vmatpush1.msra.mxu0 0.0
    %5543 = vmatprep.mubr.f32.mxu0 0.0
    %v5544 = vand.u32 %v4826, 4294901760
    %v5545 = vsub.f32 %v4826, %v5544
    %v5546 = vand.u32 %v5545, 4294901760
    %v5547 = vsub.f32 %v5545, %v5546
    %v5548 = vand.u32 %v5547, 4294901760
    %5549 = vmatmul.mubr.f32.gmra.mrb[0].mxu0 %v5548
    %v5550 = vpop.f32.mrb[0].mxu0
    %v5551 = vadd.f32 %v4808, %v5550
    %v5552 = vpop.f32.mrb[0].mxu0
    %v5553 = vadd.f32 %v4808, %v5552
    %5554 = vmatprep.mubr.f32.mxu0 0.0
    %v5555 = vand.u32 %v4829, 4294901760
    %v5556 = vsub.f32 %v4829, %v5555
    %v5557 = vand.u32 %v5556, 4294901760
    %v5558 = vsub.f32 %v5556, %v5557
    %v5559 = vand.u32 %v5558, 4294901760
    %5560 = vmatmul.mubr.f32.gmra.mrb[0].mxu0 %v5559
    %v5561 = vpop.f32.mrb[0].mxu0
    %v5562 = vadd.f32 %v4813, %v5561
    %v5563 = vpop.f32.mrb[0].mxu0
    %v5564 = vadd.f32 %v4813, %v5563
    %5565 = vmatprep.mubr.f32.mxu0 0.0
    %v5566 = vand.u32 %v4832, 4294901760
    %v5567 = vsub.f32 %v4832, %v5566
    %v5568 = vand.u32 %v5567, 4294901760
    %v5569 = vsub.f32 %v5567, %v5568
    %v5570 = vand.u32 %v5569, 4294901760
    %5571 = vmatmul.mubr.f32.gmra.mrb[0].mxu0 %v5570
    %v5572 = vpop.f32.mrb[0].mxu0
    %v5573 = vadd.f32 %v4818, %v5572
    %v5574 = vpop.f32.mrb[0].mxu0
    %v5575 = vadd.f32 %v4818, %v5574
    %5576 = vmatprep.mubr.f32.mxu0 0.0
    %v5577 = vand.u32 %v4835, 4294901760
    %v5578 = vsub.f32 %v4835, %v5577
    %v5579 = vand.u32 %v5578, 4294901760
    %v5580 = vsub.f32 %v5578, %v5579
    %v5581 = vand.u32 %v5580, 4294901760
    %5582 = vmatmul.mubr.f32.gmra.mrb[0].mxu0 %v5581
    %v5583 = vpop.f32.mrb[0].mxu0
    %v5584 = vadd.f32 %v4823, %v5583
    %v5585 = vpop.f32.mrb[0].mxu0
    %v5586 = vadd.f32 %v4823, %v5585
    %5587 = vdwg.mxu0
    %v5588 = vand.u32 %v4792, 4294901760
    %v5589 = vsub.f32 %v4792, %v5588
    %v5590 = vand.u32 %v5589, 4294901760
    %v5591 = vsub.f32 %v5589, %v5590
    %v5592 = vand.u32 %v5591, 4294901760
    %5593 = vmatprep.subr.mxu0 %v5592
    %v5594 = vand.u32 %v4791, 4294901760
    %v5595 = vsub.f32 %v4791, %v5594
    %v5596 = vand.u32 %v5595, 4294901760
    %v5597 = vsub.f32 %v5595, %v5596
    %v5598 = vand.u32 %v5597, 4294901760
    %5599 = vmatpush1.msra.mxu0 %v5598
    %v5600 = vand.u32 %v4796, 4294901760
    %v5601 = vsub.f32 %v4796, %v5600
    %v5602 = vand.u32 %v5601, 4294901760
    %v5603 = vsub.f32 %v5601, %v5602
    %v5604 = vand.u32 %v5603, 4294901760
    %5605 = vmatprep.subr.mxu0 %v5604
    %v5606 = vand.u32 %v4795, 4294901760
    %v5607 = vsub.f32 %v4795, %v5606
    %v5608 = vand.u32 %v5607, 4294901760
    %v5609 = vsub.f32 %v5607, %v5608
    %v5610 = vand.u32 %v5609, 4294901760
    %5611 = vmatpush1.msra.mxu0 %v5610
    %5612 = vmatprep.subr.mxu0 0.0
    %5613 = vmatpush1.msra.mxu0 0.0
    %5614 = vmatprep.subr.mxu0 0.0
    %5615 = vmatpush1.msra.mxu0 0.0
    %5616 = vmatprep.subr.mxu0 0.0
    %5617 = vmatpush1.msra.mxu0 0.0
    %5618 = vmatprep.subr.mxu0 0.0
    %5619 = vmatpush1.msra.mxu0 0.0
    %5620 = vmatprep.subr.mxu0 0.0
    %5621 = vmatpush1.msra.mxu0 0.0
    %5622 = vmatprep.subr.mxu0 0.0
    %5623 = vmatpush1.msra.mxu0 0.0
    %5624 = vmatprep.subr.mxu0 0.0
    %5625 = vmatpush1.msra.mxu0 0.0
    %5626 = vmatprep.subr.mxu0 0.0
    %5627 = vmatpush1.msra.mxu0 0.0
    %5628 = vmatprep.subr.mxu0 0.0
    %5629 = vmatpush1.msra.mxu0 0.0
    %5630 = vmatprep.subr.mxu0 0.0
    %5631 = vmatpush1.msra.mxu0 0.0
    %5632 = vmatprep.subr.mxu0 0.0
    %5633 = vmatpush1.msra.mxu0 0.0
    %5634 = vmatprep.subr.mxu0 0.0
    %5635 = vmatpush1.msra.mxu0 0.0
    %5636 = vmatprep.subr.mxu0 0.0
    %5637 = vmatpush1.msra.mxu0 0.0
    %5638 = vmatprep.subr.mxu0 0.0
    %5639 = vmatpush1.msra.mxu0 0.0
    %5640 = vmatprep.subr.mxu0 0.0
    %5641 = vmatpush1.msra.mxu0 0.0
    %5642 = vmatprep.subr.mxu0 0.0
    %5643 = vmatpush1.msra.mxu0 0.0
    %5644 = vmatprep.subr.mxu0 0.0
    %5645 = vmatpush1.msra.mxu0 0.0
    %5646 = vmatprep.subr.mxu0 0.0
    %5647 = vmatpush1.msra.mxu0 0.0
    %5648 = vmatprep.subr.mxu0 0.0
    %5649 = vmatpush1.msra.mxu0 0.0
    %5650 = vmatprep.subr.mxu0 0.0
    %5651 = vmatpush1.msra.mxu0 0.0
    %5652 = vmatprep.subr.mxu0 0.0
    %5653 = vmatpush1.msra.mxu0 0.0
    %5654 = vmatprep.subr.mxu0 0.0
    %5655 = vmatpush1.msra.mxu0 0.0
    %5656 = vmatprep.subr.mxu0 0.0
    %5657 = vmatpush1.msra.mxu0 0.0
    %5658 = vmatprep.subr.mxu0 0.0
    %5659 = vmatpush1.msra.mxu0 0.0
    %5660 = vmatprep.subr.mxu0 0.0
    %5661 = vmatpush1.msra.mxu0 0.0
    %5662 = vmatprep.subr.mxu0 0.0
    %5663 = vmatpush1.msra.mxu0 0.0
    %5664 = vmatprep.subr.mxu0 0.0
    %5665 = vmatpush1.msra.mxu0 0.0
    %5666 = vmatprep.subr.mxu0 0.0
    %5667 = vmatpush1.msra.mxu0 0.0
    %5668 = vmatprep.subr.mxu0 0.0
    %5669 = vmatpush1.msra.mxu0 0.0
    %5670 = vmatprep.subr.mxu0 0.0
    %5671 = vmatpush1.msra.mxu0 0.0
    %5672 = vmatprep.mubr.f32.mxu0 0.0
    %v5673 = vand.u32 %v4826, 4294901760
    %5674 = vmatmul.mubr.f32.gmra.mrb[0].mxu0 %v5673
    %v5675 = vpop.f32.mrb[0].mxu0
    %v5676 = vadd.f32 %v5551, %v5675
    %v5677 = vpop.f32.mrb[0].mxu0
    %v5678 = vadd.f32 %v5553, %v5677
    %5679 = vmatprep.mubr.f32.mxu0 0.0
    %v5680 = vand.u32 %v4829, 4294901760
    %5681 = vmatmul.mubr.f32.gmra.mrb[0].mxu0 %v5680
    %v5682 = vpop.f32.mrb[0].mxu0
    %v5683 = vadd.f32 %v5562, %v5682
    %v5684 = vpop.f32.mrb[0].mxu0
    %v5685 = vadd.f32 %v5564, %v5684
    %5686 = vmatprep.mubr.f32.mxu0 0.0
    %v5687 = vand.u32 %v4832, 4294901760
    %5688 = vmatmul.mubr.f32.gmra.mrb[0].mxu0 %v5687
    %v5689 = vpop.f32.mrb[0].mxu0
    %v5690 = vadd.f32 %v5573, %v5689
    %v5691 = vpop.f32.mrb[0].mxu0
    %v5692 = vadd.f32 %v5575, %v5691
    %5693 = vmatprep.mubr.f32.mxu0 0.0
    %v5694 = vand.u32 %v4835, 4294901760
    %5695 = vmatmul.mubr.f32.gmra.mrb[0].mxu0 %v5694
    %v5696 = vpop.f32.mrb[0].mxu0
    %v5697 = vadd.f32 %v5584, %v5696
    %v5698 = vpop.f32.mrb[0].mxu0
    %v5699 = vadd.f32 %v5586, %v5698
    %5700 = vdwg.mxu0
    %v5701 = vand.u32 %v4792, 4294901760
    %v5702 = vsub.f32 %v4792, %v5701
    %5703 = vmatprep.subr.mxu0 %v5702
    %v5704 = vand.u32 %v4791, 4294901760
    %v5705 = vsub.f32 %v4791, %v5704
    %5706 = vmatpush1.msra.mxu0 %v5705
    %v5707 = vand.u32 %v4796, 4294901760
    %v5708 = vsub.f32 %v4796, %v5707
    %5709 = vmatprep.subr.mxu0 %v5708
    %v5710 = vand.u32 %v4795, 4294901760
    %v5711 = vsub.f32 %v4795, %v5710
    %5712 = vmatpush1.msra.mxu0 %v5711
    %5713 = vmatprep.subr.mxu0 0.0
    %5714 = vmatpush1.msra.mxu0 0.0
    %5715 = vmatprep.subr.mxu0 0.0
    %5716 = vmatpush1.msra.mxu0 0.0
    %5717 = vmatprep.subr.mxu0 0.0
    %5718 = vmatpush1.msra.mxu0 0.0
    %5719 = vmatprep.subr.mxu0 0.0
    %5720 = vmatpush1.msra.mxu0 0.0
    %5721 = vmatprep.subr.mxu0 0.0
    %5722 = vmatpush1.msra.mxu0 0.0
    %5723 = vmatprep.subr.mxu0 0.0
    %5724 = vmatpush1.msra.mxu0 0.0
    %5725 = vmatprep.subr.mxu0 0.0
    %5726 = vmatpush1.msra.mxu0 0.0
    %5727 = vmatprep.subr.mxu0 0.0
    %5728 = vmatpush1.msra.mxu0 0.0
    %5729 = vmatprep.subr.mxu0 0.0
    %5730 = vmatpush1.msra.mxu0 0.0
    %5731 = vmatprep.subr.mxu0 0.0
    %5732 = vmatpush1.msra.mxu0 0.0
    %5733 = vmatprep.subr.mxu0 0.0
    %5734 = vmatpush1.msra.mxu0 0.0
    %5735 = vmatprep.subr.mxu0 0.0
    %5736 = vmatpush1.msra.mxu0 0.0
    %5737 = vmatprep.subr.mxu0 0.0
    %5738 = vmatpush1.msra.mxu0 0.0
    %5739 = vmatprep.subr.mxu0 0.0
    %5740 = vmatpush1.msra.mxu0 0.0
    %5741 = vmatprep.subr.mxu0 0.0
    %5742 = vmatpush1.msra.mxu0 0.0
    %5743 = vmatprep.subr.mxu0 0.0
    %5744 = vmatpush1.msra.mxu0 0.0
    %5745 = vmatprep.subr.mxu0 0.0
    %5746 = vmatpush1.msra.mxu0 0.0
    %5747 = vmatprep.subr.mxu0 0.0
    %5748 = vmatpush1.msra.mxu0 0.0
    %5749 = vmatprep.subr.mxu0 0.0
    %5750 = vmatpush1.msra.mxu0 0.0
    %5751 = vmatprep.subr.mxu0 0.0
    %5752 = vmatpush1.msra.mxu0 0.0
    %5753 = vmatprep.subr.mxu0 0.0
    %5754 = vmatpush1.msra.mxu0 0.0
    %5755 = vmatprep.subr.mxu0 0.0
    %5756 = vmatpush1.msra.mxu0 0.0
    %5757 = vmatprep.subr.mxu0 0.0
    %5758 = vmatpush1.msra.mxu0 0.0
    %5759 = vmatprep.subr.mxu0 0.0
    %5760 = vmatpush1.msra.mxu0 0.0
    %5761 = vmatprep.subr.mxu0 0.0
    %5762 = vmatpush1.msra.mxu0 0.0
    %5763 = vmatprep.subr.mxu0 0.0
    %5764 = vmatpush1.msra.mxu0 0.0
    %5765 = vmatprep.subr.mxu0 0.0
    %5766 = vmatpush1.msra.mxu0 0.0
    %5767 = vmatprep.subr.mxu0 0.0
    %5768 = vmatpush1.msra.mxu0 0.0
    %5769 = vmatprep.subr.mxu0 0.0
    %5770 = vmatpush1.msra.mxu0 0.0
    %5771 = vmatprep.subr.mxu0 0.0
    %5772 = vmatpush1.msra.mxu0 0.0
    %5773 = vmatprep.mubr.f32.mxu0 0.0
    %v5774 = vand.u32 %v4826, 4294901760
    %v5775 = vsub.f32 %v4826, %v5774
    %5776 = vmatmul.mubr.f32.gmra.mrb[0].mxu0 %v5775
    %v5777 = vpop.f32.mrb[0].mxu0
    %v5778 = vadd.f32 %v5676, %v5777
    %v5779 = vpop.f32.mrb[0].mxu0
    %v5780 = vadd.f32 %v5678, %v5779
    %5781 = vmatprep.mubr.f32.mxu0 0.0
    %v5782 = vand.u32 %v4829, 4294901760
    %v5783 = vsub.f32 %v4829, %v5782
    %5784 = vmatmul.mubr.f32.gmra.mrb[0].mxu0 %v5783
    %v5785 = vpop.f32.mrb[0].mxu0
    %v5786 = vadd.f32 %v5683, %v5785
    %v5787 = vpop.f32.mrb[0].mxu0
    %v5788 = vadd.f32 %v5685, %v5787
    %5789 = vmatprep.mubr.f32.mxu0 0.0
    %v5790 = vand.u32 %v4832, 4294901760
    %v5791 = vsub.f32 %v4832, %v5790
    %5792 = vmatmul.mubr.f32.gmra.mrb[0].mxu0 %v5791
    %v5793 = vpop.f32.mrb[0].mxu0
    %v5794 = vadd.f32 %v5690, %v5793
    %v5795 = vpop.f32.mrb[0].mxu0
    %v5796 = vadd.f32 %v5692, %v5795
    %5797 = vmatprep.mubr.f32.mxu0 0.0
    %v5798 = vand.u32 %v4835, 4294901760
    %v5799 = vsub.f32 %v4835, %v5798
    %5800 = vmatmul.mubr.f32.gmra.mrb[0].mxu0 %v5799
    %v5801 = vpop.f32.mrb[0].mxu0
    %v5802 = vadd.f32 %v5697, %v5801
    %v5803 = vpop.f32.mrb[0].mxu0
    %v5804 = vadd.f32 %v5699, %v5803
    %5805 = vdwg.mxu0
    %v5806 = vand.u32 %v4792, 4294901760
    %5807 = vmatprep.subr.mxu0 %v5806
    %v5808 = vand.u32 %v4791, 4294901760
    %5809 = vmatpush1.msra.mxu0 %v5808
    %v5810 = vand.u32 %v4796, 4294901760
    %5811 = vmatprep.subr.mxu0 %v5810
    %v5812 = vand.u32 %v4795, 4294901760
    %5813 = vmatpush1.msra.mxu0 %v5812
    %5814 = vmatprep.subr.mxu0 0.0
    %5815 = vmatpush1.msra.mxu0 0.0
    %5816 = vmatprep.subr.mxu0 0.0
    %5817 = vmatpush1.msra.mxu0 0.0
    %5818 = vmatprep.subr.mxu0 0.0
    %5819 = vmatpush1.msra.mxu0 0.0
    %5820 = vmatprep.subr.mxu0 0.0
    %5821 = vmatpush1.msra.mxu0 0.0
    %5822 = vmatprep.subr.mxu0 0.0
    %5823 = vmatpush1.msra.mxu0 0.0
    %5824 = vmatprep.subr.mxu0 0.0
    %5825 = vmatpush1.msra.mxu0 0.0
    %5826 = vmatprep.subr.mxu0 0.0
    %5827 = vmatpush1.msra.mxu0 0.0
    %5828 = vmatprep.subr.mxu0 0.0
    %5829 = vmatpush1.msra.mxu0 0.0
    %5830 = vmatprep.subr.mxu0 0.0
    %5831 = vmatpush1.msra.mxu0 0.0
    %5832 = vmatprep.subr.mxu0 0.0
    %5833 = vmatpush1.msra.mxu0 0.0
    %5834 = vmatprep.subr.mxu0 0.0
    %5835 = vmatpush1.msra.mxu0 0.0
    %5836 = vmatprep.subr.mxu0 0.0
    %5837 = vmatpush1.msra.mxu0 0.0
    %5838 = vmatprep.subr.mxu0 0.0
    %5839 = vmatpush1.msra.mxu0 0.0
    %5840 = vmatprep.subr.mxu0 0.0
    %5841 = vmatpush1.msra.mxu0 0.0
    %5842 = vmatprep.subr.mxu0 0.0
    %5843 = vmatpush1.msra.mxu0 0.0
    %5844 = vmatprep.subr.mxu0 0.0
    %5845 = vmatpush1.msra.mxu0 0.0
    %5846 = vmatprep.subr.mxu0 0.0
    %5847 = vmatpush1.msra.mxu0 0.0
    %5848 = vmatprep.subr.mxu0 0.0
    %5849 = vmatpush1.msra.mxu0 0.0
    %5850 = vmatprep.subr.mxu0 0.0
    %5851 = vmatpush1.msra.mxu0 0.0
    %5852 = vmatprep.subr.mxu0 0.0
    %5853 = vmatpush1.msra.mxu0 0.0
    %5854 = vmatprep.subr.mxu0 0.0
    %5855 = vmatpush1.msra.mxu0 0.0
    %5856 = vmatprep.subr.mxu0 0.0
    %5857 = vmatpush1.msra.mxu0 0.0
    %5858 = vmatprep.subr.mxu0 0.0
    %5859 = vmatpush1.msra.mxu0 0.0
    %5860 = vmatprep.subr.mxu0 0.0
    %5861 = vmatpush1.msra.mxu0 0.0
    %5862 = vmatprep.subr.mxu0 0.0
    %5863 = vmatpush1.msra.mxu0 0.0
    %5864 = vmatprep.subr.mxu0 0.0
    %5865 = vmatpush1.msra.mxu0 0.0
    %5866 = vmatprep.subr.mxu0 0.0
    %5867 = vmatpush1.msra.mxu0 0.0
    %5868 = vmatprep.subr.mxu0 0.0
    %5869 = vmatpush1.msra.mxu0 0.0
    %5870 = vmatprep.subr.mxu0 0.0
    %5871 = vmatpush1.msra.mxu0 0.0
    %5872 = vmatprep.subr.mxu0 0.0
    %5873 = vmatpush1.msra.mxu0 0.0
    %5874 = vmatprep.mubr.f32.mxu0 0.0
    %v5875 = vand.u32 %v4826, 4294901760
    %v5876 = vsub.f32 %v4826, %v5875
    %v5877 = vand.u32 %v5876, 4294901760
    %5878 = vmatmul.mubr.f32.gmra.mrb[0].mxu0 %v5877
    %v5879 = vpop.f32.mrb[0].mxu0
    %v5880 = vadd.f32 %v5778, %v5879
    %v5881 = vpop.f32.mrb[0].mxu0
    %v5882 = vadd.f32 %v5780, %v5881
    %5883 = vmatprep.mubr.f32.mxu0 0.0
    %v5884 = vand.u32 %v4829, 4294901760
    %v5885 = vsub.f32 %v4829, %v5884
    %v5886 = vand.u32 %v5885, 4294901760
    %5887 = vmatmul.mubr.f32.gmra.mrb[0].mxu0 %v5886
    %v5888 = vpop.f32.mrb[0].mxu0
    %v5889 = vadd.f32 %v5786, %v5888
    %v5890 = vpop.f32.mrb[0].mxu0
    %v5891 = vadd.f32 %v5788, %v5890
    %5892 = vmatprep.mubr.f32.mxu0 0.0
    %v5893 = vand.u32 %v4832, 4294901760
    %v5894 = vsub.f32 %v4832, %v5893
    %v5895 = vand.u32 %v5894, 4294901760
    %5896 = vmatmul.mubr.f32.gmra.mrb[0].mxu0 %v5895
    %v5897 = vpop.f32.mrb[0].mxu0
    %v5898 = vadd.f32 %v5794, %v5897
    %v5899 = vpop.f32.mrb[0].mxu0
    %v5900 = vadd.f32 %v5796, %v5899
    %5901 = vmatprep.mubr.f32.mxu0 0.0
    %v5902 = vand.u32 %v4835, 4294901760
    %v5903 = vsub.f32 %v4835, %v5902
    %v5904 = vand.u32 %v5903, 4294901760
    %5905 = vmatmul.mubr.f32.gmra.mrb[0].mxu0 %v5904
    %v5906 = vpop.f32.mrb[0].mxu0
    %v5907 = vadd.f32 %v5802, %v5906
    %v5908 = vpop.f32.mrb[0].mxu0
    %v5909 = vadd.f32 %v5804, %v5908
    %5910 = vdwg.mxu0
    %v5911 = vand.u32 %v4792, 4294901760
    %v5912 = vsub.f32 %v4792, %v5911
    %v5913 = vand.u32 %v5912, 4294901760
    %5914 = vmatprep.subr.mxu0 %v5913
    %v5915 = vand.u32 %v4791, 4294901760
    %v5916 = vsub.f32 %v4791, %v5915
    %v5917 = vand.u32 %v5916, 4294901760
    %5918 = vmatpush1.msra.mxu0 %v5917
    %v5919 = vand.u32 %v4796, 4294901760
    %v5920 = vsub.f32 %v4796, %v5919
    %v5921 = vand.u32 %v5920, 4294901760
    %5922 = vmatprep.subr.mxu0 %v5921
    %v5923 = vand.u32 %v4795, 4294901760
    %v5924 = vsub.f32 %v4795, %v5923
    %v5925 = vand.u32 %v5924, 4294901760
    %5926 = vmatpush1.msra.mxu0 %v5925
    %5927 = vmatprep.subr.mxu0 0.0
    %5928 = vmatpush1.msra.mxu0 0.0
    %5929 = vmatprep.subr.mxu0 0.0
    %5930 = vmatpush1.msra.mxu0 0.0
    %5931 = vmatprep.subr.mxu0 0.0
    %5932 = vmatpush1.msra.mxu0 0.0
    %5933 = vmatprep.subr.mxu0 0.0
    %5934 = vmatpush1.msra.mxu0 0.0
    %5935 = vmatprep.subr.mxu0 0.0
    %5936 = vmatpush1.msra.mxu0 0.0
    %5937 = vmatprep.subr.mxu0 0.0
    %5938 = vmatpush1.msra.mxu0 0.0
    %5939 = vmatprep.subr.mxu0 0.0
    %5940 = vmatpush1.msra.mxu0 0.0
    %5941 = vmatprep.subr.mxu0 0.0
    %5942 = vmatpush1.msra.mxu0 0.0
    %5943 = vmatprep.subr.mxu0 0.0
    %5944 = vmatpush1.msra.mxu0 0.0
    %5945 = vmatprep.subr.mxu0 0.0
    %5946 = vmatpush1.msra.mxu0 0.0
    %5947 = vmatprep.subr.mxu0 0.0
    %5948 = vmatpush1.msra.mxu0 0.0
    %5949 = vmatprep.subr.mxu0 0.0
    %5950 = vmatpush1.msra.mxu0 0.0
    %5951 = vmatprep.subr.mxu0 0.0
    %5952 = vmatpush1.msra.mxu0 0.0
    %5953 = vmatprep.subr.mxu0 0.0
    %5954 = vmatpush1.msra.mxu0 0.0
    %5955 = vmatprep.subr.mxu0 0.0
    %5956 = vmatpush1.msra.mxu0 0.0
    %5957 = vmatprep.subr.mxu0 0.0
    %5958 = vmatpush1.msra.mxu0 0.0
    %5959 = vmatprep.subr.mxu0 0.0
    %5960 = vmatpush1.msra.mxu0 0.0
    %5961 = vmatprep.subr.mxu0 0.0
    %5962 = vmatpush1.msra.mxu0 0.0
    %5963 = vmatprep.subr.mxu0 0.0
    %5964 = vmatpush1.msra.mxu0 0.0
    %5965 = vmatprep.subr.mxu0 0.0
    %5966 = vmatpush1.msra.mxu0 0.0
    %5967 = vmatprep.subr.mxu0 0.0
    %5968 = vmatpush1.msra.mxu0 0.0
    %5969 = vmatprep.subr.mxu0 0.0
    %5970 = vmatpush1.msra.mxu0 0.0
    %5971 = vmatprep.subr.mxu0 0.0
    %5972 = vmatpush1.msra.mxu0 0.0
    %5973 = vmatprep.subr.mxu0 0.0
    %5974 = vmatpush1.msra.mxu0 0.0
    %5975 = vmatprep.subr.mxu0 0.0
    %5976 = vmatpush1.msra.mxu0 0.0
    %5977 = vmatprep.subr.mxu0 0.0
    %5978 = vmatpush1.msra.mxu0 0.0
    %5979 = vmatprep.subr.mxu0 0.0
    %5980 = vmatpush1.msra.mxu0 0.0
    %5981 = vmatprep.subr.mxu0 0.0
    %5982 = vmatpush1.msra.mxu0 0.0
    %5983 = vmatprep.subr.mxu0 0.0
    %5984 = vmatpush1.msra.mxu0 0.0
    %5985 = vmatprep.subr.mxu0 0.0
    %5986 = vmatpush1.msra.mxu0 0.0
    %5987 = vmatprep.mubr.f32.mxu0 0.0
    %v5988 = vand.u32 %v4826, 4294901760
    %5989 = vmatmul.mubr.f32.gmra.mrb[0].mxu0 %v5988
    %v5990 = vpop.f32.mrb[0].mxu0
    %v5991 = vadd.f32 %v5880, %v5990
    %v5992 = vpop.f32.mrb[0].mxu0
    %v5993 = vadd.f32 %v5882, %v5992
    %5994 = vmatprep.mubr.f32.mxu0 0.0
    %v5995 = vand.u32 %v4829, 4294901760
    %5996 = vmatmul.mubr.f32.gmra.mrb[0].mxu0 %v5995
    %v5997 = vpop.f32.mrb[0].mxu0
    %v5998 = vadd.f32 %v5889, %v5997
    %v5999 = vpop.f32.mrb[0].mxu0
    %v6000 = vadd.f32 %v5891, %v5999
    %6001 = vmatprep.mubr.f32.mxu0 0.0
    %v6002 = vand.u32 %v4832, 4294901760
    %6003 = vmatmul.mubr.f32.gmra.mrb[0].mxu0 %v6002
    %v6004 = vpop.f32.mrb[0].mxu0
    %v6005 = vadd.f32 %v5898, %v6004
    %v6006 = vpop.f32.mrb[0].mxu0
    %v6007 = vadd.f32 %v5900, %v6006
    %6008 = vmatprep.mubr.f32.mxu0 0.0
    %v6009 = vand.u32 %v4835, 4294901760
    %6010 = vmatmul.mubr.f32.gmra.mrb[0].mxu0 %v6009
    %v6011 = vpop.f32.mrb[0].mxu0
    %v6012 = vadd.f32 %v5907, %v6011
    %v6013 = vpop.f32.mrb[0].mxu0
    %v6014 = vadd.f32 %v5909, %v6013
    %6015 = vdwg.mxu0
    %v6016 = vand.u32 %v4792, 4294901760
    %6017 = vmatprep.subr.mxu0 %v6016
    %v6018 = vand.u32 %v4791, 4294901760
    %6019 = vmatpush1.msra.mxu0 %v6018
    %v6020 = vand.u32 %v4796, 4294901760
    %6021 = vmatprep.subr.mxu0 %v6020
    %v6022 = vand.u32 %v4795, 4294901760
    %6023 = vmatpush1.msra.mxu0 %v6022
    %6024 = vmatprep.subr.mxu0 0.0
    %6025 = vmatpush1.msra.mxu0 0.0
    %6026 = vmatprep.subr.mxu0 0.0
    %6027 = vmatpush1.msra.mxu0 0.0
    %6028 = vmatprep.subr.mxu0 0.0
    %6029 = vmatpush1.msra.mxu0 0.0
    %6030 = vmatprep.subr.mxu0 0.0
    %6031 = vmatpush1.msra.mxu0 0.0
    %6032 = vmatprep.subr.mxu0 0.0
    %6033 = vmatpush1.msra.mxu0 0.0
    %6034 = vmatprep.subr.mxu0 0.0
    %6035 = vmatpush1.msra.mxu0 0.0
    %6036 = vmatprep.subr.mxu0 0.0
    %6037 = vmatpush1.msra.mxu0 0.0
    %6038 = vmatprep.subr.mxu0 0.0
    %6039 = vmatpush1.msra.mxu0 0.0
    %6040 = vmatprep.subr.mxu0 0.0
    %6041 = vmatpush1.msra.mxu0 0.0
    %6042 = vmatprep.subr.mxu0 0.0
    %6043 = vmatpush1.msra.mxu0 0.0
    %6044 = vmatprep.subr.mxu0 0.0
    %6045 = vmatpush1.msra.mxu0 0.0
    %6046 = vmatprep.subr.mxu0 0.0
    %6047 = vmatpush1.msra.mxu0 0.0
    %6048 = vmatprep.subr.mxu0 0.0
    %6049 = vmatpush1.msra.mxu0 0.0
    %6050 = vmatprep.subr.mxu0 0.0
    %6051 = vmatpush1.msra.mxu0 0.0
    %6052 = vmatprep.subr.mxu0 0.0
    %6053 = vmatpush1.msra.mxu0 0.0
    %6054 = vmatprep.subr.mxu0 0.0
    %6055 = vmatpush1.msra.mxu0 0.0
    %6056 = vmatprep.subr.mxu0 0.0
    %6057 = vmatpush1.msra.mxu0 0.0
    %6058 = vmatprep.subr.mxu0 0.0
    %6059 = vmatpush1.msra.mxu0 0.0
    %6060 = vmatprep.subr.mxu0 0.0
    %6061 = vmatpush1.msra.mxu0 0.0
    %6062 = vmatprep.subr.mxu0 0.0
    %6063 = vmatpush1.msra.mxu0 0.0
    %6064 = vmatprep.subr.mxu0 0.0
    %6065 = vmatpush1.msra.mxu0 0.0
    %6066 = vmatprep.subr.mxu0 0.0
    %6067 = vmatpush1.msra.mxu0 0.0
    %6068 = vmatprep.subr.mxu0 0.0
    %6069 = vmatpush1.msra.mxu0 0.0
    %6070 = vmatprep.subr.mxu0 0.0
    %6071 = vmatpush1.msra.mxu0 0.0
    %6072 = vmatprep.subr.mxu0 0.0
    %6073 = vmatpush1.msra.mxu0 0.0
    %6074 = vmatprep.subr.mxu0 0.0
    %6075 = vmatpush1.msra.mxu0 0.0
    %6076 = vmatprep.subr.mxu0 0.0
    %6077 = vmatpush1.msra.mxu0 0.0
    %6078 = vmatprep.subr.mxu0 0.0
    %6079 = vmatpush1.msra.mxu0 0.0
    %6080 = vmatprep.subr.mxu0 0.0
    %6081 = vmatpush1.msra.mxu0 0.0
    %6082 = vmatprep.subr.mxu0 0.0
    %6083 = vmatpush1.msra.mxu0 0.0
    %6084 = vmatprep.mubr.f32.mxu0 0.0
    %v6085 = vand.u32 %v4826, 4294901760
    %6086 = vmatmul.mubr.f32.gmra.mrb[0].mxu0 %v6085
    %v6087 = vpop.f32.mrb[0].mxu0
    %v6088 = vadd.f32 %v5991, %v6087
    %v6089 = vpop.f32.mrb[0].mxu0
    %v6090 = vadd.f32 %v5993, %v6089
    %6091 = vmatprep.mubr.f32.mxu0 0.0
    %v6092 = vand.u32 %v4829, 4294901760
    %6093 = vmatmul.mubr.f32.gmra.mrb[0].mxu0 %v6092
    %v6094 = vpop.f32.mrb[0].mxu0
    %v6095 = vadd.f32 %v5998, %v6094
    %v6096 = vpop.f32.mrb[0].mxu0
    %v6097 = vadd.f32 %v6000, %v6096
    %6098 = vmatprep.mubr.f32.mxu0 0.0
    %v6099 = vand.u32 %v4832, 4294901760
    %6100 = vmatmul.mubr.f32.gmra.mrb[0].mxu0 %v6099
    %v6101 = vpop.f32.mrb[0].mxu0
    %v6102 = vadd.f32 %v6005, %v6101
    %v6103 = vpop.f32.mrb[0].mxu0
    %v6104 = vadd.f32 %v6007, %v6103
    %6105 = vmatprep.mubr.f32.mxu0 0.0
    %v6106 = vand.u32 %v4835, 4294901760
    %6107 = vmatmul.mubr.f32.gmra.mrb[0].mxu0 %v6106
    %v6108 = vpop.f32.mrb[0].mxu0
    %v6109 = vadd.f32 %v6012, %v6108
    %v6110 = vpop.f32.mrb[0].mxu0
    %v6111 = vadd.f32 %v6014, %v6110
    %6112 = vdwg.mxu0
    %v6113 = vsub.f32 0.0, %v5450
    %v6114 = vsub.f32 0.0, %v5452
    %v6115 = vsub.f32 0.0, %v6088
    %v6116 = vsub.f32 0.0, %v6090
    %v6117 = vsub.f32 0.0, %v5457
    %v6118 = vsub.f32 0.0, %v5459
    %v6119 = vsub.f32 0.0, %v6095
    %v6120 = vsub.f32 0.0, %v6097
    %v6121 = vsub.f32 0.0, %v5464
    %v6122 = vsub.f32 0.0, %v5466
    %v6123 = vsub.f32 0.0, %v6102
    %v6124 = vsub.f32 0.0, %v6104
    %v6125 = vsub.f32 0.0, %v5471
    %v6126 = vsub.f32 0.0, %v5473
    %v6127 = vsub.f32 0.0, %v6109
    %v6128 = vsub.f32 0.0, %v6111
    %v6129 = vmul.f32 %v6113, 1.442695
    %v6130 = vpow.pop %v6129
    %v6131 = vmul.f32 %v6114, 1.442695
    %v6132 = vpow.pop %v6131
    %v6133 = vmul.f32 %v6115, 1.442695
    %v6134 = vpow.pop %v6133
    %v6135 = vmul.f32 %v6116, 1.442695
    %v6136 = vpow.pop %v6135
    %v6137 = vmul.f32 %v6117, 1.442695
    %v6138 = vpow.pop %v6137
    %v6139 = vmul.f32 %v6118, 1.442695
    %v6140 = vpow.pop %v6139
    %v6141 = vmul.f32 %v6119, 1.442695
    %v6142 = vpow.pop %v6141
    %v6143 = vmul.f32 %v6120, 1.442695
    %v6144 = vpow.pop %v6143
    %v6145 = vmul.f32 %v6121, 1.442695
    %v6146 = vpow.pop %v6145
    %v6147 = vmul.f32 %v6122, 1.442695
    %v6148 = vpow.pop %v6147
    %v6149 = vmul.f32 %v6123, 1.442695
    %v6150 = vpow.pop %v6149
    %v6151 = vmul.f32 %v6124, 1.442695
    %v6152 = vpow.pop %v6151
    %v6153 = vmul.f32 %v6125, 1.442695
    %v6154 = vpow.pop %v6153
    %v6155 = vmul.f32 %v6126, 1.442695
    %v6156 = vpow.pop %v6155
    %v6157 = vmul.f32 %v6127, 1.442695
    %v6158 = vpow.pop %v6157
    %v6159 = vmul.f32 %v6128, 1.442695
    %v6160 = vpow.pop %v6159
    %v6161 = vadd.f32 %v6130, 1.0
    %v6162 = vadd.f32 %v6132, 1.0
    %v6163 = vadd.f32 %v6134, 1.0
    %v6164 = vadd.f32 %v6136, 1.0
    %v6165 = vadd.f32 %v6138, 1.0
    %v6166 = vadd.f32 %v6140, 1.0
    %v6167 = vadd.f32 %v6142, 1.0
    %v6168 = vadd.f32 %v6144, 1.0
    %v6169 = vadd.f32 %v6146, 1.0
    %v6170 = vadd.f32 %v6148, 1.0
    %v6171 = vadd.f32 %v6150, 1.0
    %v6172 = vadd.f32 %v6152, 1.0
    %v6173 = vadd.f32 %v6154, 1.0
    %v6174 = vadd.f32 %v6156, 1.0
    %v6175 = vadd.f32 %v6158, 1.0
    %v6176 = vadd.f32 %v6160, 1.0
    %v6177 = vrcp.pop %v6161
    %v6178 = vmul.f32 1.0, %v6177
    %v6179 = vrcp.pop %v6162
    %v6180 = vmul.f32 1.0, %v6179
    %v6181 = vrcp.pop %v6163
    %v6182 = vmul.f32 1.0, %v6181
    %v6183 = vrcp.pop %v6164
    %v6184 = vmul.f32 1.0, %v6183
    %v6185 = vrcp.pop %v6165
    %v6186 = vmul.f32 1.0, %v6185
    %v6187 = vrcp.pop %v6166
    %v6188 = vmul.f32 1.0, %v6187
    %v6189 = vrcp.pop %v6167
    %v6190 = vmul.f32 1.0, %v6189
    %v6191 = vrcp.pop %v6168
    %v6192 = vmul.f32 1.0, %v6191
    %v6193 = vrcp.pop %v6169
    %v6194 = vmul.f32 1.0, %v6193
    %v6195 = vrcp.pop %v6170
    %v6196 = vmul.f32 1.0, %v6195
    %v6197 = vrcp.pop %v6171
    %v6198 = vmul.f32 1.0, %v6197
    %v6199 = vrcp.pop %v6172
    %v6200 = vmul.f32 1.0, %v6199
    %v6201 = vrcp.pop %v6173
    %v6202 = vmul.f32 1.0, %v6201
    %v6203 = vrcp.pop %v6174
    %v6204 = vmul.f32 1.0, %v6203
    %v6205 = vrcp.pop %v6175
    %v6206 = vmul.f32 1.0, %v6205
    %v6207 = vrcp.pop %v6176
    %v6208 = vmul.f32 1.0, %v6207
    %6209 = vst [vmem:[#allocation5] sm:$0xff] %v6178
    %6210 = vst [vmem:[#allocation5 + $0x8] sm:$0xff] %v6180
    %6211 = vst [vmem:[#allocation5 + $0x10] sm:$0xff] %v6182
    %6212 = vst [vmem:[#allocation5 + $0x18] sm:$0xff] %v6184
    %6213 = vst [vmem:[#allocation5 + $0x20] sm:$0xff] %v6186
    %6214 = vst [vmem:[#allocation5 + $0x28] sm:$0xff] %v6188
    %6215 = vst [vmem:[#allocation5 + $0x30] sm:$0xff] %v6190
    %6216 = vst [vmem:[#allocation5 + $0x38] sm:$0xff] %v6192
    %s6217 = scalar_lea.vmem [#allocation5], 64
    %6218 = vst [vmem:[%s6217] sm:$0xff] %v6194
    %6219 = vst [vmem:[%s6217 + $0x8] sm:$0xff] %v6196
    %6220 = vst [vmem:[%s6217 + $0x10] sm:$0xff] %v6198
    %6221 = vst [vmem:[%s6217 + $0x18] sm:$0xff] %v6200
    %6222 = vst [vmem:[%s6217 + $0x20] sm:$0xff] %v6202
    %6223 = vst [vmem:[%s6217 + $0x28] sm:$0xff] %v6204
    %6224 = vst [vmem:[%s6217 + $0x30] sm:$0xff] %v6206
    %6225 = vst [vmem:[%s6217 + $0x38] sm:$0xff] %v6208
    %v6226 = vsub.f32 %v6178, %v6194
    %v6227 = vsub.f32 %v6180, %v6196
    %v6228 = vsub.f32 %v6182, %v6198
    %v6229 = vsub.f32 %v6184, %v6200
    %v6230 = vsub.f32 %v6186, %v6202
    %v6231 = vsub.f32 %v6188, %v6204
    %v6232 = vsub.f32 %v6190, %v6206
    %v6233 = vsub.f32 %v6192, %v6208
    %v6234 = vmul.f32 %v6226, 50.0
    %v6235 = vmul.f32 %v6227, 50.0
    %v6236 = vmul.f32 %v6228, 50.0
    %v6237 = vmul.f32 %v6229, 50.0
    %v6238 = vmul.f32 %v6230, 50.0
    %v6239 = vmul.f32 %v6231, 50.0
    %v6240 = vmul.f32 %v6232, 50.0
    %v6241 = vmul.f32 %v6233, 50.0
    %v6242 = vsub.f32 0.0, %v6234
    %v6243 = vsub.f32 0.0, %v6235
    %v6244 = vsub.f32 0.0, %v6236
    %v6245 = vsub.f32 0.0, %v6237
    %v6246 = vsub.f32 0.0, %v6238
    %v6247 = vsub.f32 0.0, %v6239
    %v6248 = vsub.f32 0.0, %v6240
    %v6249 = vsub.f32 0.0, %v6241
    %v6250 = vmul.f32 %v6242, 1.442695
    %v6251 = vpow.pop %v6250
    %v6252 = vmul.f32 %v6243, 1.442695
    %v6253 = vpow.pop %v6252
    %v6254 = vmul.f32 %v6244, 1.442695
    %v6255 = vpow.pop %v6254
    %v6256 = vmul.f32 %v6245, 1.442695
    %v6257 = vpow.pop %v6256
    %v6258 = vmul.f32 %v6246, 1.442695
    %v6259 = vpow.pop %v6258
    %v6260 = vmul.f32 %v6247, 1.442695
    %v6261 = vpow.pop %v6260
    %v6262 = vmul.f32 %v6248, 1.442695
    %v6263 = vpow.pop %v6262
    %v6264 = vmul.f32 %v6249, 1.442695
    %v6265 = vpow.pop %v6264
    %v6266 = vadd.f32 %v6251, 1.0
    %v6267 = vadd.f32 %v6253, 1.0
    %v6268 = vadd.f32 %v6255, 1.0
    %v6269 = vadd.f32 %v6257, 1.0
    %v6270 = vadd.f32 %v6259, 1.0
    %v6271 = vadd.f32 %v6261, 1.0
    %v6272 = vadd.f32 %v6263, 1.0
    %v6273 = vadd.f32 %v6265, 1.0
    %v6274 = vrcp.pop %v6266
    %v6275 = vmul.f32 1.0, %v6274
    %v6276 = vrcp.pop %v6267
    %v6277 = vmul.f32 1.0, %v6276
    %v6278 = vrcp.pop %v6268
    %v6279 = vmul.f32 1.0, %v6278
    %v6280 = vrcp.pop %v6269
    %v6281 = vmul.f32 1.0, %v6280
    %v6282 = vrcp.pop %v6270
    %v6283 = vmul.f32 1.0, %v6282
    %v6284 = vrcp.pop %v6271
    %v6285 = vmul.f32 1.0, %v6284
    %v6286 = vrcp.pop %v6272
    %v6287 = vmul.f32 1.0, %v6286
    %v6288 = vrcp.pop %v6273
    %v6289 = vmul.f32 1.0, %v6288
    %s6290 = scalar_lea.vmem [#allocation5], 128
    %6291 = vst [vmem:[%s6290] sm:$0xff] %v6275
    %6292 = vst [vmem:[%s6290 + $0x8] sm:$0xff] %v6277
    %6293 = vst [vmem:[%s6290 + $0x10] sm:$0xff] %v6279
    %6294 = vst [vmem:[%s6290 + $0x18] sm:$0xff] %v6281
    %6295 = vst [vmem:[%s6290 + $0x20] sm:$0xff] %v6283
    %6296 = vst [vmem:[%s6290 + $0x28] sm:$0xff] %v6285
    %6297 = vst [vmem:[%s6290 + $0x30] sm:$0xff] %v6287
    %6298 = vst [vmem:[%s6290 + $0x38] sm:$0xff] %v6289
    // Predicated region
    $region54: #{tpu_custom_call.1} parent=1 // pred_check
      _
    $region55: #{tpu_custom_call.1} parent=1 // pred_check_branch
      %6300 = sbr.rel (0) target = $region57
    $region56: #{tpu_custom_call.1} parent=1 // pred_region
      %s6302 = ssub.s32 3072, 3072
      %6303 = vsyncadd [#allocation4], %s6302
      %s6304 = sshll.u32 [#allocation5], 4
      %s6305 = int_to_ptr.vmem [resolvable:$true] %s6304
      %6310 = dma.vmem_to_hbm [thread:$0]  %s6305, 3072, %s12, [#allocation4], 512, 512, 32
    $region57: #{tpu_custom_call.1} parent=1 // pred_fallthru
      _
    // Predicated region
    $region58: #{tpu_custom_call.1} parent=1 // pred_check
      _
    $region59: #{tpu_custom_call.1} parent=1 // pred_check_branch
      %6312 = sbr.rel (0) target = $region61
    $region60: #{tpu_custom_call.1} parent=1 // pred_region
      %6313 = dma.done [#allocation4], 3072
    $region61: #{tpu_custom_call.1} parent=1 // pred_fallthru
      _
    %6314 = vsyncpa [#allocation3], 1
    %6315 = vsyncpa [#allocation4], 1

</llo_original>
